<compile_context>
chip_gen: v7x
topology: tpu7x:2x2x1
jax: 0.10.0
libtpu: 0.0.40
codegen_flags: <defaults>
</compile_context>

<pallas_src>
import jax
import jax.numpy as jnp
from jax import lax
from jax.experimental import pallas as pl
from jax.experimental.pallas import tpu as pltpu

LANE = 128                     # lane-dense output width
ROW_CAP = 4096                 # max rows per grid step
VMEM_LIMIT = 32 * 1024 * 1024  # explicit, safe on v5e/v6e/v7x


def _round_up(x, m):
    return ((x + m - 1) // m) * m


def _row_tile(m):
    mr = _round_up(m, 8)
    return mr if mr <= ROW_CAP else ROW_CAP


# ----------------------------- Pallas kernels ------------------------------

def _mm_stats_kernel(p_ref, w_ref, y_ref, s_ref, q_ref):
    """Matmul with fused per-column sum / sum-of-squares (BN batch stats)."""
    y = jnp.dot(p_ref[...], w_ref[...], preferred_element_type=jnp.float32)
    y_ref[...] = y

    @pl.when(pl.program_id(0) == 0)
    def _():
        s_ref[...] = jnp.zeros_like(s_ref)
        q_ref[...] = jnp.zeros_like(q_ref)

    s_ref[...] += jnp.sum(y, axis=0, keepdims=True)
    q_ref[...] += jnp.sum(y * y, axis=0, keepdims=True)


def _mm_tanh_kernel(p_ref, w_ref, y_ref):
    """Matmul with fused tanh epilogue (last layer)."""
    y_ref[...] = jnp.tanh(jnp.dot(p_ref[...], w_ref[...],
                                  preferred_element_type=jnp.float32))


def _affine_relu_kernel(y_ref, a_ref, b_ref, o_ref):
    o_ref[...] = jnp.maximum(y_ref[...] * a_ref[...] + b_ref[...], 0.0)


# --------------------------- Pallas call wrappers ---------------------------

def matmul_stats_pallas(patches, wmat):
    m, kdim = patches.shape
    cpad = wmat.shape[1]
    tm = _row_tile(m)
    mp = _round_up(m, tm)
    p_pad = jnp.pad(patches, ((0, mp - m), (0, 0)))
    y, sums, sqs = pl.pallas_call(
        _mm_stats_kernel,
        out_shape=(jax.ShapeDtypeStruct((mp, cpad), jnp.float32),
                   jax.ShapeDtypeStruct((1, cpad), jnp.float32),
                   jax.ShapeDtypeStruct((1, cpad), jnp.float32)),
        grid=(mp // tm,),
        in_specs=[pl.BlockSpec((tm, kdim), lambda i: (i, 0)),
                  pl.BlockSpec((kdim, cpad), lambda i: (0, 0))],
        out_specs=(pl.BlockSpec((tm, cpad), lambda i: (i, 0)),
                   pl.BlockSpec((1, cpad), lambda i: (0, 0)),
                   pl.BlockSpec((1, cpad), lambda i: (0, 0))),
        compiler_params=pltpu.CompilerParams(
            dimension_semantics=("arbitrary",),   # stats accumulate over rows
            vmem_limit_bytes=VMEM_LIMIT),
    )(p_pad, wmat)
    return y, sums, sqs, m


def matmul_tanh_pallas(patches, wmat):
    m, kdim = patches.shape
    cpad = wmat.shape[1]
    tm = _row_tile(m)
    mp = _round_up(m, tm)
    p_pad = jnp.pad(patches, ((0, mp - m), (0, 0)))
    y = pl.pallas_call(
        _mm_tanh_kernel,
        out_shape=jax.ShapeDtypeStruct((mp, cpad), jnp.float32),
        grid=(mp // tm,),
        in_specs=[pl.BlockSpec((tm, kdim), lambda i: (i, 0)),
                  pl.BlockSpec((kdim, cpad), lambda i: (0, 0))],
        out_specs=pl.BlockSpec((tm, cpad), lambda i: (i, 0)),
        compiler_params=pltpu.CompilerParams(
            dimension_semantics=("parallel",),
            vmem_limit_bytes=VMEM_LIMIT),
    )(p_pad, wmat)
    return y, m


def affine_relu_pallas(y_pad, scale, shift):
    mp, cpad = y_pad.shape
    tm = _row_tile(mp)
    return pl.pallas_call(
        _affine_relu_kernel,
        out_shape=jax.ShapeDtypeStruct((mp, cpad), jnp.float32),
        grid=(mp // tm,),
        in_specs=[pl.BlockSpec((tm, cpad), lambda i: (i, 0)),
                  pl.BlockSpec((1, cpad), lambda i: (0, 0)),
                  pl.BlockSpec((1, cpad), lambda i: (0, 0))],
        out_specs=pl.BlockSpec((tm, cpad), lambda i: (i, 0)),
        compiler_params=pltpu.CompilerParams(
            dimension_semantics=("parallel",),
            vmem_limit_bytes=VMEM_LIMIT),
    )(y_pad, scale, shift)


# ----------------- sub-pixel ConvTranspose2d as one packed matmul -----------

def _subpixel_geometry(h, w, k, s, p):
    oh = (h - 1) * s - 2 * p + k
    ow = (w - 1) * s - 2 * p + k
    assert oh % s == 0 and ow % s == 0, "sub-pixel split needs s | output size"
    qh, qw = oh // s, ow // s
    jlo = -((-(p - k + 1)) // s)        # ceil((p - k + 1) / s)  (<= 0)
    jhi = (s - 1 + p) // s
    t = jhi - jlo + 1                   # taps per spatial dim
    return oh, ow, qh, qw, jlo, jhi, t


def _build_patches(x, qh, qw, jlo, jhi, t):
    """x: NHWC. Returns (N*QH*QW, T*T*Cin) bf16 patch matrix (JAX glue)."""
    n, h, w, cin = x.shape
    pad_l = max(0, -jlo)
    pad_rh = max(0, (qh - 1) + jhi - (h - 1))
    pad_rw = max(0, (qw - 1) + jhi - (w - 1))
    xp = jnp.pad(x, ((0, 0), (pad_l, pad_rh), (pad_l, pad_rw), (0, 0)))
    cols = []
    for dh in range(t):
        hs = jlo + dh + pad_l
        for dw in range(t):
            ws = jlo + dw + pad_l
            cols.append(xp[:, hs:hs + qh, ws:ws + qw, :])
    patches = jnp.stack(cols, axis=3)            # (N, QH, QW, T*T, Cin)
    return patches.reshape(n * qh * qw, t * t * cin).astype(jnp.bfloat16)


def _build_packed_weight(weight, s, p, jlo, t, cpad):
    """weight: (Cin, Cout, k, k) PyTorch ConvTranspose2d layout.
    Returns (T*T*Cin, cpad) bf16 matrix, columns ordered (rh, rw, cout)."""
    cin, cout, k, _ = weight.shape
    wt = weight.transpose(2, 3, 0, 1)            # (k, k, Cin, Cout)
    wpk = jnp.zeros((t, t, cin, s, s, cout), jnp.float32)
    for dh in range(t):
        for rh in range(s):
            th = rh + p - s * (jlo + dh)
            if not (0 <= th < k):
                continue
            for dw in range(t):
                for rw in range(s):
                    tw = rw + p - s * (jlo + dw)
                    if not (0 <= tw < k):
                        continue
                    wpk = wpk.at[dh, dw, :, rh, rw, :].set(wt[th, tw])
    wmat = wpk.reshape(t * t * cin, s * s * cout)
    wmat = jnp.pad(wmat, ((0, 0), (0, cpad - s * s * cout)))
    return wmat.astype(jnp.bfloat16)


def _pixel_shuffle(y_flat, n, qh, qw, s, cout):
    """(N*QH*QW, s*s*Cout) -> NHWC (N, QH*s, QW*s, Cout)."""
    y = y_flat.reshape(n, qh, qw, s, s, cout)
    return y.transpose(0, 1, 3, 2, 4, 5).reshape(n, qh * s, qw * s, cout)


def deconv_bn_relu(x, weight, gamma, beta, stride, padding, eps=1e-5):
    """x: NHWC. ConvTranspose2d (no bias) + BatchNorm2d (batch stats) + ReLU."""
    n, h, w, _ = x.shape
    cin, cout, k, _ = weight.shape
    oh, ow, qh, qw, jlo, jhi, t = _subpixel_geometry(h, w, k, stride, padding)
    s2c = stride * stride * cout
    cpad = _round_up(s2c, LANE)

    patches = _build_patches(x, qh, qw, jlo, jhi, t)
    wmat = _build_packed_weight(weight, stride, padding, jlo, t, cpad)

    y_pad, sums, sqs, m = matmul_stats_pallas(patches, wmat)

    # BN batch stats per real output channel (fold the s*s phase columns).
    mtot = n * oh * ow
    ch_sum = sums[0, :s2c].reshape(stride * stride, cout).sum(axis=0)
    ch_sq = sqs[0, :s2c].reshape(stride * stride, cout).sum(axis=0)
    mean = ch_sum / mtot
    var = ch_sq / mtot - mean * mean             # biased var (BN training mode)
    scale_c = gamma * lax.rsqrt(var + eps)
    shift_c = beta - mean * scale_c

    scale_pk = jnp.pad(jnp.tile(scale_c, stride * stride),
                       (0, cpad - s2c)).reshape(1, cpad)
    shift_pk = jnp.pad(jnp.tile(shift_c, stride * stride),
                       (0, cpad - s2c)).reshape(1, cpad)

    out_pad = affine_relu_pallas(y_pad, scale_pk, shift_pk)
    return _pixel_shuffle(out_pad[:m, :s2c], n, qh, qw, stride, cout)


def deconv_tanh(x, weight, stride, padding):
    """x: NHWC. ConvTranspose2d (no bias) + tanh (fused into the matmul)."""
    n, h, w, _ = x.shape
    cin, cout, k, _ = weight.shape
    oh, ow, qh, qw, jlo, jhi, t = _subpixel_geometry(h, w, k, stride, padding)
    s2c = stride * stride * cout
    cpad = _round_up(s2c, LANE)

    patches = _build_patches(x, qh, qw, jlo, jhi, t)
    wmat = _build_packed_weight(weight, stride, padding, jlo, t, cpad)

    y_pad, m = matmul_tanh_pallas(patches, wmat)
    return _pixel_shuffle(y_pad[:m, :s2c], n, qh, qw, stride, cout)


# ------------------------------- NetG module --------------------------------

def init_netg_params(key, ngf, nz):
    ks = jax.random.split(key, 5)

    def w(k, cin, cout, ksz):
        return 0.05 * jax.random.normal(k, (cin, cout, ksz, ksz), jnp.float32)

    return {
        "w1": w(ks[0], nz, ngf * 8, 4),
        "g1": jnp.ones((ngf * 8,), jnp.float32), "b1": jnp.zeros((ngf * 8,), jnp.float32),
        "w2": w(ks[1], ngf * 8, ngf * 4, 4),
        "g2": jnp.ones((ngf * 4,), jnp.float32), "b2": jnp.zeros((ngf * 4,), jnp.float32),
        "w3": w(ks[2], ngf * 4, ngf * 2, 4),
        "g3": jnp.ones((ngf * 2,), jnp.float32), "b3": jnp.zeros((ngf * 2,), jnp.float32),
        "w4": w(ks[3], ngf * 2, ngf, 4),
        "g4": jnp.ones((ngf,), jnp.float32), "b4": jnp.zeros((ngf,), jnp.float32),
        "w5": w(ks[4], ngf, 3, 5),
    }


def netg_forward(params, x_nchw):
    x = x_nchw.transpose(0, 2, 3, 1)                         # NCHW -> NHWC once
    x = deconv_bn_relu(x, params["w1"], params["g1"], params["b1"], 1, 0)
    x = deconv_bn_relu(x, params["w2"], params["g2"], params["b2"], 2, 1)
    x = deconv_bn_relu(x, params["w3"], params["g3"], params["b3"], 2, 1)
    x = deconv_bn_relu(x, params["w4"], params["g4"], params["b4"], 2, 1)
    x = deconv_tanh(x, params["w5"], 3, 1)
    return x.transpose(0, 3, 1, 2)                           # NHWC -> NCHW once


# ------------------------- Pure-JAX reference (check) -----------------------

def conv_transpose_ref(x, weight, stride, padding):
    k = weight.shape[2]
    wf = weight[:, :, ::-1, ::-1].transpose(1, 0, 2, 3)      # (Cout, Cin, k, k)
    pad = k - 1 - padding
    return lax.conv_general_dilated(
        x, wf, window_strides=(1, 1), padding=[(pad, pad), (pad, pad)],
        lhs_dilation=(stride, stride),
        dimension_numbers=("NCHW", "OIHW", "NCHW"),
        precision=lax.Precision.HIGHEST)


def bn_relu_ref(y, gamma, beta, eps=1e-5):
    mean = y.mean(axis=(0, 2, 3), keepdims=True)
    var = y.var(axis=(0, 2, 3), keepdims=True)
    yn = (y - mean) / jnp.sqrt(var + eps)
    return jnp.maximum(yn * gamma.reshape(1, -1, 1, 1) + beta.reshape(1, -1, 1, 1), 0.0)


def netg_ref(params, x):
    x = bn_relu_ref(conv_transpose_ref(x, params["w1"], 1, 0), params["g1"], params["b1"])
    x = bn_relu_ref(conv_transpose_ref(x, params["w2"], 2, 1), params["g2"], params["b2"])
    x = bn_relu_ref(conv_transpose_ref(x, params["w3"], 2, 1), params["g3"], params["b3"])
    x = bn_relu_ref(conv_transpose_ref(x, params["w4"], 2, 1), params["g4"], params["b4"])
    return jnp.tanh(conv_transpose_ref(x, params["w5"], 3, 1))


# ---------------------------------- main -------------------------------------

if __name__ == "__main__":
    ngf, nz, batch = 4, 8, 2
    key = jax.random.PRNGKey(0)
    kp, kx = jax.random.split(key)
    params = init_netg_params(kp, ngf, nz)
    x = jax.random.normal(kx, (batch, nz, 1, 1), jnp.float32)   # latent z, NCHW

    out = jax.jit(netg_forward)(params, x)
    out = jax.block_until_ready(out)

    assert out.shape == (batch, 3, 96, 96), out.shape
    assert bool(jnp.all(jnp.isfinite(out)))

    ref = jax.block_until_ready(jax.jit(netg_ref)(params, x))
    # bf16 MXU inputs vs f32 HIGHEST reference -> slightly looser tolerance.
    err = float(jnp.max(jnp.abs(out - ref)))
    assert err < 3e-2, err

    print("KERNEL_OK")
</pallas_src>

<mosaic_0001>
module attributes {stable_mosaic.version = 11 : i64} {
  func.func @_mm_stats_kernel(%arg0: i32, %arg1: memref<32x128xbf16, #tpu.memory_space<vmem>>, %arg2: memref<128x128xbf16, #tpu.memory_space<vmem>>, %arg3: memref<32x128xf32, #tpu.memory_space<vmem>>, %arg4: memref<1x128xf32, #tpu.memory_space<vmem>>, %arg5: memref<1x128xf32, #tpu.memory_space<vmem>>) attributes {dimension_semantics = [#tpu.dimension_semantics<arbitrary>], iteration_bounds = array<i64: 1>, scalar_prefetch = 0 : i64, scratch_operands = 0 : i64, tpu.core_type = #tpu.core_type<tc>, window_params = [{transform_indices = @transform_0, window_bounds = array<i64: 32, 128>}, {pipeline_mode = #tpu.pipeline_mode<synchronous>, transform_indices = @transform_1, window_bounds = array<i64: 128, 128>}, {transform_indices = @transform_2, window_bounds = array<i64: 32, 128>}, {pipeline_mode = #tpu.pipeline_mode<synchronous>, transform_indices = @transform_3, window_bounds = array<i64: 1, 128>}, {pipeline_mode = #tpu.pipeline_mode<synchronous>, transform_indices = @transform_4, window_bounds = array<i64: 1, 128>}]} {
    %c0 = arith.constant 0 : index
    %c0_0 = arith.constant 0 : index
    %0 = vector.load %arg1[%c0, %c0_0] : memref<32x128xbf16, #tpu.memory_space<vmem>>, vector<32x128xbf16>
    %c0_1 = arith.constant 0 : index
    %c0_2 = arith.constant 0 : index
    %1 = vector.load %arg2[%c0_1, %c0_2] : memref<128x128xbf16, #tpu.memory_space<vmem>>, vector<128x128xbf16>
    %cst = arith.constant dense<0.000000e+00> : vector<32x128xf32>
    %2 = tpu.matmul %0, %1, %cst {dimension_numbers = #tpu.dot_dimension_numbers<[1], [0], [0], [1], [0, 0, 1, 1], [], []>} : vector<32x128xbf16>, vector<128x128xbf16>, vector<32x128xf32> -> vector<32x128xf32>
    %c0_3 = arith.constant 0 : index
    %c0_4 = arith.constant 0 : index
    %3 = vector.load %arg3[%c0_3, %c0_4] : memref<32x128xf32, #tpu.memory_space<vmem>>, vector<32x128xf32>
    tpu.vector_store %arg3[%c0_3, %c0_4], %2 {strides = array<i32>} : memref<32x128xf32, #tpu.memory_space<vmem>>, vector<32x128xf32>,
    %c0_i32 = arith.constant 0 : i32
    %4 = arith.cmpi eq, %arg0, %c0_i32 : i32
    %5 = arith.extui %4 : i1 to i32
    %c0_i32_5 = arith.constant 0 : i32
    %6 = arith.cmpi ne, %5, %c0_i32_5 : i32
    scf.if %6 {
      %cst_16 = arith.constant 0.000000e+00 : f32
      %18 = vector.broadcast %cst_16 : f32 to vector<1x128xf32>
      %c0_17 = arith.constant 0 : index
      %c0_18 = arith.constant 0 : index
      %19 = vector.load %arg4[%c0_17, %c0_18] : memref<1x128xf32, #tpu.memory_space<vmem>>, vector<1x128xf32>
      tpu.vector_store %arg4[%c0_17, %c0_18], %18 {strides = array<i32>} : memref<1x128xf32, #tpu.memory_space<vmem>>, vector<1x128xf32>,
      %cst_19 = arith.constant 0.000000e+00 : f32
      %20 = vector.broadcast %cst_19 : f32 to vector<1x128xf32>
      %c0_20 = arith.constant 0 : index
      %c0_21 = arith.constant 0 : index
      %21 = vector.load %arg5[%c0_20, %c0_21] : memref<1x128xf32, #tpu.memory_space<vmem>>, vector<1x128xf32>
      tpu.vector_store %arg5[%c0_20, %c0_21], %20 {strides = array<i32>} : memref<1x128xf32, #tpu.memory_space<vmem>>, vector<1x128xf32>,
    } else {
    }
    %c0_6 = arith.constant 0 : index
    %c0_7 = arith.constant 0 : index
    %7 = vector.load %arg4[%c0_6, %c0_7] : memref<1x128xf32, #tpu.memory_space<vmem>>, vector<1x128xf32>
    %cst_8 = arith.constant dense<0.000000e+00> : vector<128xf32>
    %8 = vector.multi_reduction <add>, %2, %cst_8 [0] : vector<32x128xf32> to vector<128xf32>
    %9 = vector.shape_cast %8 : vector<128xf32> to vector<1x128xf32>
    %10 = arith.addf %7, %9 : vector<1x128xf32>
    %c0_9 = arith.constant 0 : index
    %c0_10 = arith.constant 0 : index
    %11 = vector.load %arg4[%c0_9, %c0_10] : memref<1x128xf32, #tpu.memory_space<vmem>>, vector<1x128xf32>
    tpu.vector_store %arg4[%c0_9, %c0_10], %10 {strides = array<i32>} : memref<1x128xf32, #tpu.memory_space<vmem>>, vector<1x128xf32>,
    %c0_11 = arith.constant 0 : index
    %c0_12 = arith.constant 0 : index
    %12 = vector.load %arg5[%c0_11, %c0_12] : memref<1x128xf32, #tpu.memory_space<vmem>>, vector<1x128xf32>
    %13 = arith.mulf %2, %2 : vector<32x128xf32>
    %cst_13 = arith.constant dense<0.000000e+00> : vector<128xf32>
    %14 = vector.multi_reduction <add>, %13, %cst_13 [0] : vector<32x128xf32> to vector<128xf32>
    %15 = vector.shape_cast %14 : vector<128xf32> to vector<1x128xf32>
    %16 = arith.addf %12, %15 : vector<1x128xf32>
    %c0_14 = arith.constant 0 : index
    %c0_15 = arith.constant 0 : index
    %17 = vector.load %arg5[%c0_14, %c0_15] : memref<1x128xf32, #tpu.memory_space<vmem>>, vector<1x128xf32>
    tpu.vector_store %arg5[%c0_14, %c0_15], %16 {strides = array<i32>} : memref<1x128xf32, #tpu.memory_space<vmem>>, vector<1x128xf32>,
    return
  }
  func.func @transform_0(%arg0: i32) -> (i32, i32) {
    %c0_i32 = arith.constant 0 : i32
    %c0_i32_0 = arith.constant 0 : i32
    return %arg0, %c0_i32 : i32, i32
  }
  func.func @transform_1(%arg0: i32) -> (i32, i32) {
    %c0_i32 = arith.constant 0 : i32
    %c0_i32_0 = arith.constant 0 : i32
    %c0_i32_1 = arith.constant 0 : i32
    return %c0_i32, %c0_i32_0 : i32, i32
  }
  func.func @transform_2(%arg0: i32) -> (i32, i32) {
    %c0_i32 = arith.constant 0 : i32
    %c0_i32_0 = arith.constant 0 : i32
    return %arg0, %c0_i32 : i32, i32
  }
  func.func @transform_3(%arg0: i32) -> (i32, i32) {
    %c0_i32 = arith.constant 0 : i32
    %c0_i32_0 = arith.constant 0 : i32
    %c0_i32_1 = arith.constant 0 : i32
    return %c0_i32, %c0_i32_0 : i32, i32
  }
  func.func @transform_4(%arg0: i32) -> (i32, i32) {
    %c0_i32 = arith.constant 0 : i32
    %c0_i32_0 = arith.constant 0 : i32
    %c0_i32_1 = arith.constant 0 : i32
    return %c0_i32, %c0_i32_0 : i32, i32
  }
}

module attributes {stable_mosaic.version = 11 : i64} {
  func.func @_affine_relu_kernel(%arg0: i32, %arg1: memref<32x128xf32, #tpu.memory_space<vmem>>, %arg2: memref<1x128xf32, #tpu.memory_space<vmem>>, %arg3: memref<1x128xf32, #tpu.memory_space<vmem>>, %arg4: memref<32x128xf32, #tpu.memory_space<vmem>>) attributes {dimension_semantics = [#tpu.dimension_semantics<parallel>], iteration_bounds = array<i64: 1>, scalar_prefetch = 0 : i64, scratch_operands = 0 : i64, tpu.core_type = #tpu.core_type<tc>, window_params = [{transform_indices = @transform_0, window_bounds = array<i64: 32, 128>}, {pipeline_mode = #tpu.pipeline_mode<synchronous>, transform_indices = @transform_1, window_bounds = array<i64: 1, 128>}, {pipeline_mode = #tpu.pipeline_mode<synchronous>, transform_indices = @transform_2, window_bounds = array<i64: 1, 128>}, {transform_indices = @transform_3, window_bounds = array<i64: 32, 128>}]} {
    %c0 = arith.constant 0 : index
    %c0_0 = arith.constant 0 : index
    %0 = vector.load %arg1[%c0, %c0_0] : memref<32x128xf32, #tpu.memory_space<vmem>>, vector<32x128xf32>
    %c0_1 = arith.constant 0 : index
    %c0_2 = arith.constant 0 : index
    %1 = vector.load %arg2[%c0_1, %c0_2] : memref<1x128xf32, #tpu.memory_space<vmem>>, vector<1x128xf32>
    %2 = vector.broadcast %1 : vector<1x128xf32> to vector<32x128xf32>
    %3 = arith.mulf %0, %2 : vector<32x128xf32>
    %c0_3 = arith.constant 0 : index
    %c0_4 = arith.constant 0 : index
    %4 = vector.load %arg3[%c0_3, %c0_4] : memref<1x128xf32, #tpu.memory_space<vmem>>, vector<1x128xf32>
    %5 = vector.broadcast %4 : vector<1x128xf32> to vector<32x128xf32>
    %6 = arith.addf %3, %5 : vector<32x128xf32>
    %cst = arith.constant 0.000000e+00 : f32
    %7 = vector.broadcast %cst : f32 to vector<32x128xf32>
    %8 = arith.maximumf %6, %7 : vector<32x128xf32>
    %c0_5 = arith.constant 0 : index
    %c0_6 = arith.constant 0 : index
    %9 = vector.load %arg4[%c0_5, %c0_6] : memref<32x128xf32, #tpu.memory_space<vmem>>, vector<32x128xf32>
    tpu.vector_store %arg4[%c0_5, %c0_6], %8 {strides = array<i32>} : memref<32x128xf32, #tpu.memory_space<vmem>>, vector<32x128xf32>,
    return
  }
  func.func @transform_0(%arg0: i32) -> (i32, i32) {
    %c0_i32 = arith.constant 0 : i32
    %c0_i32_0 = arith.constant 0 : i32
    return %arg0, %c0_i32 : i32, i32
  }
  func.func @transform_1(%arg0: i32) -> (i32, i32) {
    %c0_i32 = arith.constant 0 : i32
    %c0_i32_0 = arith.constant 0 : i32
    %c0_i32_1 = arith.constant 0 : i32
    return %c0_i32, %c0_i32_0 : i32, i32
  }
  func.func @transform_2(%arg0: i32) -> (i32, i32) {
    %c0_i32 = arith.constant 0 : i32
    %c0_i32_0 = arith.constant 0 : i32
    %c0_i32_1 = arith.constant 0 : i32
    return %c0_i32, %c0_i32_0 : i32, i32
  }
  func.func @transform_3(%arg0: i32) -> (i32, i32) {
    %c0_i32 = arith.constant 0 : i32
    %c0_i32_0 = arith.constant 0 : i32
    return %arg0, %c0_i32 : i32, i32
  }
}

module attributes {stable_mosaic.version = 11 : i64} {
  func.func @_mm_stats_kernel(%arg0: i32, %arg1: memref<32x288xbf16, #tpu.memory_space<vmem>>, %arg2: memref<288x128xbf16, #tpu.memory_space<vmem>>, %arg3: memref<32x128xf32, #tpu.memory_space<vmem>>, %arg4: memref<1x128xf32, #tpu.memory_space<vmem>>, %arg5: memref<1x128xf32, #tpu.memory_space<vmem>>) attributes {dimension_semantics = [#tpu.dimension_semantics<arbitrary>], iteration_bounds = array<i64: 1>, scalar_prefetch = 0 : i64, scratch_operands = 0 : i64, tpu.core_type = #tpu.core_type<tc>, window_params = [{transform_indices = @transform_0, window_bounds = array<i64: 32, 288>}, {pipeline_mode = #tpu.pipeline_mode<synchronous>, transform_indices = @transform_1, window_bounds = array<i64: 288, 128>}, {transform_indices = @transform_2, window_bounds = array<i64: 32, 128>}, {pipeline_mode = #tpu.pipeline_mode<synchronous>, transform_indices = @transform_3, window_bounds = array<i64: 1, 128>}, {pipeline_mode = #tpu.pipeline_mode<synchronous>, transform_indices = @transform_4, window_bounds = array<i64: 1, 128>}]} {
    %c0 = arith.constant 0 : index
    %c0_0 = arith.constant 0 : index
    %0 = vector.load %arg1[%c0, %c0_0] : memref<32x288xbf16, #tpu.memory_space<vmem>>, vector<32x288xbf16>
    %c0_1 = arith.constant 0 : index
    %c0_2 = arith.constant 0 : index
    %1 = vector.load %arg2[%c0_1, %c0_2] : memref<288x128xbf16, #tpu.memory_space<vmem>>, vector<288x128xbf16>
    %cst = arith.constant dense<0.000000e+00> : vector<32x128xf32>
    %2 = tpu.matmul %0, %1, %cst {dimension_numbers = #tpu.dot_dimension_numbers<[1], [0], [0], [1], [0, 0, 1, 1], [], []>} : vector<32x288xbf16>, vector<288x128xbf16>, vector<32x128xf32> -> vector<32x128xf32>
    %c0_3 = arith.constant 0 : index
    %c0_4 = arith.constant 0 : index
    %3 = vector.load %arg3[%c0_3, %c0_4] : memref<32x128xf32, #tpu.memory_space<vmem>>, vector<32x128xf32>
    tpu.vector_store %arg3[%c0_3, %c0_4], %2 {strides = array<i32>} : memref<32x128xf32, #tpu.memory_space<vmem>>, vector<32x128xf32>,
    %c0_i32 = arith.constant 0 : i32
    %4 = arith.cmpi eq, %arg0, %c0_i32 : i32
    %5 = arith.extui %4 : i1 to i32
    %c0_i32_5 = arith.constant 0 : i32
    %6 = arith.cmpi ne, %5, %c0_i32_5 : i32
    scf.if %6 {
      %cst_16 = arith.constant 0.000000e+00 : f32
      %18 = vector.broadcast %cst_16 : f32 to vector<1x128xf32>
      %c0_17 = arith.constant 0 : index
      %c0_18 = arith.constant 0 : index
      %19 = vector.load %arg4[%c0_17, %c0_18] : memref<1x128xf32, #tpu.memory_space<vmem>>, vector<1x128xf32>
      tpu.vector_store %arg4[%c0_17, %c0_18], %18 {strides = array<i32>} : memref<1x128xf32, #tpu.memory_space<vmem>>, vector<1x128xf32>,
      %cst_19 = arith.constant 0.000000e+00 : f32
      %20 = vector.broadcast %cst_19 : f32 to vector<1x128xf32>
      %c0_20 = arith.constant 0 : index
      %c0_21 = arith.constant 0 : index
      %21 = vector.load %arg5[%c0_20, %c0_21] : memref<1x128xf32, #tpu.memory_space<vmem>>, vector<1x128xf32>
      tpu.vector_store %arg5[%c0_20, %c0_21], %20 {strides = array<i32>} : memref<1x128xf32, #tpu.memory_space<vmem>>, vector<1x128xf32>,
    } else {
    }
    %c0_6 = arith.constant 0 : index
    %c0_7 = arith.constant 0 : index
    %7 = vector.load %arg4[%c0_6, %c0_7] : memref<1x128xf32, #tpu.memory_space<vmem>>, vector<1x128xf32>
    %cst_8 = arith.constant dense<0.000000e+00> : vector<128xf32>
    %8 = vector.multi_reduction <add>, %2, %cst_8 [0] : vector<32x128xf32> to vector<128xf32>
    %9 = vector.shape_cast %8 : vector<128xf32> to vector<1x128xf32>
    %10 = arith.addf %7, %9 : vector<1x128xf32>
    %c0_9 = arith.constant 0 : index
    %c0_10 = arith.constant 0 : index
    %11 = vector.load %arg4[%c0_9, %c0_10] : memref<1x128xf32, #tpu.memory_space<vmem>>, vector<1x128xf32>
    tpu.vector_store %arg4[%c0_9, %c0_10], %10 {strides = array<i32>} : memref<1x128xf32, #tpu.memory_space<vmem>>, vector<1x128xf32>,
    %c0_11 = arith.constant 0 : index
    %c0_12 = arith.constant 0 : index
    %12 = vector.load %arg5[%c0_11, %c0_12] : memref<1x128xf32, #tpu.memory_space<vmem>>, vector<1x128xf32>
    %13 = arith.mulf %2, %2 : vector<32x128xf32>
    %cst_13 = arith.constant dense<0.000000e+00> : vector<128xf32>
    %14 = vector.multi_reduction <add>, %13, %cst_13 [0] : vector<32x128xf32> to vector<128xf32>
    %15 = vector.shape_cast %14 : vector<128xf32> to vector<1x128xf32>
    %16 = arith.addf %12, %15 : vector<1x128xf32>
    %c0_14 = arith.constant 0 : index
    %c0_15 = arith.constant 0 : index
    %17 = vector.load %arg5[%c0_14, %c0_15] : memref<1x128xf32, #tpu.memory_space<vmem>>, vector<1x128xf32>
    tpu.vector_store %arg5[%c0_14, %c0_15], %16 {strides = array<i32>} : memref<1x128xf32, #tpu.memory_space<vmem>>, vector<1x128xf32>,
    return
  }
  func.func @transform_0(%arg0: i32) -> (i32, i32) {
    %c0_i32 = arith.constant 0 : i32
    %c0_i32_0 = arith.constant 0 : i32
    return %arg0, %c0_i32 : i32, i32
  }
  func.func @transform_1(%arg0: i32) -> (i32, i32) {
    %c0_i32 = arith.constant 0 : i32
    %c0_i32_0 = arith.constant 0 : i32
    %c0_i32_1 = arith.constant 0 : i32
    return %c0_i32, %c0_i32_0 : i32, i32
  }
  func.func @transform_2(%arg0: i32) -> (i32, i32) {
    %c0_i32 = arith.constant 0 : i32
    %c0_i32_0 = arith.constant 0 : i32
    return %arg0, %c0_i32 : i32, i32
  }
  func.func @transform_3(%arg0: i32) -> (i32, i32) {
    %c0_i32 = arith.constant 0 : i32
    %c0_i32_0 = arith.constant 0 : i32
    %c0_i32_1 = arith.constant 0 : i32
    return %c0_i32, %c0_i32_0 : i32, i32
  }
  func.func @transform_4(%arg0: i32) -> (i32, i32) {
    %c0_i32 = arith.constant 0 : i32
    %c0_i32_0 = arith.constant 0 : i32
    %c0_i32_1 = arith.constant 0 : i32
    return %c0_i32, %c0_i32_0 : i32, i32
  }
}

module attributes {stable_mosaic.version = 11 : i64} {
  func.func @_mm_stats_kernel(%arg0: i32, %arg1: memref<128x144xbf16, #tpu.memory_space<vmem>>, %arg2: memref<144x128xbf16, #tpu.memory_space<vmem>>, %arg3: memref<128x128xf32, #tpu.memory_space<vmem>>, %arg4: memref<1x128xf32, #tpu.memory_space<vmem>>, %arg5: memref<1x128xf32, #tpu.memory_space<vmem>>) attributes {dimension_semantics = [#tpu.dimension_semantics<arbitrary>], iteration_bounds = array<i64: 1>, scalar_prefetch = 0 : i64, scratch_operands = 0 : i64, tpu.core_type = #tpu.core_type<tc>, window_params = [{transform_indices = @transform_0, window_bounds = array<i64: 128, 144>}, {pipeline_mode = #tpu.pipeline_mode<synchronous>, transform_indices = @transform_1, window_bounds = array<i64: 144, 128>}, {transform_indices = @transform_2, window_bounds = array<i64: 128, 128>}, {pipeline_mode = #tpu.pipeline_mode<synchronous>, transform_indices = @transform_3, window_bounds = array<i64: 1, 128>}, {pipeline_mode = #tpu.pipeline_mode<synchronous>, transform_indices = @transform_4, window_bounds = array<i64: 1, 128>}]} {
    %c0 = arith.constant 0 : index
    %c0_0 = arith.constant 0 : index
    %0 = vector.load %arg1[%c0, %c0_0] : memref<128x144xbf16, #tpu.memory_space<vmem>>, vector<128x144xbf16>
    %c0_1 = arith.constant 0 : index
    %c0_2 = arith.constant 0 : index
    %1 = vector.load %arg2[%c0_1, %c0_2] : memref<144x128xbf16, #tpu.memory_space<vmem>>, vector<144x128xbf16>
    %cst = arith.constant dense<0.000000e+00> : vector<128x128xf32>
    %2 = tpu.matmul %0, %1, %cst {dimension_numbers = #tpu.dot_dimension_numbers<[1], [0], [0], [1], [0, 0, 1, 1], [], []>} : vector<128x144xbf16>, vector<144x128xbf16>, vector<128x128xf32> -> vector<128x128xf32>
    %c0_3 = arith.constant 0 : index
    %c0_4 = arith.constant 0 : index
    %3 = vector.load %arg3[%c0_3, %c0_4] : memref<128x128xf32, #tpu.memory_space<vmem>>, vector<128x128xf32>
    tpu.vector_store %arg3[%c0_3, %c0_4], %2 {strides = array<i32>} : memref<128x128xf32, #tpu.memory_space<vmem>>, vector<128x128xf32>,
    %c0_i32 = arith.constant 0 : i32
    %4 = arith.cmpi eq, %arg0, %c0_i32 : i32
    %5 = arith.extui %4 : i1 to i32
    %c0_i32_5 = arith.constant 0 : i32
    %6 = arith.cmpi ne, %5, %c0_i32_5 : i32
    scf.if %6 {
      %cst_16 = arith.constant 0.000000e+00 : f32
      %18 = vector.broadcast %cst_16 : f32 to vector<1x128xf32>
      %c0_17 = arith.constant 0 : index
      %c0_18 = arith.constant 0 : index
      %19 = vector.load %arg4[%c0_17, %c0_18] : memref<1x128xf32, #tpu.memory_space<vmem>>, vector<1x128xf32>
      tpu.vector_store %arg4[%c0_17, %c0_18], %18 {strides = array<i32>} : memref<1x128xf32, #tpu.memory_space<vmem>>, vector<1x128xf32>,
      %cst_19 = arith.constant 0.000000e+00 : f32
      %20 = vector.broadcast %cst_19 : f32 to vector<1x128xf32>
      %c0_20 = arith.constant 0 : index
      %c0_21 = arith.constant 0 : index
      %21 = vector.load %arg5[%c0_20, %c0_21] : memref<1x128xf32, #tpu.memory_space<vmem>>, vector<1x128xf32>
      tpu.vector_store %arg5[%c0_20, %c0_21], %20 {strides = array<i32>} : memref<1x128xf32, #tpu.memory_space<vmem>>, vector<1x128xf32>,
    } else {
    }
    %c0_6 = arith.constant 0 : index
    %c0_7 = arith.constant 0 : index
    %7 = vector.load %arg4[%c0_6, %c0_7] : memref<1x128xf32, #tpu.memory_space<vmem>>, vector<1x128xf32>
    %cst_8 = arith.constant dense<0.000000e+00> : vector<128xf32>
    %8 = vector.multi_reduction <add>, %2, %cst_8 [0] : vector<128x128xf32> to vector<128xf32>
    %9 = vector.shape_cast %8 : vector<128xf32> to vector<1x128xf32>
    %10 = arith.addf %7, %9 : vector<1x128xf32>
    %c0_9 = arith.constant 0 : index
    %c0_10 = arith.constant 0 : index
    %11 = vector.load %arg4[%c0_9, %c0_10] : memref<1x128xf32, #tpu.memory_space<vmem>>, vector<1x128xf32>
    tpu.vector_store %arg4[%c0_9, %c0_10], %10 {strides = array<i32>} : memref<1x128xf32, #tpu.memory_space<vmem>>, vector<1x128xf32>,
    %c0_11 = arith.constant 0 : index
    %c0_12 = arith.constant 0 : index
    %12 = vector.load %arg5[%c0_11, %c0_12] : memref<1x128xf32, #tpu.memory_space<vmem>>, vector<1x128xf32>
    %13 = arith.mulf %2, %2 : vector<128x128xf32>
    %cst_13 = arith.constant dense<0.000000e+00> : vector<128xf32>
    %14 = vector.multi_reduction <add>, %13, %cst_13 [0] : vector<128x128xf32> to vector<128xf32>
    %15 = vector.shape_cast %14 : vector<128xf32> to vector<1x128xf32>
    %16 = arith.addf %12, %15 : vector<1x128xf32>
    %c0_14 = arith.constant 0 : index
    %c0_15 = arith.constant 0 : index
    %17 = vector.load %arg5[%c0_14, %c0_15] : memref<1x128xf32, #tpu.memory_space<vmem>>, vector<1x128xf32>
    tpu.vector_store %arg5[%c0_14, %c0_15], %16 {strides = array<i32>} : memref<1x128xf32, #tpu.memory_space<vmem>>, vector<1x128xf32>,
    return
  }
  func.func @transform_0(%arg0: i32) -> (i32, i32) {
    %c0_i32 = arith.constant 0 : i32
    %c0_i32_0 = arith.constant 0 : i32
    return %arg0, %c0_i32 : i32, i32
  }
  func.func @transform_1(%arg0: i32) -> (i32, i32) {
    %c0_i32 = arith.constant 0 : i32
    %c0_i32_0 = arith.constant 0 : i32
    %c0_i32_1 = arith.constant 0 : i32
    return %c0_i32, %c0_i32_0 : i32, i32
  }
  func.func @transform_2(%arg0: i32) -> (i32, i32) {
    %c0_i32 = arith.constant 0 : i32
    %c0_i32_0 = arith.constant 0 : i32
    return %arg0, %c0_i32 : i32, i32
  }
  func.func @transform_3(%arg0: i32) -> (i32, i32) {
    %c0_i32 = arith.constant 0 : i32
    %c0_i32_0 = arith.constant 0 : i32
    %c0_i32_1 = arith.constant 0 : i32
    return %c0_i32, %c0_i32_0 : i32, i32
  }
  func.func @transform_4(%arg0: i32) -> (i32, i32) {
    %c0_i32 = arith.constant 0 : i32
    %c0_i32_0 = arith.constant 0 : i32
    %c0_i32_1 = arith.constant 0 : i32
    return %c0_i32, %c0_i32_0 : i32, i32
  }
}

module attributes {stable_mosaic.version = 11 : i64} {
  func.func @_affine_relu_kernel(%arg0: i32, %arg1: memref<128x128xf32, #tpu.memory_space<vmem>>, %arg2: memref<1x128xf32, #tpu.memory_space<vmem>>, %arg3: memref<1x128xf32, #tpu.memory_space<vmem>>, %arg4: memref<128x128xf32, #tpu.memory_space<vmem>>) attributes {dimension_semantics = [#tpu.dimension_semantics<parallel>], iteration_bounds = array<i64: 1>, scalar_prefetch = 0 : i64, scratch_operands = 0 : i64, tpu.core_type = #tpu.core_type<tc>, window_params = [{transform_indices = @transform_0, window_bounds = array<i64: 128, 128>}, {pipeline_mode = #tpu.pipeline_mode<synchronous>, transform_indices = @transform_1, window_bounds = array<i64: 1, 128>}, {pipeline_mode = #tpu.pipeline_mode<synchronous>, transform_indices = @transform_2, window_bounds = array<i64: 1, 128>}, {transform_indices = @transform_3, window_bounds = array<i64: 128, 128>}]} {
    %c0 = arith.constant 0 : index
    %c0_0 = arith.constant 0 : index
    %0 = vector.load %arg1[%c0, %c0_0] : memref<128x128xf32, #tpu.memory_space<vmem>>, vector<128x128xf32>
    %c0_1 = arith.constant 0 : index
    %c0_2 = arith.constant 0 : index
    %1 = vector.load %arg2[%c0_1, %c0_2] : memref<1x128xf32, #tpu.memory_space<vmem>>, vector<1x128xf32>
    %2 = vector.broadcast %1 : vector<1x128xf32> to vector<128x128xf32>
    %3 = arith.mulf %0, %2 : vector<128x128xf32>
    %c0_3 = arith.constant 0 : index
    %c0_4 = arith.constant 0 : index
    %4 = vector.load %arg3[%c0_3, %c0_4] : memref<1x128xf32, #tpu.memory_space<vmem>>, vector<1x128xf32>
    %5 = vector.broadcast %4 : vector<1x128xf32> to vector<128x128xf32>
    %6 = arith.addf %3, %5 : vector<128x128xf32>
    %cst = arith.constant 0.000000e+00 : f32
    %7 = vector.broadcast %cst : f32 to vector<128x128xf32>
    %8 = arith.maximumf %6, %7 : vector<128x128xf32>
    %c0_5 = arith.constant 0 : index
    %c0_6 = arith.constant 0 : index
    %9 = vector.load %arg4[%c0_5, %c0_6] : memref<128x128xf32, #tpu.memory_space<vmem>>, vector<128x128xf32>
    tpu.vector_store %arg4[%c0_5, %c0_6], %8 {strides = array<i32>} : memref<128x128xf32, #tpu.memory_space<vmem>>, vector<128x128xf32>,
    return
  }
  func.func @transform_0(%arg0: i32) -> (i32, i32) {
    %c0_i32 = arith.constant 0 : i32
    %c0_i32_0 = arith.constant 0 : i32
    return %arg0, %c0_i32 : i32, i32
  }
  func.func @transform_1(%arg0: i32) -> (i32, i32) {
    %c0_i32 = arith.constant 0 : i32
    %c0_i32_0 = arith.constant 0 : i32
    %c0_i32_1 = arith.constant 0 : i32
    return %c0_i32, %c0_i32_0 : i32, i32
  }
  func.func @transform_2(%arg0: i32) -> (i32, i32) {
    %c0_i32 = arith.constant 0 : i32
    %c0_i32_0 = arith.constant 0 : i32
    %c0_i32_1 = arith.constant 0 : i32
    return %c0_i32, %c0_i32_0 : i32, i32
  }
  func.func @transform_3(%arg0: i32) -> (i32, i32) {
    %c0_i32 = arith.constant 0 : i32
    %c0_i32_0 = arith.constant 0 : i32
    return %arg0, %c0_i32 : i32, i32
  }
}

module attributes {stable_mosaic.version = 11 : i64} {
  func.func @_mm_stats_kernel(%arg0: i32, %arg1: memref<512x72xbf16, #tpu.memory_space<vmem>>, %arg2: memref<72x128xbf16, #tpu.memory_space<vmem>>, %arg3: memref<512x128xf32, #tpu.memory_space<vmem>>, %arg4: memref<1x128xf32, #tpu.memory_space<vmem>>, %arg5: memref<1x128xf32, #tpu.memory_space<vmem>>) attributes {dimension_semantics = [#tpu.dimension_semantics<arbitrary>], iteration_bounds = array<i64: 1>, scalar_prefetch = 0 : i64, scratch_operands = 0 : i64, tpu.core_type = #tpu.core_type<tc>, window_params = [{transform_indices = @transform_0, window_bounds = array<i64: 512, 72>}, {pipeline_mode = #tpu.pipeline_mode<synchronous>, transform_indices = @transform_1, window_bounds = array<i64: 72, 128>}, {transform_indices = @transform_2, window_bounds = array<i64: 512, 128>}, {pipeline_mode = #tpu.pipeline_mode<synchronous>, transform_indices = @transform_3, window_bounds = array<i64: 1, 128>}, {pipeline_mode = #tpu.pipeline_mode<synchronous>, transform_indices = @transform_4, window_bounds = array<i64: 1, 128>}]} {
    %c0 = arith.constant 0 : index
    %c0_0 = arith.constant 0 : index
    %0 = vector.load %arg1[%c0, %c0_0] : memref<512x72xbf16, #tpu.memory_space<vmem>>, vector<512x72xbf16>
    %c0_1 = arith.constant 0 : index
    %c0_2 = arith.constant 0 : index
    %1 = vector.load %arg2[%c0_1, %c0_2] : memref<72x128xbf16, #tpu.memory_space<vmem>>, vector<72x128xbf16>
    %cst = arith.constant dense<0.000000e+00> : vector<512x128xf32>
    %2 = tpu.matmul %0, %1, %cst {dimension_numbers = #tpu.dot_dimension_numbers<[1], [0], [0], [1], [0, 0, 1, 1], [], []>} : vector<512x72xbf16>, vector<72x128xbf16>, vector<512x128xf32> -> vector<512x128xf32>
    %c0_3 = arith.constant 0 : index
    %c0_4 = arith.constant 0 : index
    %3 = vector.load %arg3[%c0_3, %c0_4] : memref<512x128xf32, #tpu.memory_space<vmem>>, vector<512x128xf32>
    tpu.vector_store %arg3[%c0_3, %c0_4], %2 {strides = array<i32>} : memref<512x128xf32, #tpu.memory_space<vmem>>, vector<512x128xf32>,
    %c0_i32 = arith.constant 0 : i32
    %4 = arith.cmpi eq, %arg0, %c0_i32 : i32
    %5 = arith.extui %4 : i1 to i32
    %c0_i32_5 = arith.constant 0 : i32
    %6 = arith.cmpi ne, %5, %c0_i32_5 : i32
    scf.if %6 {
      %cst_16 = arith.constant 0.000000e+00 : f32
      %18 = vector.broadcast %cst_16 : f32 to vector<1x128xf32>
      %c0_17 = arith.constant 0 : index
      %c0_18 = arith.constant 0 : index
      %19 = vector.load %arg4[%c0_17, %c0_18] : memref<1x128xf32, #tpu.memory_space<vmem>>, vector<1x128xf32>
      tpu.vector_store %arg4[%c0_17, %c0_18], %18 {strides = array<i32>} : memref<1x128xf32, #tpu.memory_space<vmem>>, vector<1x128xf32>,
      %cst_19 = arith.constant 0.000000e+00 : f32
      %20 = vector.broadcast %cst_19 : f32 to vector<1x128xf32>
      %c0_20 = arith.constant 0 : index
      %c0_21 = arith.constant 0 : index
      %21 = vector.load %arg5[%c0_20, %c0_21] : memref<1x128xf32, #tpu.memory_space<vmem>>, vector<1x128xf32>
      tpu.vector_store %arg5[%c0_20, %c0_21], %20 {strides = array<i32>} : memref<1x128xf32, #tpu.memory_space<vmem>>, vector<1x128xf32>,
    } else {
    }
    %c0_6 = arith.constant 0 : index
    %c0_7 = arith.constant 0 : index
    %7 = vector.load %arg4[%c0_6, %c0_7] : memref<1x128xf32, #tpu.memory_space<vmem>>, vector<1x128xf32>
    %cst_8 = arith.constant dense<0.000000e+00> : vector<128xf32>
    %8 = vector.multi_reduction <add>, %2, %cst_8 [0] : vector<512x128xf32> to vector<128xf32>
    %9 = vector.shape_cast %8 : vector<128xf32> to vector<1x128xf32>
    %10 = arith.addf %7, %9 : vector<1x128xf32>
    %c0_9 = arith.constant 0 : index
    %c0_10 = arith.constant 0 : index
    %11 = vector.load %arg4[%c0_9, %c0_10] : memref<1x128xf32, #tpu.memory_space<vmem>>, vector<1x128xf32>
    tpu.vector_store %arg4[%c0_9, %c0_10], %10 {strides = array<i32>} : memref<1x128xf32, #tpu.memory_space<vmem>>, vector<1x128xf32>,
    %c0_11 = arith.constant 0 : index
    %c0_12 = arith.constant 0 : index
    %12 = vector.load %arg5[%c0_11, %c0_12] : memref<1x128xf32, #tpu.memory_space<vmem>>, vector<1x128xf32>
    %13 = arith.mulf %2, %2 : vector<512x128xf32>
    %cst_13 = arith.constant dense<0.000000e+00> : vector<128xf32>
    %14 = vector.multi_reduction <add>, %13, %cst_13 [0] : vector<512x128xf32> to vector<128xf32>
    %15 = vector.shape_cast %14 : vector<128xf32> to vector<1x128xf32>
    %16 = arith.addf %12, %15 : vector<1x128xf32>
    %c0_14 = arith.constant 0 : index
    %c0_15 = arith.constant 0 : index
    %17 = vector.load %arg5[%c0_14, %c0_15] : memref<1x128xf32, #tpu.memory_space<vmem>>, vector<1x128xf32>
    tpu.vector_store %arg5[%c0_14, %c0_15], %16 {strides = array<i32>} : memref<1x128xf32, #tpu.memory_space<vmem>>, vector<1x128xf32>,
    return
  }
  func.func @transform_0(%arg0: i32) -> (i32, i32) {
    %c0_i32 = arith.constant 0 : i32
    %c0_i32_0 = arith.constant 0 : i32
    return %arg0, %c0_i32 : i32, i32
  }
  func.func @transform_1(%arg0: i32) -> (i32, i32) {
    %c0_i32 = arith.constant 0 : i32
    %c0_i32_0 = arith.constant 0 : i32
    %c0_i32_1 = arith.constant 0 : i32
    return %c0_i32, %c0_i32_0 : i32, i32
  }
  func.func @transform_2(%arg0: i32) -> (i32, i32) {
    %c0_i32 = arith.constant 0 : i32
    %c0_i32_0 = arith.constant 0 : i32
    return %arg0, %c0_i32 : i32, i32
  }
  func.func @transform_3(%arg0: i32) -> (i32, i32) {
    %c0_i32 = arith.constant 0 : i32
    %c0_i32_0 = arith.constant 0 : i32
    %c0_i32_1 = arith.constant 0 : i32
    return %c0_i32, %c0_i32_0 : i32, i32
  }
  func.func @transform_4(%arg0: i32) -> (i32, i32) {
    %c0_i32 = arith.constant 0 : i32
    %c0_i32_0 = arith.constant 0 : i32
    %c0_i32_1 = arith.constant 0 : i32
    return %c0_i32, %c0_i32_0 : i32, i32
  }
}

module attributes {stable_mosaic.version = 11 : i64} {
  func.func @_affine_relu_kernel(%arg0: i32, %arg1: memref<512x128xf32, #tpu.memory_space<vmem>>, %arg2: memref<1x128xf32, #tpu.memory_space<vmem>>, %arg3: memref<1x128xf32, #tpu.memory_space<vmem>>, %arg4: memref<512x128xf32, #tpu.memory_space<vmem>>) attributes {dimension_semantics = [#tpu.dimension_semantics<parallel>], iteration_bounds = array<i64: 1>, scalar_prefetch = 0 : i64, scratch_operands = 0 : i64, tpu.core_type = #tpu.core_type<tc>, window_params = [{transform_indices = @transform_0, window_bounds = array<i64: 512, 128>}, {pipeline_mode = #tpu.pipeline_mode<synchronous>, transform_indices = @transform_1, window_bounds = array<i64: 1, 128>}, {pipeline_mode = #tpu.pipeline_mode<synchronous>, transform_indices = @transform_2, window_bounds = array<i64: 1, 128>}, {transform_indices = @transform_3, window_bounds = array<i64: 512, 128>}]} {
    %c0 = arith.constant 0 : index
    %c0_0 = arith.constant 0 : index
    %0 = vector.load %arg1[%c0, %c0_0] : memref<512x128xf32, #tpu.memory_space<vmem>>, vector<512x128xf32>
    %c0_1 = arith.constant 0 : index
    %c0_2 = arith.constant 0 : index
    %1 = vector.load %arg2[%c0_1, %c0_2] : memref<1x128xf32, #tpu.memory_space<vmem>>, vector<1x128xf32>
    %2 = vector.broadcast %1 : vector<1x128xf32> to vector<512x128xf32>
    %3 = arith.mulf %0, %2 : vector<512x128xf32>
    %c0_3 = arith.constant 0 : index
    %c0_4 = arith.constant 0 : index
    %4 = vector.load %arg3[%c0_3, %c0_4] : memref<1x128xf32, #tpu.memory_space<vmem>>, vector<1x128xf32>
    %5 = vector.broadcast %4 : vector<1x128xf32> to vector<512x128xf32>
    %6 = arith.addf %3, %5 : vector<512x128xf32>
    %cst = arith.constant 0.000000e+00 : f32
    %7 = vector.broadcast %cst : f32 to vector<512x128xf32>
    %8 = arith.maximumf %6, %7 : vector<512x128xf32>
    %c0_5 = arith.constant 0 : index
    %c0_6 = arith.constant 0 : index
    %9 = vector.load %arg4[%c0_5, %c0_6] : memref<512x128xf32, #tpu.memory_space<vmem>>, vector<512x128xf32>
    tpu.vector_store %arg4[%c0_5, %c0_6], %8 {strides = array<i32>} : memref<512x128xf32, #tpu.memory_space<vmem>>, vector<512x128xf32>,
    return
  }
  func.func @transform_0(%arg0: i32) -> (i32, i32) {
    %c0_i32 = arith.constant 0 : i32
    %c0_i32_0 = arith.constant 0 : i32
    return %arg0, %c0_i32 : i32, i32
  }
  func.func @transform_1(%arg0: i32) -> (i32, i32) {
    %c0_i32 = arith.constant 0 : i32
    %c0_i32_0 = arith.constant 0 : i32
    %c0_i32_1 = arith.constant 0 : i32
    return %c0_i32, %c0_i32_0 : i32, i32
  }
  func.func @transform_2(%arg0: i32) -> (i32, i32) {
    %c0_i32 = arith.constant 0 : i32
    %c0_i32_0 = arith.constant 0 : i32
    %c0_i32_1 = arith.constant 0 : i32
    return %c0_i32, %c0_i32_0 : i32, i32
  }
  func.func @transform_3(%arg0: i32) -> (i32, i32) {
    %c0_i32 = arith.constant 0 : i32
    %c0_i32_0 = arith.constant 0 : i32
    return %arg0, %c0_i32 : i32, i32
  }
}

module attributes {stable_mosaic.version = 11 : i64} {
  func.func @_mm_tanh_kernel(%arg0: i32, %arg1: memref<2048x36xbf16, #tpu.memory_space<vmem>>, %arg2: memref<36x128xbf16, #tpu.memory_space<vmem>>, %arg3: memref<2048x128xf32, #tpu.memory_space<vmem>>) attributes {dimension_semantics = [#tpu.dimension_semantics<parallel>], iteration_bounds = array<i64: 1>, scalar_prefetch = 0 : i64, scratch_operands = 0 : i64, tpu.core_type = #tpu.core_type<tc>, window_params = [{transform_indices = @transform_0, window_bounds = array<i64: 2048, 36>}, {pipeline_mode = #tpu.pipeline_mode<synchronous>, transform_indices = @transform_1, window_bounds = array<i64: 36, 128>}, {transform_indices = @transform_2, window_bounds = array<i64: 2048, 128>}]} {
    %c0 = arith.constant 0 : index
    %c0_0 = arith.constant 0 : index
    %0 = vector.load %arg1[%c0, %c0_0] : memref<2048x36xbf16, #tpu.memory_space<vmem>>, vector<2048x36xbf16>
    %c0_1 = arith.constant 0 : index
    %c0_2 = arith.constant 0 : index
    %1 = vector.load %arg2[%c0_1, %c0_2] : memref<36x128xbf16, #tpu.memory_space<vmem>>, vector<36x128xbf16>
    %cst = arith.constant dense<0.000000e+00> : vector<2048x128xf32>
    %2 = tpu.matmul %0, %1, %cst {dimension_numbers = #tpu.dot_dimension_numbers<[1], [0], [0], [1], [0, 0, 1, 1], [], []>} : vector<2048x36xbf16>, vector<36x128xbf16>, vector<2048x128xf32> -> vector<2048x128xf32>
    %3 = math.tanh %2 : vector<2048x128xf32>
    %c0_3 = arith.constant 0 : index
    %c0_4 = arith.constant 0 : index
    %4 = vector.load %arg3[%c0_3, %c0_4] : memref<2048x128xf32, #tpu.memory_space<vmem>>, vector<2048x128xf32>
    tpu.vector_store %arg3[%c0_3, %c0_4], %3 {strides = array<i32>} : memref<2048x128xf32, #tpu.memory_space<vmem>>, vector<2048x128xf32>,
    return
  }
  func.func @transform_0(%arg0: i32) -> (i32, i32) {
    %c0_i32 = arith.constant 0 : i32
    %c0_i32_0 = arith.constant 0 : i32
    return %arg0, %c0_i32 : i32, i32
  }
  func.func @transform_1(%arg0: i32) -> (i32, i32) {
    %c0_i32 = arith.constant 0 : i32
    %c0_i32_0 = arith.constant 0 : i32
    %c0_i32_1 = arith.constant 0 : i32
    return %c0_i32, %c0_i32_0 : i32, i32
  }
  func.func @transform_2(%arg0: i32) -> (i32, i32) {
    %c0_i32 = arith.constant 0 : i32
    %c0_i32_0 = arith.constant 0 : i32
    return %arg0, %c0_i32 : i32, i32
  }
}

</mosaic_0001>

<llo_original>
// kernel: netg_forward.9
$region0: #{netg_forward.9}
  #allocation0 [shape = 'u32[]', space=smem, size = 0x4, offset = 0x4, fixed_abs, tag = 'smem constant byte address 0x4 - core index']
  #allocation1 [shape = 'u32[144,128]{1,0:T(1,128)}', space=vmem, size = 0x12000, scoped, tag = 'internal scratch']
  %s0 = inlined_call_operand.vmem [shape: bf16[32,128], index: 0, kind: input, shape index: {}]
  %s1 = inlined_call_operand.vmem [shape: bf16[128,128], index: 1, kind: input, shape index: {}]
  %s2 = inlined_call_operand.vmem [shape: f32[32,128], index: 2, kind: output, shape index: {0}]
  %s3 = inlined_call_operand.vmem [shape: f32[1,128], index: 3, kind: output, shape index: {1}]
  %s4 = inlined_call_operand.vmem [shape: f32[1,128], index: 4, kind: output, shape index: {2}]
  %5 = xla_tuple %s2, %s3, %s4
  %s6 = sld [smem:[#allocation0]]
  $region38: #{netg_forward.9} parent=0
    _
  %s8 = ssub.s32 1, %s6
  %s9 = scalar_select 0, %s8, %s6
  // Predicated region
  $region2: #{netg_forward.9} parent=0 // pred_check
    _
  $region3: #{netg_forward.9} parent=0 // pred_check_branch
    %11 = sbr.rel (0) target = $region5
  $region4: #{netg_forward.9} parent=0 // pred_region
    _
  $region5: #{netg_forward.9} parent=0 // pred_fallthru
    _
  // Predicated region
  $region6: #{netg_forward.9} parent=0 // pred_check
    _
  $region7: #{netg_forward.9} parent=0 // pred_check_branch
    %13 = sbr.rel (0) target = $region9
  $region8: #{netg_forward.9} parent=0 // pred_region
    _
  $region9: #{netg_forward.9} parent=0 // pred_fallthru
    _
  %v15 = vld [vmem:[%s0] sm:$0xf]
  %v16 = vld [vmem:[%s0 + $0x4] sm:$0xf]
  %v17 = vld [vmem:[%s0 + $0x8] sm:$0xf]
  %v18 = vld [vmem:[%s0 + $0xc] sm:$0xf]
  %v19 = vld [vmem:[%s1] sm:$0xf]
  %v20 = vld [vmem:[%s1 + $0x4] sm:$0xf]
  %v21 = vld [vmem:[%s1 + $0x8] sm:$0xf]
  %v22 = vld [vmem:[%s1 + $0xc] sm:$0xf]
  %v23 = vld [vmem:[%s1 + $0x10] sm:$0xf]
  %v24 = vld [vmem:[%s1 + $0x14] sm:$0xf]
  %v25 = vld [vmem:[%s1 + $0x18] sm:$0xf]
  %v26 = vld [vmem:[%s1 + $0x1c] sm:$0xf]
  %v27 = vld [vmem:[%s1 + $0x20] sm:$0xf]
  %v28 = vld [vmem:[%s1 + $0x24] sm:$0xf]
  %v29 = vld [vmem:[%s1 + $0x28] sm:$0xf]
  %v30 = vld [vmem:[%s1 + $0x2c] sm:$0xf]
  %v31 = vld [vmem:[%s1 + $0x30] sm:$0xf]
  %v32 = vld [vmem:[%s1 + $0x34] sm:$0xf]
  %v33 = vld [vmem:[%s1 + $0x38] sm:$0xf]
  %v34 = vld [vmem:[%s1 + $0x3c] sm:$0xf]
  %v39 = vunpack.c.l.b16 %v15
  %v40 = vunpack.c.l.b16 %v16
  %v41 = vunpack.c.l.b16 %v17
  %v42 = vunpack.c.l.b16 %v18
  %v43 = vpack.c.b16 %v40, %v39
  %v44 = vpack.c.b16 %v42, %v41
  %v63 = vunpack.c.l.b16 %v19
  %v64 = vunpack.c.l.b16 %v20
  %v65 = vunpack.c.l.b16 %v21
  %v66 = vunpack.c.l.b16 %v22
  %v67 = vunpack.c.l.b16 %v23
  %v68 = vunpack.c.l.b16 %v24
  %v69 = vunpack.c.l.b16 %v25
  %v70 = vunpack.c.l.b16 %v26
  %v71 = vunpack.c.l.b16 %v27
  %v72 = vunpack.c.l.b16 %v28
  %v73 = vunpack.c.l.b16 %v29
  %v74 = vunpack.c.l.b16 %v30
  %v75 = vunpack.c.l.b16 %v31
  %v76 = vunpack.c.l.b16 %v32
  %v77 = vunpack.c.l.b16 %v33
  %v78 = vunpack.c.l.b16 %v34
  %v79 = vpack.c.b16 %v64, %v63
  %v80 = vpack.c.b16 %v66, %v65
  %v81 = vpack.c.b16 %v68, %v67
  %v82 = vpack.c.b16 %v70, %v69
  %v83 = vpack.c.b16 %v72, %v71
  %v84 = vpack.c.b16 %v74, %v73
  %v85 = vpack.c.b16 %v76, %v75
  %v86 = vpack.c.b16 %v78, %v77
  %95 = vmatprep.subr.bf16.mxu0 0
  %96 = vmatpush1.bf16.msra.mxu0 %v79
  %97 = vmatprep.subr.bf16.mxu0 0
  %98 = vmatpush1.bf16.msra.mxu0 %v80
  %99 = vmatprep.subr.bf16.mxu0 0
  %100 = vmatpush1.bf16.msra.mxu0 %v81
  %101 = vmatprep.subr.bf16.mxu0 0
  %102 = vmatpush1.bf16.msra.mxu0 %v82
  %103 = vmatprep.subr.bf16.mxu0 0
  %104 = vmatpush1.bf16.msra.mxu0 %v83
  %105 = vmatprep.subr.bf16.mxu0 0
  %106 = vmatpush1.bf16.msra.mxu0 %v84
  %107 = vmatprep.subr.bf16.mxu0 0
  %108 = vmatpush1.bf16.msra.mxu0 %v85
  %109 = vmatprep.subr.bf16.mxu0 0
  %110 = vmatpush1.bf16.msra.mxu0 %v86
  %111 = vmatprep.subr.bf16.mxu0 0
  %112 = vmatpush1.bf16.msra.mxu0 0
  %113 = vmatprep.subr.bf16.mxu0 0
  %114 = vmatpush1.bf16.msra.mxu0 0
  %115 = vmatprep.subr.bf16.mxu0 0
  %116 = vmatpush1.bf16.msra.mxu0 0
  %117 = vmatprep.subr.bf16.mxu0 0
  %118 = vmatpush1.bf16.msra.mxu0 0
  %119 = vmatprep.subr.bf16.mxu0 0
  %120 = vmatpush1.bf16.msra.mxu0 0
  %121 = vmatprep.subr.bf16.mxu0 0
  %122 = vmatpush1.bf16.msra.mxu0 0
  %123 = vmatprep.subr.bf16.mxu0 0
  %124 = vmatpush1.bf16.msra.mxu0 0
  %125 = vmatprep.subr.bf16.mxu0 0
  %126 = vmatpush1.bf16.msra.mxu0 0
  %127 = vmatprep.mubr.bf16.mxu0 0
  %128 = vmatmul.mubr.bf16.gmra.mrb[0].mxu0 %v43
  %v129 = vpop.f32.mrb[0].mxu0
  %v130 = vadd.f32 0.0, %v129
  %v131 = vpop.f32.mrb[0].mxu0
  %v132 = vpop.f32.mrb[0].mxu0
  %v133 = vadd.f32 0.0, %v132
  %v134 = vpop.f32.mrb[0].mxu0
  %135 = vmatprep.mubr.bf16.mxu0 0
  %136 = vmatmul.mubr.bf16.gmra.mrb[0].mxu0 %v44
  %v137 = vpop.f32.mrb[0].mxu0
  %v138 = vadd.f32 0.0, %v137
  %v139 = vpop.f32.mrb[0].mxu0
  %v140 = vpop.f32.mrb[0].mxu0
  %v141 = vadd.f32 0.0, %v140
  %v142 = vpop.f32.mrb[0].mxu0
  %143 = vdwg.mxu0
  %144 = vst [vmem:[%s2] sm:$0xff] %v130
  %145 = vst [vmem:[%s2 + $0x8] sm:$0xff] %v133
  %146 = vst [vmem:[%s2 + $0x10] sm:$0xff] %v138
  %147 = vst [vmem:[%s2 + $0x18] sm:$0xff] %v141
  %p148 = scmp.eq.s32.totalorder 0, 0
  // Predicated region
  $region10: #{netg_forward.9} parent=0 // pred_check
    %p149 = pneg %p148
  $region11: #{netg_forward.9} parent=0 // pred_check_branch
    %151 = sbr.rel (%p149) target = $region13
  $region12: #{netg_forward.9} parent=0 // pred_region
    %152 = vst [vmem:[%s3] sm:$0x1] 0.0
    %153 = vst [vmem:[%s4] sm:$0x1] 0.0
  $region13: #{netg_forward.9} parent=0 // pred_fallthru
    _
  %v154 = vld [vmem:[%s3] sm:$0x1]
  %v155 = vadd.f32 %v130, %v133
  %v156 = vadd.f32 %v155, %v138
  %v157 = vadd.f32 %v156, %v141
  %v158 = vrot.slane %v157, 4
  %v159 = vadd.f32 %v157, %v158
  %v160 = vrot.slane %v159, 2
  %v161 = vadd.f32 %v159, %v160
  %v162 = vrot.slane %v161, 1
  %v163 = vadd.f32 %v161, %v162
  %v164 = vadd.f32 %v154, %v163
  %165 = vst [vmem:[%s3] sm:$0x1] %v164
  %v166 = vld [vmem:[%s4] sm:$0x1]
  %v167 = vmul.f32 %v130, %v130
  %v168 = vmul.f32 %v133, %v133
  %v169 = vmul.f32 %v138, %v138
  %v170 = vmul.f32 %v141, %v141
  %v171 = vadd.f32 %v167, %v168
  %v172 = vadd.f32 %v171, %v169
  %v173 = vadd.f32 %v172, %v170
  %v174 = vrot.slane %v173, 4
  %v175 = vadd.f32 %v173, %v174
  %v176 = vrot.slane %v175, 2
  %v177 = vadd.f32 %v175, %v176
  %v178 = vrot.slane %v177, 1
  %v179 = vadd.f32 %v177, %v178
  %v180 = vadd.f32 %v166, %v179
  %181 = vst [vmem:[%s4] sm:$0x1] %v180
  // Predicated region
  $region14: #{netg_forward.9} parent=0 // pred_check
    _
  $region15: #{netg_forward.9} parent=0 // pred_check_branch
    %183 = sbr.rel (0) target = $region17
  $region16: #{netg_forward.9} parent=0 // pred_region
    _
  $region17: #{netg_forward.9} parent=0 // pred_fallthru
    _
  // Predicated region
  $region18: #{netg_forward.9} parent=0 // pred_check
    _
  $region19: #{netg_forward.9} parent=0 // pred_check_branch
    %185 = sbr.rel (0) target = $region21
  $region20: #{netg_forward.9} parent=0 // pred_region
    _
  $region21: #{netg_forward.9} parent=0 // pred_fallthru
    _
  // Predicated region
  $region22: #{netg_forward.9} parent=0 // pred_check
    _
  $region23: #{netg_forward.9} parent=0 // pred_check_branch
    %187 = sbr.rel (0) target = $region25
  $region24: #{netg_forward.9} parent=0 // pred_region
    _
  $region25: #{netg_forward.9} parent=0 // pred_fallthru
    _
  // Predicated region
  $region26: #{netg_forward.9} parent=0 // pred_check
    _
  $region27: #{netg_forward.9} parent=0 // pred_check_branch
    %189 = sbr.rel (0) target = $region29
  $region28: #{netg_forward.9} parent=0 // pred_region
    _
  $region29: #{netg_forward.9} parent=0 // pred_fallthru
    _
  // Predicated region
  $region30: #{netg_forward.9} parent=0 // pred_check
    _
  $region31: #{netg_forward.9} parent=0 // pred_check_branch
    %191 = sbr.rel (0) target = $region33
  $region32: #{netg_forward.9} parent=0 // pred_region
    _
  $region33: #{netg_forward.9} parent=0 // pred_fallthru
    _
  // Predicated region
  $region34: #{netg_forward.9} parent=0 // pred_check
    _
  $region35: #{netg_forward.9} parent=0 // pred_check_branch
    %193 = sbr.rel (0) target = $region37
  $region36: #{netg_forward.9} parent=0 // pred_region
    _
  $region37: #{netg_forward.9} parent=0 // pred_fallthru
    _

// kernel: netg_forward.10
$region0: #{netg_forward.10}
  #allocation0 [shape = 'u32[]', space=smem, size = 0x4, offset = 0x4, fixed_abs, tag = 'smem constant byte address 0x4 - core index']
  #allocation1 [shape = 'u32[144,128]{1,0:T(1,128)}', space=vmem, size = 0x12000, scoped, tag = 'internal scratch']
  %s0 = inlined_call_operand.vmem [shape: f32[32,128], index: 0, kind: input, shape index: {}]
  %s1 = inlined_call_operand.vmem [shape: f32[1,128], index: 1, kind: input, shape index: {}]
  %s2 = inlined_call_operand.vmem [shape: f32[1,128], index: 2, kind: input, shape index: {}]
  %s3 = inlined_call_operand.vmem [shape: f32[32,128], index: 3, kind: output, shape index: {}]
  %s4 = sld [smem:[#allocation0]]
  $region22: #{netg_forward.10} parent=0
    _
  %s6 = ssub.s32 1, %s4
  %s7 = scalar_select 0, %s6, %s4
  // Predicated region
  $region2: #{netg_forward.10} parent=0 // pred_check
    _
  $region3: #{netg_forward.10} parent=0 // pred_check_branch
    %9 = sbr.rel (0) target = $region5
  $region4: #{netg_forward.10} parent=0 // pred_region
    _
  $region5: #{netg_forward.10} parent=0 // pred_fallthru
    _
  // Predicated region
  $region6: #{netg_forward.10} parent=0 // pred_check
    _
  $region7: #{netg_forward.10} parent=0 // pred_check_branch
    %11 = sbr.rel (0) target = $region9
  $region8: #{netg_forward.10} parent=0 // pred_region
    _
  $region9: #{netg_forward.10} parent=0 // pred_fallthru
    _
  // Predicated region
  $region10: #{netg_forward.10} parent=0 // pred_check
    _
  $region11: #{netg_forward.10} parent=0 // pred_check_branch
    %13 = sbr.rel (0) target = $region13
  $region12: #{netg_forward.10} parent=0 // pred_region
    _
  $region13: #{netg_forward.10} parent=0 // pred_fallthru
    _
  %v14 = vld [vmem:[%s0] sm:$0xff]
  %v15 = vld [vmem:[%s0 + $0x8] sm:$0xff]
  %v16 = vld [vmem:[%s0 + $0x10] sm:$0xff]
  %v17 = vld [vmem:[%s0 + $0x18] sm:$0xff]
  %v18 = vld [vmem:[%s1] sm:$0x1]
  %v20 = vlaneseq
  %v21 = vshrl.u32 %v20, 7
  %v22 = vsub.s32 0, %v21
  %v23 = vrot.slane %v18, %v22
  %v25 = vmul.f32 %v14, %v23
  %v26 = vmul.f32 %v15, %v23
  %v27 = vmul.f32 %v16, %v23
  %v28 = vmul.f32 %v17, %v23
  %v29 = vld [vmem:[%s2] sm:$0x1]
  %v31 = vlaneseq
  %v32 = vshrl.u32 %v31, 7
  %v33 = vsub.s32 0, %v32
  %v34 = vrot.slane %v29, %v33
  %v36 = vadd.f32 %v25, %v34
  %v37 = vadd.f32 %v26, %v34
  %v38 = vadd.f32 %v27, %v34
  %v39 = vadd.f32 %v28, %v34
  %v40 = vmax.f32 %v36, 0.0
  %v41 = vmax.f32 %v37, 0.0
  %v42 = vmax.f32 %v38, 0.0
  %v43 = vmax.f32 %v39, 0.0
  %44 = vst [vmem:[%s3] sm:$0xff] %v40
  %45 = vst [vmem:[%s3 + $0x8] sm:$0xff] %v41
  %46 = vst [vmem:[%s3 + $0x10] sm:$0xff] %v42
  %47 = vst [vmem:[%s3 + $0x18] sm:$0xff] %v43
  // Predicated region
  $region14: #{netg_forward.10} parent=0 // pred_check
    _
  $region15: #{netg_forward.10} parent=0 // pred_check_branch
    %49 = sbr.rel (0) target = $region17
  $region16: #{netg_forward.10} parent=0 // pred_region
    _
  $region17: #{netg_forward.10} parent=0 // pred_fallthru
    _
  // Predicated region
  $region18: #{netg_forward.10} parent=0 // pred_check
    _
  $region19: #{netg_forward.10} parent=0 // pred_check_branch
    %51 = sbr.rel (0) target = $region21
  $region20: #{netg_forward.10} parent=0 // pred_region
    _
  $region21: #{netg_forward.10} parent=0 // pred_fallthru
    _

// kernel: squeeze.127
$region0: #{squeeze.127}
  %s0 = inlined_call_operand.vmem [shape: f32[64], index: 0, kind: input, shape index: {}]
  %s1 = inlined_call_operand.vmem [shape: f32[4,16], index: 1, kind: output, shape index: {}]
  $region1: #{squeeze.127} parent=0
    #allocation0 [shape = 'u8[4096]{0}', space=vmem, size = 0x1000, scoped, tag = 'scoped mem for output reshape']
    #allocation1 [shape = 'u8[4096]{0}', space=vmem, size = 0x1000, scoped, tag = 'scoped mem for input reshape']
    %s3 = sshllo.u32 0, 1
    %v4 = vld [vmem:[%s0] sm:%s3]
    %5 = vst [vmem:[#allocation1] sm:%s3] %v4
    %v6 = vld [vmem:[#allocation1] sm:$0x1]
    %vm7 = vcmask 130048
    %8 = vst.msk [vmem:[#allocation0] sm:$0x1] %vm7, %v6
    %v9 = vld [vmem:[#allocation1] sm:$0x1]
    %10 = vrot.lane.b32.xlu0 %v9, 112
    %v11 = vpop.permute.xlu0 %10
    %vm12 = vcmask 130048
    %s13 = scalar_lea.vmem [#allocation0], 1
    %14 = vst.msk [vmem:[%s13] sm:$0x1] %vm12, %v11
    %v15 = vld [vmem:[#allocation1] sm:$0x1]
    %16 = vrot.lane.b32.xlu0 %v15, 96
    %v17 = vpop.permute.xlu0 %16
    %vm18 = vcmask 130048
    %s19 = scalar_lea.vmem [#allocation0], 2
    %20 = vst.msk [vmem:[%s19] sm:$0x1] %vm18, %v17
    %v21 = vld [vmem:[#allocation1] sm:$0x1]
    %22 = vrot.lane.b32.xlu0 %v21, 80
    %v23 = vpop.permute.xlu0 %22
    %vm24 = vcmask 130048
    %s25 = scalar_lea.vmem [#allocation0], 3
    %26 = vst.msk [vmem:[%s25] sm:$0x1] %vm24, %v23
    %s28 = sshllo.u32 0, 4
    %v30 = vld [vmem:[#allocation0] sm:%s28]
    %s31 = sshllo.u32 0, 4
    %32 = vst [vmem:[%s1] sm:%s31] %v30

// kernel: tile.38
$region0: #{tile.38}
  #allocation0 [shape = 's32[1]{0}', space=sflag, size = 0x4, scoped, tag = 'scoped memory for tile.38']
  %s0 = inlined_call_operand.vmem [shape: f32[16], index: 0, kind: input, shape index: {}]
  %s1 = inlined_call_operand.vmem [shape: f32[4,16], index: 1, kind: output, shape index: {}]
  // Predicated region
  $region2: #{tile.38} parent=0 // pred_check
    _
  $region3: #{tile.38} parent=0 // pred_check_branch
    %3 = sbr.rel (0) target = $region5
  $region4: #{tile.38} parent=0 // pred_region
    _
  $region5: #{tile.38} parent=0 // pred_fallthru
    _
  %v4 = vld [vmem:[%s0] ss:$0 sm:$0xff]
  %5 = vst [vmem:[%s1] sm:$0xf] %v4

// kernel: tile.39
$region0: #{tile.39}
  %s0 = inlined_call_operand.vmem [shape: f32[4,16], index: 0, kind: input, shape index: {}]
  %s1 = inlined_call_operand.vmem [shape: f32[64], index: 1, kind: output, shape index: {}]
  $region1: #{tile.39} parent=0
    #allocation0 [shape = 'u8[4096]{0}', space=vmem, size = 0x1000, scoped, tag = 'scoped mem for output reshape']
    #allocation1 [shape = 'u8[4096]{0}', space=vmem, size = 0x1000, scoped, tag = 'scoped mem for input reshape']
    %s3 = sshllo.u32 0, 4
    %v4 = vld [vmem:[%s0] sm:%s3]
    %5 = vst [vmem:[#allocation1] sm:%s3] %v4
    %v6 = vld [vmem:[#allocation1] sm:$0x1]
    %vm7 = vcmask 130048
    %8 = vst.msk [vmem:[#allocation0] sm:$0x1] %vm7, %v6
    %s9 = scalar_lea.vmem [#allocation1], 3
    %v10 = vld [vmem:[%s9] sm:$0x1]
    %11 = vrot.lane.b32.xlu0 %v10, 48
    %v12 = vpop.permute.xlu0 %11
    %vm13 = vcmask 523648
    %14 = vst.msk [vmem:[#allocation0] sm:$0x1] %vm13, %v12
    %s15 = scalar_lea.vmem [#allocation1], 2
    %v16 = vld [vmem:[%s15] sm:$0x1]
    %17 = vrot.lane.b32.xlu0 %v16, 32
    %v18 = vpop.permute.xlu0 %17
    %vm19 = vcmask 392448
    %20 = vst.msk [vmem:[#allocation0] sm:$0x1] %vm19, %v18
    %s21 = scalar_lea.vmem [#allocation1], 1
    %v22 = vld [vmem:[%s21] sm:$0x1]
    %23 = vrot.lane.b32.xlu0 %v22, 16
    %v24 = vpop.permute.xlu0 %23
    %vm25 = vcmask 261248
    %26 = vst.msk [vmem:[#allocation0] sm:$0x1] %vm25, %v24
    %s28 = sshllo.u32 0, 1
    %v30 = vld [vmem:[#allocation0] sm:%s28]
    %s31 = sshllo.u32 0, 1
    %32 = vst [vmem:[%s1] sm:%s31] %v30

// kernel: netg_forward.11
$region0: #{netg_forward.11}
  #allocation0 [shape = 'u32[]', space=smem, size = 0x4, offset = 0x4, fixed_abs, tag = 'smem constant byte address 0x4 - core index']
  #allocation1 [shape = 'u32[144,128]{1,0:T(1,128)}', space=vmem, size = 0x12000, scoped, tag = 'internal scratch']
  %s0 = inlined_call_operand.vmem [shape: bf16[32,288], index: 0, kind: input, shape index: {}]
  %s1 = inlined_call_operand.vmem [shape: bf16[288,128], index: 1, kind: input, shape index: {}]
  %s2 = inlined_call_operand.vmem [shape: f32[32,128], index: 2, kind: output, shape index: {0}]
  %s3 = inlined_call_operand.vmem [shape: f32[1,128], index: 3, kind: output, shape index: {1}]
  %s4 = inlined_call_operand.vmem [shape: f32[1,128], index: 4, kind: output, shape index: {2}]
  %5 = xla_tuple %s2, %s3, %s4
  %s6 = sld [smem:[#allocation0]]
  $region38: #{netg_forward.11} parent=0
    _
  %s8 = ssub.s32 1, %s6
  %s9 = scalar_select 0, %s8, %s6
  // Predicated region
  $region2: #{netg_forward.11} parent=0 // pred_check
    _
  $region3: #{netg_forward.11} parent=0 // pred_check_branch
    %11 = sbr.rel (0) target = $region5
  $region4: #{netg_forward.11} parent=0 // pred_region
    _
  $region5: #{netg_forward.11} parent=0 // pred_fallthru
    _
  // Predicated region
  $region6: #{netg_forward.11} parent=0 // pred_check
    _
  $region7: #{netg_forward.11} parent=0 // pred_check_branch
    %13 = sbr.rel (0) target = $region9
  $region8: #{netg_forward.11} parent=0 // pred_region
    _
  $region9: #{netg_forward.11} parent=0 // pred_fallthru
    _
  %v15 = vld [vmem:[%s0] sm:$0xff]
  %v16 = vld [vmem:[%s0 + $0x8] sm:$0xf]
  %v17 = vld [vmem:[%s0 + $0xc] sm:$0xff]
  %v18 = vld [vmem:[%s0 + $0x14] sm:$0xf]
  %v19 = vld [vmem:[%s0 + $0x18] sm:$0xff]
  %v20 = vld [vmem:[%s0 + $0x20] sm:$0xf]
  %v21 = vld [vmem:[%s0 + $0x24] sm:$0xff]
  %v22 = vld [vmem:[%s0 + $0x2c] sm:$0xf]
  %v23 = vld [vmem:[%s1] sm:$0xf]
  %v24 = vld [vmem:[%s1 + $0x4] sm:$0xf]
  %v25 = vld [vmem:[%s1 + $0x8] sm:$0xf]
  %v26 = vld [vmem:[%s1 + $0xc] sm:$0xf]
  %v27 = vld [vmem:[%s1 + $0x10] sm:$0xf]
  %v28 = vld [vmem:[%s1 + $0x14] sm:$0xf]
  %v29 = vld [vmem:[%s1 + $0x18] sm:$0xf]
  %v30 = vld [vmem:[%s1 + $0x1c] sm:$0xf]
  %v31 = vld [vmem:[%s1 + $0x20] sm:$0xf]
  %v32 = vld [vmem:[%s1 + $0x24] sm:$0xf]
  %v33 = vld [vmem:[%s1 + $0x28] sm:$0xf]
  %v34 = vld [vmem:[%s1 + $0x2c] sm:$0xf]
  %v35 = vld [vmem:[%s1 + $0x30] sm:$0xf]
  %v36 = vld [vmem:[%s1 + $0x34] sm:$0xf]
  %v37 = vld [vmem:[%s1 + $0x38] sm:$0xf]
  %v38 = vld [vmem:[%s1 + $0x3c] sm:$0xf]
  %v39 = vld [vmem:[%s1 + $0x40] sm:$0xf]
  %v40 = vld [vmem:[%s1 + $0x44] sm:$0xf]
  %v41 = vld [vmem:[%s1 + $0x48] sm:$0xf]
  %v42 = vld [vmem:[%s1 + $0x4c] sm:$0xf]
  %v43 = vld [vmem:[%s1 + $0x50] sm:$0xf]
  %v44 = vld [vmem:[%s1 + $0x54] sm:$0xf]
  %v45 = vld [vmem:[%s1 + $0x58] sm:$0xf]
  %v46 = vld [vmem:[%s1 + $0x5c] sm:$0xf]
  %v47 = vld [vmem:[%s1 + $0x60] sm:$0xf]
  %v48 = vld [vmem:[%s1 + $0x64] sm:$0xf]
  %v49 = vld [vmem:[%s1 + $0x68] sm:$0xf]
  %v50 = vld [vmem:[%s1 + $0x6c] sm:$0xf]
  %v51 = vld [vmem:[%s1 + $0x70] sm:$0xf]
  %v52 = vld [vmem:[%s1 + $0x74] sm:$0xf]
  %v53 = vld [vmem:[%s1 + $0x78] sm:$0xf]
  %v54 = vld [vmem:[%s1 + $0x7c] sm:$0xf]
  %v55 = vld [vmem:[%s1 + $0x80] sm:$0xf]
  %v56 = vld [vmem:[%s1 + $0x84] sm:$0xf]
  %v57 = vld [vmem:[%s1 + $0x88] sm:$0xf]
  %v58 = vld [vmem:[%s1 + $0x8c] sm:$0xf]
  %v67 = vunpack.c.l.b16 %v15
  %v68 = vunpack.c.h.b16 %v15
  %v69 = vunpack.c.l.b16 %v16
  %v70 = vunpack.c.l.b16 %v17
  %v71 = vunpack.c.h.b16 %v17
  %v72 = vunpack.c.l.b16 %v18
  %v73 = vunpack.c.l.b16 %v19
  %v74 = vunpack.c.h.b16 %v19
  %v75 = vunpack.c.l.b16 %v20
  %v76 = vunpack.c.l.b16 %v21
  %v77 = vunpack.c.h.b16 %v21
  %v78 = vunpack.c.l.b16 %v22
  %v79 = vpack.c.b16 %v70, %v67
  %v80 = vpack.c.b16 %v71, %v68
  %v81 = vpack.c.b16 %v72, %v69
  %v82 = vpack.c.b16 %v76, %v73
  %v83 = vpack.c.b16 %v77, %v74
  %v84 = vpack.c.b16 %v78, %v75
  %v125 = vunpack.c.l.b16 %v23
  %v126 = vunpack.c.l.b16 %v24
  %v127 = vunpack.c.l.b16 %v25
  %v128 = vunpack.c.l.b16 %v26
  %v129 = vunpack.c.l.b16 %v27
  %v130 = vunpack.c.l.b16 %v28
  %v131 = vunpack.c.l.b16 %v29
  %v132 = vunpack.c.l.b16 %v30
  %v133 = vunpack.c.l.b16 %v31
  %v134 = vunpack.c.l.b16 %v32
  %v135 = vunpack.c.l.b16 %v33
  %v136 = vunpack.c.l.b16 %v34
  %v137 = vunpack.c.l.b16 %v35
  %v138 = vunpack.c.l.b16 %v36
  %v139 = vunpack.c.l.b16 %v37
  %v140 = vunpack.c.l.b16 %v38
  %v141 = vunpack.c.l.b16 %v39
  %v142 = vunpack.c.l.b16 %v40
  %v143 = vunpack.c.l.b16 %v41
  %v144 = vunpack.c.l.b16 %v42
  %v145 = vunpack.c.l.b16 %v43
  %v146 = vunpack.c.l.b16 %v44
  %v147 = vunpack.c.l.b16 %v45
  %v148 = vunpack.c.l.b16 %v46
  %v149 = vunpack.c.l.b16 %v47
  %v150 = vunpack.c.l.b16 %v48
  %v151 = vunpack.c.l.b16 %v49
  %v152 = vunpack.c.l.b16 %v50
  %v153 = vunpack.c.l.b16 %v51
  %v154 = vunpack.c.l.b16 %v52
  %v155 = vunpack.c.l.b16 %v53
  %v156 = vunpack.c.l.b16 %v54
  %v157 = vunpack.c.l.b16 %v55
  %v158 = vunpack.c.l.b16 %v56
  %v159 = vunpack.c.l.b16 %v57
  %v160 = vunpack.c.l.b16 %v58
  %v161 = vpack.c.b16 %v126, %v125
  %v162 = vpack.c.b16 %v128, %v127
  %v163 = vpack.c.b16 %v130, %v129
  %v164 = vpack.c.b16 %v132, %v131
  %v165 = vpack.c.b16 %v134, %v133
  %v166 = vpack.c.b16 %v136, %v135
  %v167 = vpack.c.b16 %v138, %v137
  %v168 = vpack.c.b16 %v140, %v139
  %v169 = vpack.c.b16 %v142, %v141
  %v170 = vpack.c.b16 %v144, %v143
  %v171 = vpack.c.b16 %v146, %v145
  %v172 = vpack.c.b16 %v148, %v147
  %v173 = vpack.c.b16 %v150, %v149
  %v174 = vpack.c.b16 %v152, %v151
  %v175 = vpack.c.b16 %v154, %v153
  %v176 = vpack.c.b16 %v156, %v155
  %v177 = vpack.c.b16 %v158, %v157
  %v178 = vpack.c.b16 %v160, %v159
  %vm197 = vcmask 261120
  %v199 = vsel %vm197, %v81, 0
  %v202 = vsel %vm197, %v84, 0
  %204 = vmatprep.subr.bf16.mxu0 0
  %205 = vmatpush1.bf16.msra.mxu0 %v161
  %206 = vmatprep.subr.bf16.mxu0 0
  %207 = vmatpush1.bf16.msra.mxu0 %v162
  %208 = vmatprep.subr.bf16.mxu0 0
  %209 = vmatpush1.bf16.msra.mxu0 %v163
  %210 = vmatprep.subr.bf16.mxu0 0
  %211 = vmatpush1.bf16.msra.mxu0 %v164
  %212 = vmatprep.subr.bf16.mxu0 0
  %213 = vmatpush1.bf16.msra.mxu0 %v165
  %214 = vmatprep.subr.bf16.mxu0 0
  %215 = vmatpush1.bf16.msra.mxu0 %v166
  %216 = vmatprep.subr.bf16.mxu0 0
  %217 = vmatpush1.bf16.msra.mxu0 %v167
  %218 = vmatprep.subr.bf16.mxu0 0
  %219 = vmatpush1.bf16.msra.mxu0 %v168
  %220 = vmatprep.subr.bf16.mxu0 0
  %221 = vmatpush1.bf16.msra.mxu0 %v169
  %222 = vmatprep.subr.bf16.mxu0 0
  %223 = vmatpush1.bf16.msra.mxu0 %v170
  %224 = vmatprep.subr.bf16.mxu0 0
  %225 = vmatpush1.bf16.msra.mxu0 %v171
  %226 = vmatprep.subr.bf16.mxu0 0
  %227 = vmatpush1.bf16.msra.mxu0 %v172
  %228 = vmatprep.subr.bf16.mxu0 0
  %229 = vmatpush1.bf16.msra.mxu0 %v173
  %230 = vmatprep.subr.bf16.mxu0 0
  %231 = vmatpush1.bf16.msra.mxu0 %v174
  %232 = vmatprep.subr.bf16.mxu0 0
  %233 = vmatpush1.bf16.msra.mxu0 %v175
  %234 = vmatprep.subr.bf16.mxu0 0
  %235 = vmatpush1.bf16.msra.mxu0 %v176
  %236 = vmatprep.mubr.bf16.mxu0 %v80
  %237 = vmatmul.mubr.bf16.gmra.mrb[0].mxu0 %v79
  %v238 = vpop.f32.mrb[0].mxu0
  %v239 = vadd.f32 0.0, %v238
  %v240 = vpop.f32.mrb[0].mxu0
  %v241 = vpop.f32.mrb[0].mxu0
  %v242 = vadd.f32 0.0, %v241
  %v243 = vpop.f32.mrb[0].mxu0
  %244 = vmatprep.mubr.bf16.mxu0 %v83
  %245 = vmatmul.mubr.bf16.gmra.mrb[0].mxu0 %v82
  %v246 = vpop.f32.mrb[0].mxu0
  %v247 = vadd.f32 0.0, %v246
  %v248 = vpop.f32.mrb[0].mxu0
  %v249 = vpop.f32.mrb[0].mxu0
  %v250 = vadd.f32 0.0, %v249
  %v251 = vpop.f32.mrb[0].mxu0
  %252 = vdwg.mxu0
  %253 = vmatprep.subr.bf16.mxu0 0
  %254 = vmatpush1.bf16.msra.mxu0 %v177
  %255 = vmatprep.subr.bf16.mxu0 0
  %256 = vmatpush1.bf16.msra.mxu0 %v178
  %257 = vmatprep.subr.bf16.mxu0 0
  %258 = vmatpush1.bf16.msra.mxu0 0
  %259 = vmatprep.subr.bf16.mxu0 0
  %260 = vmatpush1.bf16.msra.mxu0 0
  %261 = vmatprep.subr.bf16.mxu0 0
  %262 = vmatpush1.bf16.msra.mxu0 0
  %263 = vmatprep.subr.bf16.mxu0 0
  %264 = vmatpush1.bf16.msra.mxu0 0
  %265 = vmatprep.subr.bf16.mxu0 0
  %266 = vmatpush1.bf16.msra.mxu0 0
  %267 = vmatprep.subr.bf16.mxu0 0
  %268 = vmatpush1.bf16.msra.mxu0 0
  %269 = vmatprep.subr.bf16.mxu0 0
  %270 = vmatpush1.bf16.msra.mxu0 0
  %271 = vmatprep.subr.bf16.mxu0 0
  %272 = vmatpush1.bf16.msra.mxu0 0
  %273 = vmatprep.subr.bf16.mxu0 0
  %274 = vmatpush1.bf16.msra.mxu0 0
  %275 = vmatprep.subr.bf16.mxu0 0
  %276 = vmatpush1.bf16.msra.mxu0 0
  %277 = vmatprep.subr.bf16.mxu0 0
  %278 = vmatpush1.bf16.msra.mxu0 0
  %279 = vmatprep.subr.bf16.mxu0 0
  %280 = vmatpush1.bf16.msra.mxu0 0
  %281 = vmatprep.subr.bf16.mxu0 0
  %282 = vmatpush1.bf16.msra.mxu0 0
  %283 = vmatprep.subr.bf16.mxu0 0
  %284 = vmatpush1.bf16.msra.mxu0 0
  %285 = vmatprep.mubr.bf16.mxu0 0
  %286 = vmatmul.mubr.bf16.gmra.mrb[0].mxu0 %v199
  %v287 = vpop.f32.mrb[0].mxu0
  %v288 = vadd.f32 %v239, %v287
  %v289 = vpop.f32.mrb[0].mxu0
  %v290 = vpop.f32.mrb[0].mxu0
  %v291 = vadd.f32 %v242, %v290
  %v292 = vpop.f32.mrb[0].mxu0
  %293 = vmatprep.mubr.bf16.mxu0 0
  %294 = vmatmul.mubr.bf16.gmra.mrb[0].mxu0 %v202
  %v295 = vpop.f32.mrb[0].mxu0
  %v296 = vadd.f32 %v247, %v295
  %v297 = vpop.f32.mrb[0].mxu0
  %v298 = vpop.f32.mrb[0].mxu0
  %v299 = vadd.f32 %v250, %v298
  %v300 = vpop.f32.mrb[0].mxu0
  %301 = vdwg.mxu0
  %302 = vst [vmem:[%s2] sm:$0xff] %v288
  %303 = vst [vmem:[%s2 + $0x8] sm:$0xff] %v291
  %304 = vst [vmem:[%s2 + $0x10] sm:$0xff] %v296
  %305 = vst [vmem:[%s2 + $0x18] sm:$0xff] %v299
  %p306 = scmp.eq.s32.totalorder 0, 0
  // Predicated region
  $region10: #{netg_forward.11} parent=0 // pred_check
    %p307 = pneg %p306
  $region11: #{netg_forward.11} parent=0 // pred_check_branch
    %309 = sbr.rel (%p307) target = $region13
  $region12: #{netg_forward.11} parent=0 // pred_region
    %310 = vst [vmem:[%s3] sm:$0x1] 0.0
    %311 = vst [vmem:[%s4] sm:$0x1] 0.0
  $region13: #{netg_forward.11} parent=0 // pred_fallthru
    _
  %v312 = vld [vmem:[%s3] sm:$0x1]
  %v313 = vadd.f32 %v288, %v291
  %v314 = vadd.f32 %v313, %v296
  %v315 = vadd.f32 %v314, %v299
  %v316 = vrot.slane %v315, 4
  %v317 = vadd.f32 %v315, %v316
  %v318 = vrot.slane %v317, 2
  %v319 = vadd.f32 %v317, %v318
  %v320 = vrot.slane %v319, 1
  %v321 = vadd.f32 %v319, %v320
  %v322 = vadd.f32 %v312, %v321
  %323 = vst [vmem:[%s3] sm:$0x1] %v322
  %v324 = vld [vmem:[%s4] sm:$0x1]
  %v325 = vmul.f32 %v288, %v288
  %v326 = vmul.f32 %v291, %v291
  %v327 = vmul.f32 %v296, %v296
  %v328 = vmul.f32 %v299, %v299
  %v329 = vadd.f32 %v325, %v326
  %v330 = vadd.f32 %v329, %v327
  %v331 = vadd.f32 %v330, %v328
  %v332 = vrot.slane %v331, 4
  %v333 = vadd.f32 %v331, %v332
  %v334 = vrot.slane %v333, 2
  %v335 = vadd.f32 %v333, %v334
  %v336 = vrot.slane %v335, 1
  %v337 = vadd.f32 %v335, %v336
  %v338 = vadd.f32 %v324, %v337
  %339 = vst [vmem:[%s4] sm:$0x1] %v338
  // Predicated region
  $region14: #{netg_forward.11} parent=0 // pred_check
    _
  $region15: #{netg_forward.11} parent=0 // pred_check_branch
    %341 = sbr.rel (0) target = $region17
  $region16: #{netg_forward.11} parent=0 // pred_region
    _
  $region17: #{netg_forward.11} parent=0 // pred_fallthru
    _
  // Predicated region
  $region18: #{netg_forward.11} parent=0 // pred_check
    _
  $region19: #{netg_forward.11} parent=0 // pred_check_branch
    %343 = sbr.rel (0) target = $region21
  $region20: #{netg_forward.11} parent=0 // pred_region
    _
  $region21: #{netg_forward.11} parent=0 // pred_fallthru
    _
  // Predicated region
  $region22: #{netg_forward.11} parent=0 // pred_check
    _
  $region23: #{netg_forward.11} parent=0 // pred_check_branch
    %345 = sbr.rel (0) target = $region25
  $region24: #{netg_forward.11} parent=0 // pred_region
    _
  $region25: #{netg_forward.11} parent=0 // pred_fallthru
    _
  // Predicated region
  $region26: #{netg_forward.11} parent=0 // pred_check
    _
  $region27: #{netg_forward.11} parent=0 // pred_check_branch
    %347 = sbr.rel (0) target = $region29
  $region28: #{netg_forward.11} parent=0 // pred_region
    _
  $region29: #{netg_forward.11} parent=0 // pred_fallthru
    _
  // Predicated region
  $region30: #{netg_forward.11} parent=0 // pred_check
    _
  $region31: #{netg_forward.11} parent=0 // pred_check_branch
    %349 = sbr.rel (0) target = $region33
  $region32: #{netg_forward.11} parent=0 // pred_region
    _
  $region33: #{netg_forward.11} parent=0 // pred_fallthru
    _
  // Predicated region
  $region34: #{netg_forward.11} parent=0 // pred_check
    _
  $region35: #{netg_forward.11} parent=0 // pred_check_branch
    %351 = sbr.rel (0) target = $region37
  $region36: #{netg_forward.11} parent=0 // pred_region
    _
  $region37: #{netg_forward.11} parent=0 // pred_fallthru
    _

// kernel: squeeze.145
$region0: #{squeeze.145}
  %s0 = inlined_call_operand.vmem [shape: f32[32], index: 0, kind: input, shape index: {}]
  %s1 = inlined_call_operand.vmem [shape: f32[4,8], index: 1, kind: output, shape index: {}]
  $region1: #{squeeze.145} parent=0
    #allocation0 [shape = 'u8[4096]{0}', space=vmem, size = 0x1000, scoped, tag = 'scoped mem for output reshape']
    #allocation1 [shape = 'u8[4096]{0}', space=vmem, size = 0x1000, scoped, tag = 'scoped mem for input reshape']
    %s3 = sshllo.u32 0, 1
    %v4 = vld [vmem:[%s0] sm:%s3]
    %5 = vst [vmem:[#allocation1] sm:%s3] %v4
    %v6 = vld [vmem:[#allocation1] sm:$0x1]
    %vm7 = vcmask 64512
    %8 = vst.msk [vmem:[#allocation0] sm:$0x1] %vm7, %v6
    %v9 = vld [vmem:[#allocation1] sm:$0x1]
    %10 = vrot.lane.b32.xlu0 %v9, 120
    %v11 = vpop.permute.xlu0 %10
    %vm12 = vcmask 64512
    %s13 = scalar_lea.vmem [#allocation0], 1
    %14 = vst.msk [vmem:[%s13] sm:$0x1] %vm12, %v11
    %v15 = vld [vmem:[#allocation1] sm:$0x1]
    %16 = vrot.lane.b32.xlu0 %v15, 112
    %v17 = vpop.permute.xlu0 %16
    %vm18 = vcmask 64512
    %s19 = scalar_lea.vmem [#allocation0], 2
    %20 = vst.msk [vmem:[%s19] sm:$0x1] %vm18, %v17
    %v21 = vld [vmem:[#allocation1] sm:$0x1]
    %22 = vrot.lane.b32.xlu0 %v21, 104
    %v23 = vpop.permute.xlu0 %22
    %vm24 = vcmask 64512
    %s25 = scalar_lea.vmem [#allocation0], 3
    %26 = vst.msk [vmem:[%s25] sm:$0x1] %vm24, %v23
    %s28 = sshllo.u32 0, 4
    %v30 = vld [vmem:[#allocation0] sm:%s28]
    %s31 = sshllo.u32 0, 4
    %32 = vst [vmem:[%s1] sm:%s31] %v30

// kernel: tile.48
$region0: #{tile.48}
  #allocation0 [shape = 's32[1]{0}', space=sflag, size = 0x4, scoped, tag = 'scoped memory for tile.48']
  %s0 = inlined_call_operand.vmem [shape: f32[8], index: 0, kind: input, shape index: {}]
  %s1 = inlined_call_operand.vmem [shape: f32[4,8], index: 1, kind: output, shape index: {}]
  // Predicated region
  $region2: #{tile.48} parent=0 // pred_check
    _
  $region3: #{tile.48} parent=0 // pred_check_branch
    %3 = sbr.rel (0) target = $region5
  $region4: #{tile.48} parent=0 // pred_region
    _
  $region5: #{tile.48} parent=0 // pred_fallthru
    _
  %v4 = vld [vmem:[%s0] ss:$0 sm:$0xff]
  %5 = vst [vmem:[%s1] sm:$0xf] %v4

// kernel: tile.49
$region0: #{tile.49}
  %s0 = inlined_call_operand.vmem [shape: f32[4,8], index: 0, kind: input, shape index: {}]
  %s1 = inlined_call_operand.vmem [shape: f32[32], index: 1, kind: output, shape index: {}]
  $region1: #{tile.49} parent=0
    #allocation0 [shape = 'u8[4096]{0}', space=vmem, size = 0x1000, scoped, tag = 'scoped mem for output reshape']
    #allocation1 [shape = 'u8[4096]{0}', space=vmem, size = 0x1000, scoped, tag = 'scoped mem for input reshape']
    %s3 = sshllo.u32 0, 4
    %v4 = vld [vmem:[%s0] sm:%s3]
    %5 = vst [vmem:[#allocation1] sm:%s3] %v4
    %v6 = vld [vmem:[#allocation1] sm:$0x1]
    %vm7 = vcmask 64512
    %8 = vst.msk [vmem:[#allocation0] sm:$0x1] %vm7, %v6
    %s9 = scalar_lea.vmem [#allocation1], 3
    %v10 = vld [vmem:[%s9] sm:$0x1]
    %11 = vrot.lane.b32.xlu0 %v10, 24
    %v12 = vpop.permute.xlu0 %11
    %vm13 = vcmask 261312
    %14 = vst.msk [vmem:[#allocation0] sm:$0x1] %vm13, %v12
    %s15 = scalar_lea.vmem [#allocation1], 2
    %v16 = vld [vmem:[%s15] sm:$0x1]
    %17 = vrot.lane.b32.xlu0 %v16, 16
    %v18 = vpop.permute.xlu0 %17
    %vm19 = vcmask 195712
    %20 = vst.msk [vmem:[#allocation0] sm:$0x1] %vm19, %v18
    %s21 = scalar_lea.vmem [#allocation1], 1
    %v22 = vld [vmem:[%s21] sm:$0x1]
    %23 = vrot.lane.b32.xlu0 %v22, 8
    %v24 = vpop.permute.xlu0 %23
    %vm25 = vcmask 130112
    %26 = vst.msk [vmem:[#allocation0] sm:$0x1] %vm25, %v24
    %s28 = sshllo.u32 0, 1
    %v30 = vld [vmem:[#allocation0] sm:%s28]
    %s31 = sshllo.u32 0, 1
    %32 = vst [vmem:[%s1] sm:%s31] %v30

// kernel: netg_forward.13
$region0: #{netg_forward.13}
  #allocation0 [shape = 'u32[]', space=smem, size = 0x4, offset = 0x4, fixed_abs, tag = 'smem constant byte address 0x4 - core index']
  #allocation1 [shape = 'u32[144,128]{1,0:T(1,128)}', space=vmem, size = 0x12000, scoped, tag = 'internal scratch']
  %s0 = inlined_call_operand.vmem [shape: bf16[128,144], index: 0, kind: input, shape index: {}]
  %s1 = inlined_call_operand.vmem [shape: bf16[144,128], index: 1, kind: input, shape index: {}]
  %s2 = inlined_call_operand.vmem [shape: f32[128,128], index: 2, kind: output, shape index: {0}]
  %s3 = inlined_call_operand.vmem [shape: f32[1,128], index: 3, kind: output, shape index: {1}]
  %s4 = inlined_call_operand.vmem [shape: f32[1,128], index: 4, kind: output, shape index: {2}]
  %5 = xla_tuple %s2, %s3, %s4
  %s6 = sld [smem:[#allocation0]]
  $region38: #{netg_forward.13} parent=0
    _
  %s8 = ssub.s32 1, %s6
  %s9 = scalar_select 0, %s8, %s6
  // Predicated region
  $region2: #{netg_forward.13} parent=0 // pred_check
    _
  $region3: #{netg_forward.13} parent=0 // pred_check_branch
    %11 = sbr.rel (0) target = $region5
  $region4: #{netg_forward.13} parent=0 // pred_region
    _
  $region5: #{netg_forward.13} parent=0 // pred_fallthru
    _
  // Predicated region
  $region6: #{netg_forward.13} parent=0 // pred_check
    _
  $region7: #{netg_forward.13} parent=0 // pred_check_branch
    %13 = sbr.rel (0) target = $region9
  $region8: #{netg_forward.13} parent=0 // pred_region
    _
  $region9: #{netg_forward.13} parent=0 // pred_fallthru
    _
  %v15 = vld [vmem:[%s0] sm:$0xff]
  %v16 = vld [vmem:[%s0 + $0x8] sm:$0xff]
  %v17 = vld [vmem:[%s0 + $0x10] sm:$0xff]
  %v18 = vld [vmem:[%s0 + $0x18] sm:$0xff]
  %v19 = vld [vmem:[%s0 + $0x20] sm:$0xff]
  %v20 = vld [vmem:[%s0 + $0x28] sm:$0xff]
  %v21 = vld [vmem:[%s0 + $0x30] sm:$0xff]
  %v22 = vld [vmem:[%s0 + $0x38] sm:$0xff]
  %v23 = vld [vmem:[%s0 + $0x40] sm:$0xff]
  %v24 = vld [vmem:[%s0 + $0x48] sm:$0xff]
  %v25 = vld [vmem:[%s0 + $0x50] sm:$0xff]
  %v26 = vld [vmem:[%s0 + $0x58] sm:$0xff]
  %v27 = vld [vmem:[%s0 + $0x60] sm:$0xff]
  %v28 = vld [vmem:[%s0 + $0x68] sm:$0xff]
  %v29 = vld [vmem:[%s0 + $0x70] sm:$0xff]
  %v30 = vld [vmem:[%s0 + $0x78] sm:$0xff]
  %v31 = vld [vmem:[%s1] sm:$0xf]
  %v32 = vld [vmem:[%s1 + $0x4] sm:$0xf]
  %v33 = vld [vmem:[%s1 + $0x8] sm:$0xf]
  %v34 = vld [vmem:[%s1 + $0xc] sm:$0xf]
  %v35 = vld [vmem:[%s1 + $0x10] sm:$0xf]
  %v36 = vld [vmem:[%s1 + $0x14] sm:$0xf]
  %v37 = vld [vmem:[%s1 + $0x18] sm:$0xf]
  %v38 = vld [vmem:[%s1 + $0x1c] sm:$0xf]
  %v39 = vld [vmem:[%s1 + $0x20] sm:$0xf]
  %v40 = vld [vmem:[%s1 + $0x24] sm:$0xf]
  %v41 = vld [vmem:[%s1 + $0x28] sm:$0xf]
  %v42 = vld [vmem:[%s1 + $0x2c] sm:$0xf]
  %v43 = vld [vmem:[%s1 + $0x30] sm:$0xf]
  %v44 = vld [vmem:[%s1 + $0x34] sm:$0xf]
  %v45 = vld [vmem:[%s1 + $0x38] sm:$0xf]
  %v46 = vld [vmem:[%s1 + $0x3c] sm:$0xf]
  %v47 = vld [vmem:[%s1 + $0x40] sm:$0xf]
  %v48 = vld [vmem:[%s1 + $0x44] sm:$0xf]
  %v65 = vunpack.c.l.b16 %v15
  %v66 = vunpack.c.h.b16 %v15
  %v67 = vunpack.c.l.b16 %v16
  %v68 = vunpack.c.h.b16 %v16
  %v69 = vunpack.c.l.b16 %v17
  %v70 = vunpack.c.h.b16 %v17
  %v71 = vunpack.c.l.b16 %v18
  %v72 = vunpack.c.h.b16 %v18
  %v73 = vunpack.c.l.b16 %v19
  %v74 = vunpack.c.h.b16 %v19
  %v75 = vunpack.c.l.b16 %v20
  %v76 = vunpack.c.h.b16 %v20
  %v77 = vunpack.c.l.b16 %v21
  %v78 = vunpack.c.h.b16 %v21
  %v79 = vunpack.c.l.b16 %v22
  %v80 = vunpack.c.h.b16 %v22
  %v81 = vunpack.c.l.b16 %v23
  %v82 = vunpack.c.h.b16 %v23
  %v83 = vunpack.c.l.b16 %v24
  %v84 = vunpack.c.h.b16 %v24
  %v85 = vunpack.c.l.b16 %v25
  %v86 = vunpack.c.h.b16 %v25
  %v87 = vunpack.c.l.b16 %v26
  %v88 = vunpack.c.h.b16 %v26
  %v89 = vunpack.c.l.b16 %v27
  %v90 = vunpack.c.h.b16 %v27
  %v91 = vunpack.c.l.b16 %v28
  %v92 = vunpack.c.h.b16 %v28
  %v93 = vunpack.c.l.b16 %v29
  %v94 = vunpack.c.h.b16 %v29
  %v95 = vunpack.c.l.b16 %v30
  %v96 = vunpack.c.h.b16 %v30
  %v97 = vpack.c.b16 %v67, %v65
  %v98 = vpack.c.b16 %v68, %v66
  %v99 = vpack.c.b16 %v71, %v69
  %v100 = vpack.c.b16 %v72, %v70
  %v101 = vpack.c.b16 %v75, %v73
  %v102 = vpack.c.b16 %v76, %v74
  %v103 = vpack.c.b16 %v79, %v77
  %v104 = vpack.c.b16 %v80, %v78
  %v105 = vpack.c.b16 %v83, %v81
  %v106 = vpack.c.b16 %v84, %v82
  %v107 = vpack.c.b16 %v87, %v85
  %v108 = vpack.c.b16 %v88, %v86
  %v109 = vpack.c.b16 %v91, %v89
  %v110 = vpack.c.b16 %v92, %v90
  %v111 = vpack.c.b16 %v95, %v93
  %v112 = vpack.c.b16 %v96, %v94
  %v139 = vunpack.c.l.b16 %v31
  %v140 = vunpack.c.l.b16 %v32
  %v141 = vunpack.c.l.b16 %v33
  %v142 = vunpack.c.l.b16 %v34
  %v143 = vunpack.c.l.b16 %v35
  %v144 = vunpack.c.l.b16 %v36
  %v145 = vunpack.c.l.b16 %v37
  %v146 = vunpack.c.l.b16 %v38
  %v147 = vunpack.c.l.b16 %v39
  %v148 = vunpack.c.l.b16 %v40
  %v149 = vunpack.c.l.b16 %v41
  %v150 = vunpack.c.l.b16 %v42
  %v151 = vunpack.c.l.b16 %v43
  %v152 = vunpack.c.l.b16 %v44
  %v153 = vunpack.c.l.b16 %v45
  %v154 = vunpack.c.l.b16 %v46
  %v155 = vunpack.c.l.b16 %v47
  %v156 = vunpack.c.l.b16 %v48
  %v157 = vpack.c.b16 %v140, %v139
  %v158 = vpack.c.b16 %v142, %v141
  %v159 = vpack.c.b16 %v144, %v143
  %v160 = vpack.c.b16 %v146, %v145
  %v161 = vpack.c.b16 %v148, %v147
  %v162 = vpack.c.b16 %v150, %v149
  %v163 = vpack.c.b16 %v152, %v151
  %v164 = vpack.c.b16 %v154, %v153
  %v165 = vpack.c.b16 %v156, %v155
  %vm175 = vcmask 130048
  %v177 = vsel %vm175, %v98, 0
  %v180 = vsel %vm175, %v100, 0
  %v183 = vsel %vm175, %v102, 0
  %v186 = vsel %vm175, %v104, 0
  %v189 = vsel %vm175, %v106, 0
  %v192 = vsel %vm175, %v108, 0
  %v195 = vsel %vm175, %v110, 0
  %v198 = vsel %vm175, %v112, 0
  %200 = vmatprep.subr.bf16.mxu0 0
  %201 = vmatpush1.bf16.msra.mxu0 %v157
  %202 = vmatprep.subr.bf16.mxu0 0
  %203 = vmatpush1.bf16.msra.mxu0 %v158
  %204 = vmatprep.subr.bf16.mxu0 0
  %205 = vmatpush1.bf16.msra.mxu0 %v159
  %206 = vmatprep.subr.bf16.mxu0 0
  %207 = vmatpush1.bf16.msra.mxu0 %v160
  %208 = vmatprep.subr.bf16.mxu0 0
  %209 = vmatpush1.bf16.msra.mxu0 %v161
  %210 = vmatprep.subr.bf16.mxu0 0
  %211 = vmatpush1.bf16.msra.mxu0 %v162
  %212 = vmatprep.subr.bf16.mxu0 0
  %213 = vmatpush1.bf16.msra.mxu0 %v163
  %214 = vmatprep.subr.bf16.mxu0 0
  %215 = vmatpush1.bf16.msra.mxu0 %v164
  %216 = vmatprep.subr.bf16.mxu0 0
  %217 = vmatpush1.bf16.msra.mxu0 %v165
  %218 = vmatprep.subr.bf16.mxu0 0
  %219 = vmatpush1.bf16.msra.mxu0 0
  %220 = vmatprep.subr.bf16.mxu0 0
  %221 = vmatpush1.bf16.msra.mxu0 0
  %222 = vmatprep.subr.bf16.mxu0 0
  %223 = vmatpush1.bf16.msra.mxu0 0
  %224 = vmatprep.subr.bf16.mxu0 0
  %225 = vmatpush1.bf16.msra.mxu0 0
  %226 = vmatprep.subr.bf16.mxu0 0
  %227 = vmatpush1.bf16.msra.mxu0 0
  %228 = vmatprep.subr.bf16.mxu0 0
  %229 = vmatpush1.bf16.msra.mxu0 0
  %230 = vmatprep.subr.bf16.mxu0 0
  %231 = vmatpush1.bf16.msra.mxu0 0
  %232 = vmatprep.mubr.bf16.mxu0 %v177
  %233 = vmatmul.mubr.bf16.gmra.mrb[0].mxu0 %v97
  %v234 = vpop.f32.mrb[0].mxu0
  %v235 = vadd.f32 0.0, %v234
  %v236 = vpop.f32.mrb[0].mxu0
  %v237 = vpop.f32.mrb[0].mxu0
  %v238 = vadd.f32 0.0, %v237
  %v239 = vpop.f32.mrb[0].mxu0
  %240 = vmatprep.mubr.bf16.mxu0 %v180
  %241 = vmatmul.mubr.bf16.gmra.mrb[0].mxu0 %v99
  %v242 = vpop.f32.mrb[0].mxu0
  %v243 = vadd.f32 0.0, %v242
  %v244 = vpop.f32.mrb[0].mxu0
  %v245 = vpop.f32.mrb[0].mxu0
  %v246 = vadd.f32 0.0, %v245
  %v247 = vpop.f32.mrb[0].mxu0
  %248 = vmatprep.mubr.bf16.mxu0 %v183
  %249 = vmatmul.mubr.bf16.gmra.mrb[0].mxu0 %v101
  %v250 = vpop.f32.mrb[0].mxu0
  %v251 = vadd.f32 0.0, %v250
  %v252 = vpop.f32.mrb[0].mxu0
  %v253 = vpop.f32.mrb[0].mxu0
  %v254 = vadd.f32 0.0, %v253
  %v255 = vpop.f32.mrb[0].mxu0
  %256 = vmatprep.mubr.bf16.mxu0 %v186
  %257 = vmatmul.mubr.bf16.gmra.mrb[0].mxu0 %v103
  %v258 = vpop.f32.mrb[0].mxu0
  %v259 = vadd.f32 0.0, %v258
  %v260 = vpop.f32.mrb[0].mxu0
  %v261 = vpop.f32.mrb[0].mxu0
  %v262 = vadd.f32 0.0, %v261
  %v263 = vpop.f32.mrb[0].mxu0
  %264 = vmatprep.mubr.bf16.mxu0 %v189
  %265 = vmatmul.mubr.bf16.gmra.mrb[0].mxu0 %v105
  %v266 = vpop.f32.mrb[0].mxu0
  %v267 = vadd.f32 0.0, %v266
  %v268 = vpop.f32.mrb[0].mxu0
  %v269 = vpop.f32.mrb[0].mxu0
  %v270 = vadd.f32 0.0, %v269
  %v271 = vpop.f32.mrb[0].mxu0
  %272 = vmatprep.mubr.bf16.mxu0 %v192
  %273 = vmatmul.mubr.bf16.gmra.mrb[0].mxu0 %v107
  %v274 = vpop.f32.mrb[0].mxu0
  %v275 = vadd.f32 0.0, %v274
  %v276 = vpop.f32.mrb[0].mxu0
  %v277 = vpop.f32.mrb[0].mxu0
  %v278 = vadd.f32 0.0, %v277
  %v279 = vpop.f32.mrb[0].mxu0
  %280 = vmatprep.mubr.bf16.mxu0 %v195
  %281 = vmatmul.mubr.bf16.gmra.mrb[0].mxu0 %v109
  %v282 = vpop.f32.mrb[0].mxu0
  %v283 = vadd.f32 0.0, %v282
  %v284 = vpop.f32.mrb[0].mxu0
  %v285 = vpop.f32.mrb[0].mxu0
  %v286 = vadd.f32 0.0, %v285
  %v287 = vpop.f32.mrb[0].mxu0
  %288 = vmatprep.mubr.bf16.mxu0 %v198
  %289 = vmatmul.mubr.bf16.gmra.mrb[0].mxu0 %v111
  %v290 = vpop.f32.mrb[0].mxu0
  %v291 = vadd.f32 0.0, %v290
  %v292 = vpop.f32.mrb[0].mxu0
  %v293 = vpop.f32.mrb[0].mxu0
  %v294 = vadd.f32 0.0, %v293
  %v295 = vpop.f32.mrb[0].mxu0
  %296 = vdwg.mxu0
  %297 = vst [vmem:[%s2] sm:$0xff] %v235
  %298 = vst [vmem:[%s2 + $0x8] sm:$0xff] %v238
  %299 = vst [vmem:[%s2 + $0x10] sm:$0xff] %v243
  %300 = vst [vmem:[%s2 + $0x18] sm:$0xff] %v246
  %301 = vst [vmem:[%s2 + $0x20] sm:$0xff] %v251
  %302 = vst [vmem:[%s2 + $0x28] sm:$0xff] %v254
  %303 = vst [vmem:[%s2 + $0x30] sm:$0xff] %v259
  %304 = vst [vmem:[%s2 + $0x38] sm:$0xff] %v262
  %305 = vst [vmem:[%s2 + $0x40] sm:$0xff] %v267
  %306 = vst [vmem:[%s2 + $0x48] sm:$0xff] %v270
  %307 = vst [vmem:[%s2 + $0x50] sm:$0xff] %v275
  %308 = vst [vmem:[%s2 + $0x58] sm:$0xff] %v278
  %309 = vst [vmem:[%s2 + $0x60] sm:$0xff] %v283
  %310 = vst [vmem:[%s2 + $0x68] sm:$0xff] %v286
  %311 = vst [vmem:[%s2 + $0x70] sm:$0xff] %v291
  %312 = vst [vmem:[%s2 + $0x78] sm:$0xff] %v294
  %p313 = scmp.eq.s32.totalorder 0, 0
  // Predicated region
  $region10: #{netg_forward.13} parent=0 // pred_check
    %p314 = pneg %p313
  $region11: #{netg_forward.13} parent=0 // pred_check_branch
    %316 = sbr.rel (%p314) target = $region13
  $region12: #{netg_forward.13} parent=0 // pred_region
    %317 = vst [vmem:[%s3] sm:$0x1] 0.0
    %318 = vst [vmem:[%s4] sm:$0x1] 0.0
  $region13: #{netg_forward.13} parent=0 // pred_fallthru
    _
  %v319 = vld [vmem:[%s3] sm:$0x1]
  %v320 = vadd.f32 %v235, %v238
  %v321 = vadd.f32 %v320, %v243
  %v322 = vadd.f32 %v321, %v246
  %v323 = vadd.f32 %v322, %v251
  %v324 = vadd.f32 %v323, %v254
  %v325 = vadd.f32 %v324, %v259
  %v326 = vadd.f32 %v325, %v262
  %v327 = vadd.f32 %v326, %v267
  %v328 = vadd.f32 %v327, %v270
  %v329 = vadd.f32 %v328, %v275
  %v330 = vadd.f32 %v329, %v278
  %v331 = vadd.f32 %v330, %v283
  %v332 = vadd.f32 %v331, %v286
  %v333 = vadd.f32 %v332, %v291
  %v334 = vadd.f32 %v333, %v294
  %v335 = vrot.slane %v334, 4
  %v336 = vadd.f32 %v334, %v335
  %v337 = vrot.slane %v336, 2
  %v338 = vadd.f32 %v336, %v337
  %v339 = vrot.slane %v338, 1
  %v340 = vadd.f32 %v338, %v339
  %v341 = vadd.f32 %v319, %v340
  %342 = vst [vmem:[%s3] sm:$0x1] %v341
  %v343 = vld [vmem:[%s4] sm:$0x1]
  %v344 = vmul.f32 %v235, %v235
  %v345 = vmul.f32 %v238, %v238
  %v346 = vmul.f32 %v243, %v243
  %v347 = vmul.f32 %v246, %v246
  %v348 = vmul.f32 %v251, %v251
  %v349 = vmul.f32 %v254, %v254
  %v350 = vmul.f32 %v259, %v259
  %v351 = vmul.f32 %v262, %v262
  %v352 = vmul.f32 %v267, %v267
  %v353 = vmul.f32 %v270, %v270
  %v354 = vmul.f32 %v275, %v275
  %v355 = vmul.f32 %v278, %v278
  %v356 = vmul.f32 %v283, %v283
  %v357 = vmul.f32 %v286, %v286
  %v358 = vmul.f32 %v291, %v291
  %v359 = vmul.f32 %v294, %v294
  %v360 = vadd.f32 %v344, %v345
  %v361 = vadd.f32 %v360, %v346
  %v362 = vadd.f32 %v361, %v347
  %v363 = vadd.f32 %v362, %v348
  %v364 = vadd.f32 %v363, %v349
  %v365 = vadd.f32 %v364, %v350
  %v366 = vadd.f32 %v365, %v351
  %v367 = vadd.f32 %v366, %v352
  %v368 = vadd.f32 %v367, %v353
  %v369 = vadd.f32 %v368, %v354
  %v370 = vadd.f32 %v369, %v355
  %v371 = vadd.f32 %v370, %v356
  %v372 = vadd.f32 %v371, %v357
  %v373 = vadd.f32 %v372, %v358
  %v374 = vadd.f32 %v373, %v359
  %v375 = vrot.slane %v374, 4
  %v376 = vadd.f32 %v374, %v375
  %v377 = vrot.slane %v376, 2
  %v378 = vadd.f32 %v376, %v377
  %v379 = vrot.slane %v378, 1
  %v380 = vadd.f32 %v378, %v379
  %v381 = vadd.f32 %v343, %v380
  %382 = vst [vmem:[%s4] sm:$0x1] %v381
  // Predicated region
  $region14: #{netg_forward.13} parent=0 // pred_check
    _
  $region15: #{netg_forward.13} parent=0 // pred_check_branch
    %384 = sbr.rel (0) target = $region17
  $region16: #{netg_forward.13} parent=0 // pred_region
    _
  $region17: #{netg_forward.13} parent=0 // pred_fallthru
    _
  // Predicated region
  $region18: #{netg_forward.13} parent=0 // pred_check
    _
  $region19: #{netg_forward.13} parent=0 // pred_check_branch
    %386 = sbr.rel (0) target = $region21
  $region20: #{netg_forward.13} parent=0 // pred_region
    _
  $region21: #{netg_forward.13} parent=0 // pred_fallthru
    _
  // Predicated region
  $region22: #{netg_forward.13} parent=0 // pred_check
    _
  $region23: #{netg_forward.13} parent=0 // pred_check_branch
    %388 = sbr.rel (0) target = $region25
  $region24: #{netg_forward.13} parent=0 // pred_region
    _
  $region25: #{netg_forward.13} parent=0 // pred_fallthru
    _
  // Predicated region
  $region26: #{netg_forward.13} parent=0 // pred_check
    _
  $region27: #{netg_forward.13} parent=0 // pred_check_branch
    %390 = sbr.rel (0) target = $region29
  $region28: #{netg_forward.13} parent=0 // pred_region
    _
  $region29: #{netg_forward.13} parent=0 // pred_fallthru
    _
  // Predicated region
  $region30: #{netg_forward.13} parent=0 // pred_check
    _
  $region31: #{netg_forward.13} parent=0 // pred_check_branch
    %392 = sbr.rel (0) target = $region33
  $region32: #{netg_forward.13} parent=0 // pred_region
    _
  $region33: #{netg_forward.13} parent=0 // pred_fallthru
    _
  // Predicated region
  $region34: #{netg_forward.13} parent=0 // pred_check
    _
  $region35: #{netg_forward.13} parent=0 // pred_check_branch
    %394 = sbr.rel (0) target = $region37
  $region36: #{netg_forward.13} parent=0 // pred_region
    _
  $region37: #{netg_forward.13} parent=0 // pred_fallthru
    _

// kernel: netg_forward.14
$region0: #{netg_forward.14}
  #allocation0 [shape = 'u32[]', space=smem, size = 0x4, offset = 0x4, fixed_abs, tag = 'smem constant byte address 0x4 - core index']
  #allocation1 [shape = 'u32[144,128]{1,0:T(1,128)}', space=vmem, size = 0x12000, scoped, tag = 'internal scratch']
  %s0 = inlined_call_operand.vmem [shape: f32[128,128], index: 0, kind: input, shape index: {}]
  %s1 = inlined_call_operand.vmem [shape: f32[1,128], index: 1, kind: input, shape index: {}]
  %s2 = inlined_call_operand.vmem [shape: f32[1,128], index: 2, kind: input, shape index: {}]
  %s3 = inlined_call_operand.vmem [shape: f32[128,128], index: 3, kind: output, shape index: {}]
  %s4 = sld [smem:[#allocation0]]
  $region22: #{netg_forward.14} parent=0
    _
  %s6 = ssub.s32 1, %s4
  %s7 = scalar_select 0, %s6, %s4
  // Predicated region
  $region2: #{netg_forward.14} parent=0 // pred_check
    _
  $region3: #{netg_forward.14} parent=0 // pred_check_branch
    %9 = sbr.rel (0) target = $region5
  $region4: #{netg_forward.14} parent=0 // pred_region
    _
  $region5: #{netg_forward.14} parent=0 // pred_fallthru
    _
  // Predicated region
  $region6: #{netg_forward.14} parent=0 // pred_check
    _
  $region7: #{netg_forward.14} parent=0 // pred_check_branch
    %11 = sbr.rel (0) target = $region9
  $region8: #{netg_forward.14} parent=0 // pred_region
    _
  $region9: #{netg_forward.14} parent=0 // pred_fallthru
    _
  // Predicated region
  $region10: #{netg_forward.14} parent=0 // pred_check
    _
  $region11: #{netg_forward.14} parent=0 // pred_check_branch
    %13 = sbr.rel (0) target = $region13
  $region12: #{netg_forward.14} parent=0 // pred_region
    _
  $region13: #{netg_forward.14} parent=0 // pred_fallthru
    _
  %v14 = vld [vmem:[%s0] sm:$0xff]
  %v15 = vld [vmem:[%s0 + $0x8] sm:$0xff]
  %v16 = vld [vmem:[%s0 + $0x10] sm:$0xff]
  %v17 = vld [vmem:[%s0 + $0x18] sm:$0xff]
  %v18 = vld [vmem:[%s0 + $0x20] sm:$0xff]
  %v19 = vld [vmem:[%s0 + $0x28] sm:$0xff]
  %v20 = vld [vmem:[%s0 + $0x30] sm:$0xff]
  %v21 = vld [vmem:[%s0 + $0x38] sm:$0xff]
  %v22 = vld [vmem:[%s0 + $0x40] sm:$0xff]
  %v23 = vld [vmem:[%s0 + $0x48] sm:$0xff]
  %v24 = vld [vmem:[%s0 + $0x50] sm:$0xff]
  %v25 = vld [vmem:[%s0 + $0x58] sm:$0xff]
  %v26 = vld [vmem:[%s0 + $0x60] sm:$0xff]
  %v27 = vld [vmem:[%s0 + $0x68] sm:$0xff]
  %v28 = vld [vmem:[%s0 + $0x70] sm:$0xff]
  %v29 = vld [vmem:[%s0 + $0x78] sm:$0xff]
  %v30 = vld [vmem:[%s1] sm:$0x1]
  %v32 = vlaneseq
  %v33 = vshrl.u32 %v32, 7
  %v34 = vsub.s32 0, %v33
  %v35 = vrot.slane %v30, %v34
  %v37 = vmul.f32 %v14, %v35
  %v38 = vmul.f32 %v15, %v35
  %v39 = vmul.f32 %v16, %v35
  %v40 = vmul.f32 %v17, %v35
  %v41 = vmul.f32 %v18, %v35
  %v42 = vmul.f32 %v19, %v35
  %v43 = vmul.f32 %v20, %v35
  %v44 = vmul.f32 %v21, %v35
  %v45 = vmul.f32 %v22, %v35
  %v46 = vmul.f32 %v23, %v35
  %v47 = vmul.f32 %v24, %v35
  %v48 = vmul.f32 %v25, %v35
  %v49 = vmul.f32 %v26, %v35
  %v50 = vmul.f32 %v27, %v35
  %v51 = vmul.f32 %v28, %v35
  %v52 = vmul.f32 %v29, %v35
  %v53 = vld [vmem:[%s2] sm:$0x1]
  %v55 = vlaneseq
  %v56 = vshrl.u32 %v55, 7
  %v57 = vsub.s32 0, %v56
  %v58 = vrot.slane %v53, %v57
  %v60 = vadd.f32 %v37, %v58
  %v61 = vadd.f32 %v38, %v58
  %v62 = vadd.f32 %v39, %v58
  %v63 = vadd.f32 %v40, %v58
  %v64 = vadd.f32 %v41, %v58
  %v65 = vadd.f32 %v42, %v58
  %v66 = vadd.f32 %v43, %v58
  %v67 = vadd.f32 %v44, %v58
  %v68 = vadd.f32 %v45, %v58
  %v69 = vadd.f32 %v46, %v58
  %v70 = vadd.f32 %v47, %v58
  %v71 = vadd.f32 %v48, %v58
  %v72 = vadd.f32 %v49, %v58
  %v73 = vadd.f32 %v50, %v58
  %v74 = vadd.f32 %v51, %v58
  %v75 = vadd.f32 %v52, %v58
  %v76 = vmax.f32 %v60, 0.0
  %v77 = vmax.f32 %v61, 0.0
  %v78 = vmax.f32 %v62, 0.0
  %v79 = vmax.f32 %v63, 0.0
  %v80 = vmax.f32 %v64, 0.0
  %v81 = vmax.f32 %v65, 0.0
  %v82 = vmax.f32 %v66, 0.0
  %v83 = vmax.f32 %v67, 0.0
  %v84 = vmax.f32 %v68, 0.0
  %v85 = vmax.f32 %v69, 0.0
  %v86 = vmax.f32 %v70, 0.0
  %v87 = vmax.f32 %v71, 0.0
  %v88 = vmax.f32 %v72, 0.0
  %v89 = vmax.f32 %v73, 0.0
  %v90 = vmax.f32 %v74, 0.0
  %v91 = vmax.f32 %v75, 0.0
  %92 = vst [vmem:[%s3] sm:$0xff] %v76
  %93 = vst [vmem:[%s3 + $0x8] sm:$0xff] %v77
  %94 = vst [vmem:[%s3 + $0x10] sm:$0xff] %v78
  %95 = vst [vmem:[%s3 + $0x18] sm:$0xff] %v79
  %96 = vst [vmem:[%s3 + $0x20] sm:$0xff] %v80
  %97 = vst [vmem:[%s3 + $0x28] sm:$0xff] %v81
  %98 = vst [vmem:[%s3 + $0x30] sm:$0xff] %v82
  %99 = vst [vmem:[%s3 + $0x38] sm:$0xff] %v83
  %100 = vst [vmem:[%s3 + $0x40] sm:$0xff] %v84
  %101 = vst [vmem:[%s3 + $0x48] sm:$0xff] %v85
  %102 = vst [vmem:[%s3 + $0x50] sm:$0xff] %v86
  %103 = vst [vmem:[%s3 + $0x58] sm:$0xff] %v87
  %104 = vst [vmem:[%s3 + $0x60] sm:$0xff] %v88
  %105 = vst [vmem:[%s3 + $0x68] sm:$0xff] %v89
  %106 = vst [vmem:[%s3 + $0x70] sm:$0xff] %v90
  %107 = vst [vmem:[%s3 + $0x78] sm:$0xff] %v91
  // Predicated region
  $region14: #{netg_forward.14} parent=0 // pred_check
    _
  $region15: #{netg_forward.14} parent=0 // pred_check_branch
    %109 = sbr.rel (0) target = $region17
  $region16: #{netg_forward.14} parent=0 // pred_region
    _
  $region17: #{netg_forward.14} parent=0 // pred_fallthru
    _
  // Predicated region
  $region18: #{netg_forward.14} parent=0 // pred_check
    _
  $region19: #{netg_forward.14} parent=0 // pred_check_branch
    %111 = sbr.rel (0) target = $region21
  $region20: #{netg_forward.14} parent=0 // pred_region
    _
  $region21: #{netg_forward.14} parent=0 // pred_fallthru
    _

// kernel: squeeze.163
$region0: #{squeeze.163}
  %s0 = inlined_call_operand.vmem [shape: f32[16], index: 0, kind: input, shape index: {}]
  %s1 = inlined_call_operand.vmem [shape: f32[4,4], index: 1, kind: output, shape index: {}]
  $region1: #{squeeze.163} parent=0
    #allocation0 [shape = 'u8[4096]{0}', space=vmem, size = 0x1000, scoped, tag = 'scoped mem for output reshape']
    #allocation1 [shape = 'u8[4096]{0}', space=vmem, size = 0x1000, scoped, tag = 'scoped mem for input reshape']
    %s3 = sshllo.u32 0, 1
    %v4 = vld [vmem:[%s0] sm:%s3]
    %5 = vst [vmem:[#allocation1] sm:%s3] %v4
    %v6 = vld [vmem:[#allocation1] sm:$0x1]
    %vm7 = vcmask 31744
    %8 = vst.msk [vmem:[#allocation0] sm:$0x1] %vm7, %v6
    %v9 = vld [vmem:[#allocation1] sm:$0x1]
    %10 = vrot.lane.b32.xlu0 %v9, 124
    %v11 = vpop.permute.xlu0 %10
    %vm12 = vcmask 31744
    %s13 = scalar_lea.vmem [#allocation0], 1
    %14 = vst.msk [vmem:[%s13] sm:$0x1] %vm12, %v11
    %v15 = vld [vmem:[#allocation1] sm:$0x1]
    %16 = vrot.lane.b32.xlu0 %v15, 120
    %v17 = vpop.permute.xlu0 %16
    %vm18 = vcmask 31744
    %s19 = scalar_lea.vmem [#allocation0], 2
    %20 = vst.msk [vmem:[%s19] sm:$0x1] %vm18, %v17
    %v21 = vld [vmem:[#allocation1] sm:$0x1]
    %22 = vrot.lane.b32.xlu0 %v21, 116
    %v23 = vpop.permute.xlu0 %22
    %vm24 = vcmask 31744
    %s25 = scalar_lea.vmem [#allocation0], 3
    %26 = vst.msk [vmem:[%s25] sm:$0x1] %vm24, %v23
    %s28 = sshllo.u32 0, 4
    %v30 = vld [vmem:[#allocation0] sm:%s28]
    %s31 = sshllo.u32 0, 4
    %32 = vst [vmem:[%s1] sm:%s31] %v30

// kernel: tile.58
$region0: #{tile.58}
  #allocation0 [shape = 's32[1]{0}', space=sflag, size = 0x4, scoped, tag = 'scoped memory for tile.58']
  %s0 = inlined_call_operand.vmem [shape: f32[4], index: 0, kind: input, shape index: {}]
  %s1 = inlined_call_operand.vmem [shape: f32[4,4], index: 1, kind: output, shape index: {}]
  // Predicated region
  $region2: #{tile.58} parent=0 // pred_check
    _
  $region3: #{tile.58} parent=0 // pred_check_branch
    %3 = sbr.rel (0) target = $region5
  $region4: #{tile.58} parent=0 // pred_region
    _
  $region5: #{tile.58} parent=0 // pred_fallthru
    _
  %v4 = vld [vmem:[%s0] ss:$0 sm:$0xff]
  %5 = vst [vmem:[%s1] sm:$0xf] %v4

// kernel: tile.59
$region0: #{tile.59}
  %s0 = inlined_call_operand.vmem [shape: f32[4,4], index: 0, kind: input, shape index: {}]
  %s1 = inlined_call_operand.vmem [shape: f32[16], index: 1, kind: output, shape index: {}]
  $region1: #{tile.59} parent=0
    #allocation0 [shape = 'u8[4096]{0}', space=vmem, size = 0x1000, scoped, tag = 'scoped mem for output reshape']
    #allocation1 [shape = 'u8[4096]{0}', space=vmem, size = 0x1000, scoped, tag = 'scoped mem for input reshape']
    %s3 = sshllo.u32 0, 4
    %v4 = vld [vmem:[%s0] sm:%s3]
    %5 = vst [vmem:[#allocation1] sm:%s3] %v4
    %v6 = vld [vmem:[#allocation1] sm:$0x1]
    %vm7 = vcmask 31744
    %8 = vst.msk [vmem:[#allocation0] sm:$0x1] %vm7, %v6
    %s9 = scalar_lea.vmem [#allocation1], 3
    %v10 = vld [vmem:[%s9] sm:$0x1]
    %11 = vrot.lane.b32.xlu0 %v10, 12
    %v12 = vpop.permute.xlu0 %11
    %vm13 = vcmask 130144
    %14 = vst.msk [vmem:[#allocation0] sm:$0x1] %vm13, %v12
    %s15 = scalar_lea.vmem [#allocation1], 2
    %v16 = vld [vmem:[%s15] sm:$0x1]
    %17 = vrot.lane.b32.xlu0 %v16, 8
    %v18 = vpop.permute.xlu0 %17
    %vm19 = vcmask 97344
    %20 = vst.msk [vmem:[#allocation0] sm:$0x1] %vm19, %v18
    %s21 = scalar_lea.vmem [#allocation1], 1
    %v22 = vld [vmem:[%s21] sm:$0x1]
    %23 = vrot.lane.b32.xlu0 %v22, 4
    %v24 = vpop.permute.xlu0 %23
    %vm25 = vcmask 64544
    %26 = vst.msk [vmem:[#allocation0] sm:$0x1] %vm25, %v24
    %s28 = sshllo.u32 0, 1
    %v30 = vld [vmem:[#allocation0] sm:%s28]
    %s31 = sshllo.u32 0, 1
    %32 = vst [vmem:[%s1] sm:%s31] %v30

// kernel: netg_forward.16
$region0: #{netg_forward.16}
  #allocation0 [shape = 'u32[]', space=smem, size = 0x4, offset = 0x4, fixed_abs, tag = 'smem constant byte address 0x4 - core index']
  #allocation1 [shape = 'u32[144,128]{1,0:T(1,128)}', space=vmem, size = 0x12000, scoped, tag = 'internal scratch']
  %s0 = inlined_call_operand.vmem [shape: f32[512,128], index: 0, kind: input, shape index: {}]
  %s1 = inlined_call_operand.vmem [shape: f32[1,128], index: 1, kind: input, shape index: {}]
  %s2 = inlined_call_operand.vmem [shape: f32[1,128], index: 2, kind: input, shape index: {}]
  %s3 = inlined_call_operand.vmem [shape: f32[512,128], index: 3, kind: output, shape index: {}]
  %s4 = sld [smem:[#allocation0]]
  $region22: #{netg_forward.16} parent=0
    _
  %s6 = ssub.s32 1, %s4
  %s7 = scalar_select 0, %s6, %s4
  // Predicated region
  $region2: #{netg_forward.16} parent=0 // pred_check
    _
  $region3: #{netg_forward.16} parent=0 // pred_check_branch
    %9 = sbr.rel (0) target = $region5
  $region4: #{netg_forward.16} parent=0 // pred_region
    _
  $region5: #{netg_forward.16} parent=0 // pred_fallthru
    _
  // Predicated region
  $region6: #{netg_forward.16} parent=0 // pred_check
    _
  $region7: #{netg_forward.16} parent=0 // pred_check_branch
    %11 = sbr.rel (0) target = $region9
  $region8: #{netg_forward.16} parent=0 // pred_region
    _
  $region9: #{netg_forward.16} parent=0 // pred_fallthru
    _
  // Predicated region
  $region10: #{netg_forward.16} parent=0 // pred_check
    _
  $region11: #{netg_forward.16} parent=0 // pred_check_branch
    %13 = sbr.rel (0) target = $region13
  $region12: #{netg_forward.16} parent=0 // pred_region
    _
  $region13: #{netg_forward.16} parent=0 // pred_fallthru
    _
  %v14 = vld [vmem:[%s0] sm:$0xff]
  %v15 = vld [vmem:[%s0 + $0x8] sm:$0xff]
  %v16 = vld [vmem:[%s0 + $0x10] sm:$0xff]
  %v17 = vld [vmem:[%s0 + $0x18] sm:$0xff]
  %v18 = vld [vmem:[%s0 + $0x20] sm:$0xff]
  %v19 = vld [vmem:[%s0 + $0x28] sm:$0xff]
  %v20 = vld [vmem:[%s0 + $0x30] sm:$0xff]
  %v21 = vld [vmem:[%s0 + $0x38] sm:$0xff]
  %v22 = vld [vmem:[%s0 + $0x40] sm:$0xff]
  %v23 = vld [vmem:[%s0 + $0x48] sm:$0xff]
  %v24 = vld [vmem:[%s0 + $0x50] sm:$0xff]
  %v25 = vld [vmem:[%s0 + $0x58] sm:$0xff]
  %v26 = vld [vmem:[%s0 + $0x60] sm:$0xff]
  %v27 = vld [vmem:[%s0 + $0x68] sm:$0xff]
  %v28 = vld [vmem:[%s0 + $0x70] sm:$0xff]
  %v29 = vld [vmem:[%s0 + $0x78] sm:$0xff]
  %v30 = vld [vmem:[%s0 + $0x80] sm:$0xff]
  %v31 = vld [vmem:[%s0 + $0x88] sm:$0xff]
  %v32 = vld [vmem:[%s0 + $0x90] sm:$0xff]
  %v33 = vld [vmem:[%s0 + $0x98] sm:$0xff]
  %v34 = vld [vmem:[%s0 + $0xa0] sm:$0xff]
  %v35 = vld [vmem:[%s0 + $0xa8] sm:$0xff]
  %v36 = vld [vmem:[%s0 + $0xb0] sm:$0xff]
  %v37 = vld [vmem:[%s0 + $0xb8] sm:$0xff]
  %v38 = vld [vmem:[%s0 + $0xc0] sm:$0xff]
  %v39 = vld [vmem:[%s0 + $0xc8] sm:$0xff]
  %v40 = vld [vmem:[%s0 + $0xd0] sm:$0xff]
  %v41 = vld [vmem:[%s0 + $0xd8] sm:$0xff]
  %v42 = vld [vmem:[%s0 + $0xe0] sm:$0xff]
  %v43 = vld [vmem:[%s0 + $0xe8] sm:$0xff]
  %v44 = vld [vmem:[%s0 + $0xf0] sm:$0xff]
  %v45 = vld [vmem:[%s0 + $0xf8] sm:$0xff]
  %v46 = vld [vmem:[%s0 + $0x100] sm:$0xff]
  %v47 = vld [vmem:[%s0 + $0x108] sm:$0xff]
  %v48 = vld [vmem:[%s0 + $0x110] sm:$0xff]
  %v49 = vld [vmem:[%s0 + $0x118] sm:$0xff]
  %v50 = vld [vmem:[%s0 + $0x120] sm:$0xff]
  %v51 = vld [vmem:[%s0 + $0x128] sm:$0xff]
  %v52 = vld [vmem:[%s0 + $0x130] sm:$0xff]
  %v53 = vld [vmem:[%s0 + $0x138] sm:$0xff]
  %v54 = vld [vmem:[%s0 + $0x140] sm:$0xff]
  %v55 = vld [vmem:[%s0 + $0x148] sm:$0xff]
  %v56 = vld [vmem:[%s0 + $0x150] sm:$0xff]
  %v57 = vld [vmem:[%s0 + $0x158] sm:$0xff]
  %v58 = vld [vmem:[%s0 + $0x160] sm:$0xff]
  %v59 = vld [vmem:[%s0 + $0x168] sm:$0xff]
  %v60 = vld [vmem:[%s0 + $0x170] sm:$0xff]
  %v61 = vld [vmem:[%s0 + $0x178] sm:$0xff]
  %v62 = vld [vmem:[%s0 + $0x180] sm:$0xff]
  %v63 = vld [vmem:[%s0 + $0x188] sm:$0xff]
  %v64 = vld [vmem:[%s0 + $0x190] sm:$0xff]
  %v65 = vld [vmem:[%s0 + $0x198] sm:$0xff]
  %v66 = vld [vmem:[%s0 + $0x1a0] sm:$0xff]
  %v67 = vld [vmem:[%s0 + $0x1a8] sm:$0xff]
  %v68 = vld [vmem:[%s0 + $0x1b0] sm:$0xff]
  %v69 = vld [vmem:[%s0 + $0x1b8] sm:$0xff]
  %v70 = vld [vmem:[%s0 + $0x1c0] sm:$0xff]
  %v71 = vld [vmem:[%s0 + $0x1c8] sm:$0xff]
  %v72 = vld [vmem:[%s0 + $0x1d0] sm:$0xff]
  %v73 = vld [vmem:[%s0 + $0x1d8] sm:$0xff]
  %v74 = vld [vmem:[%s0 + $0x1e0] sm:$0xff]
  %v75 = vld [vmem:[%s0 + $0x1e8] sm:$0xff]
  %v76 = vld [vmem:[%s0 + $0x1f0] sm:$0xff]
  %v77 = vld [vmem:[%s0 + $0x1f8] sm:$0xff]
  %v78 = vld [vmem:[%s1] sm:$0x1]
  %v80 = vlaneseq
  %v81 = vshrl.u32 %v80, 7
  %v82 = vsub.s32 0, %v81
  %v83 = vrot.slane %v78, %v82
  %v85 = vmul.f32 %v14, %v83
  %v86 = vmul.f32 %v15, %v83
  %v87 = vmul.f32 %v16, %v83
  %v88 = vmul.f32 %v17, %v83
  %v89 = vmul.f32 %v18, %v83
  %v90 = vmul.f32 %v19, %v83
  %v91 = vmul.f32 %v20, %v83
  %v92 = vmul.f32 %v21, %v83
  %v93 = vmul.f32 %v22, %v83
  %v94 = vmul.f32 %v23, %v83
  %v95 = vmul.f32 %v24, %v83
  %v96 = vmul.f32 %v25, %v83
  %v97 = vmul.f32 %v26, %v83
  %v98 = vmul.f32 %v27, %v83
  %v99 = vmul.f32 %v28, %v83
  %v100 = vmul.f32 %v29, %v83
  %v101 = vmul.f32 %v30, %v83
  %v102 = vmul.f32 %v31, %v83
  %v103 = vmul.f32 %v32, %v83
  %v104 = vmul.f32 %v33, %v83
  %v105 = vmul.f32 %v34, %v83
  %v106 = vmul.f32 %v35, %v83
  %v107 = vmul.f32 %v36, %v83
  %v108 = vmul.f32 %v37, %v83
  %v109 = vmul.f32 %v38, %v83
  %v110 = vmul.f32 %v39, %v83
  %v111 = vmul.f32 %v40, %v83
  %v112 = vmul.f32 %v41, %v83
  %v113 = vmul.f32 %v42, %v83
  %v114 = vmul.f32 %v43, %v83
  %v115 = vmul.f32 %v44, %v83
  %v116 = vmul.f32 %v45, %v83
  %v117 = vmul.f32 %v46, %v83
  %v118 = vmul.f32 %v47, %v83
  %v119 = vmul.f32 %v48, %v83
  %v120 = vmul.f32 %v49, %v83
  %v121 = vmul.f32 %v50, %v83
  %v122 = vmul.f32 %v51, %v83
  %v123 = vmul.f32 %v52, %v83
  %v124 = vmul.f32 %v53, %v83
  %v125 = vmul.f32 %v54, %v83
  %v126 = vmul.f32 %v55, %v83
  %v127 = vmul.f32 %v56, %v83
  %v128 = vmul.f32 %v57, %v83
  %v129 = vmul.f32 %v58, %v83
  %v130 = vmul.f32 %v59, %v83
  %v131 = vmul.f32 %v60, %v83
  %v132 = vmul.f32 %v61, %v83
  %v133 = vmul.f32 %v62, %v83
  %v134 = vmul.f32 %v63, %v83
  %v135 = vmul.f32 %v64, %v83
  %v136 = vmul.f32 %v65, %v83
  %v137 = vmul.f32 %v66, %v83
  %v138 = vmul.f32 %v67, %v83
  %v139 = vmul.f32 %v68, %v83
  %v140 = vmul.f32 %v69, %v83
  %v141 = vmul.f32 %v70, %v83
  %v142 = vmul.f32 %v71, %v83
  %v143 = vmul.f32 %v72, %v83
  %v144 = vmul.f32 %v73, %v83
  %v145 = vmul.f32 %v74, %v83
  %v146 = vmul.f32 %v75, %v83
  %v147 = vmul.f32 %v76, %v83
  %v148 = vmul.f32 %v77, %v83
  %v149 = vld [vmem:[%s2] sm:$0x1]
  %v151 = vlaneseq
  %v152 = vshrl.u32 %v151, 7
  %v153 = vsub.s32 0, %v152
  %v154 = vrot.slane %v149, %v153
  %v156 = vadd.f32 %v85, %v154
  %v157 = vadd.f32 %v86, %v154
  %v158 = vadd.f32 %v87, %v154
  %v159 = vadd.f32 %v88, %v154
  %v160 = vadd.f32 %v89, %v154
  %v161 = vadd.f32 %v90, %v154
  %v162 = vadd.f32 %v91, %v154
  %v163 = vadd.f32 %v92, %v154
  %v164 = vadd.f32 %v93, %v154
  %v165 = vadd.f32 %v94, %v154
  %v166 = vadd.f32 %v95, %v154
  %v167 = vadd.f32 %v96, %v154
  %v168 = vadd.f32 %v97, %v154
  %v169 = vadd.f32 %v98, %v154
  %v170 = vadd.f32 %v99, %v154
  %v171 = vadd.f32 %v100, %v154
  %v172 = vadd.f32 %v101, %v154
  %v173 = vadd.f32 %v102, %v154
  %v174 = vadd.f32 %v103, %v154
  %v175 = vadd.f32 %v104, %v154
  %v176 = vadd.f32 %v105, %v154
  %v177 = vadd.f32 %v106, %v154
  %v178 = vadd.f32 %v107, %v154
  %v179 = vadd.f32 %v108, %v154
  %v180 = vadd.f32 %v109, %v154
  %v181 = vadd.f32 %v110, %v154
  %v182 = vadd.f32 %v111, %v154
  %v183 = vadd.f32 %v112, %v154
  %v184 = vadd.f32 %v113, %v154
  %v185 = vadd.f32 %v114, %v154
  %v186 = vadd.f32 %v115, %v154
  %v187 = vadd.f32 %v116, %v154
  %v188 = vadd.f32 %v117, %v154
  %v189 = vadd.f32 %v118, %v154
  %v190 = vadd.f32 %v119, %v154
  %v191 = vadd.f32 %v120, %v154
  %v192 = vadd.f32 %v121, %v154
  %v193 = vadd.f32 %v122, %v154
  %v194 = vadd.f32 %v123, %v154
  %v195 = vadd.f32 %v124, %v154
  %v196 = vadd.f32 %v125, %v154
  %v197 = vadd.f32 %v126, %v154
  %v198 = vadd.f32 %v127, %v154
  %v199 = vadd.f32 %v128, %v154
  %v200 = vadd.f32 %v129, %v154
  %v201 = vadd.f32 %v130, %v154
  %v202 = vadd.f32 %v131, %v154
  %v203 = vadd.f32 %v132, %v154
  %v204 = vadd.f32 %v133, %v154
  %v205 = vadd.f32 %v134, %v154
  %v206 = vadd.f32 %v135, %v154
  %v207 = vadd.f32 %v136, %v154
  %v208 = vadd.f32 %v137, %v154
  %v209 = vadd.f32 %v138, %v154
  %v210 = vadd.f32 %v139, %v154
  %v211 = vadd.f32 %v140, %v154
  %v212 = vadd.f32 %v141, %v154
  %v213 = vadd.f32 %v142, %v154
  %v214 = vadd.f32 %v143, %v154
  %v215 = vadd.f32 %v144, %v154
  %v216 = vadd.f32 %v145, %v154
  %v217 = vadd.f32 %v146, %v154
  %v218 = vadd.f32 %v147, %v154
  %v219 = vadd.f32 %v148, %v154
  %v220 = vmax.f32 %v156, 0.0
  %v221 = vmax.f32 %v157, 0.0
  %v222 = vmax.f32 %v158, 0.0
  %v223 = vmax.f32 %v159, 0.0
  %v224 = vmax.f32 %v160, 0.0
  %v225 = vmax.f32 %v161, 0.0
  %v226 = vmax.f32 %v162, 0.0
  %v227 = vmax.f32 %v163, 0.0
  %v228 = vmax.f32 %v164, 0.0
  %v229 = vmax.f32 %v165, 0.0
  %v230 = vmax.f32 %v166, 0.0
  %v231 = vmax.f32 %v167, 0.0
  %v232 = vmax.f32 %v168, 0.0
  %v233 = vmax.f32 %v169, 0.0
  %v234 = vmax.f32 %v170, 0.0
  %v235 = vmax.f32 %v171, 0.0
  %v236 = vmax.f32 %v172, 0.0
  %v237 = vmax.f32 %v173, 0.0
  %v238 = vmax.f32 %v174, 0.0
  %v239 = vmax.f32 %v175, 0.0
  %v240 = vmax.f32 %v176, 0.0
  %v241 = vmax.f32 %v177, 0.0
  %v242 = vmax.f32 %v178, 0.0
  %v243 = vmax.f32 %v179, 0.0
  %v244 = vmax.f32 %v180, 0.0
  %v245 = vmax.f32 %v181, 0.0
  %v246 = vmax.f32 %v182, 0.0
  %v247 = vmax.f32 %v183, 0.0
  %v248 = vmax.f32 %v184, 0.0
  %v249 = vmax.f32 %v185, 0.0
  %v250 = vmax.f32 %v186, 0.0
  %v251 = vmax.f32 %v187, 0.0
  %v252 = vmax.f32 %v188, 0.0
  %v253 = vmax.f32 %v189, 0.0
  %v254 = vmax.f32 %v190, 0.0
  %v255 = vmax.f32 %v191, 0.0
  %v256 = vmax.f32 %v192, 0.0
  %v257 = vmax.f32 %v193, 0.0
  %v258 = vmax.f32 %v194, 0.0
  %v259 = vmax.f32 %v195, 0.0
  %v260 = vmax.f32 %v196, 0.0
  %v261 = vmax.f32 %v197, 0.0
  %v262 = vmax.f32 %v198, 0.0
  %v263 = vmax.f32 %v199, 0.0
  %v264 = vmax.f32 %v200, 0.0
  %v265 = vmax.f32 %v201, 0.0
  %v266 = vmax.f32 %v202, 0.0
  %v267 = vmax.f32 %v203, 0.0
  %v268 = vmax.f32 %v204, 0.0
  %v269 = vmax.f32 %v205, 0.0
  %v270 = vmax.f32 %v206, 0.0
  %v271 = vmax.f32 %v207, 0.0
  %v272 = vmax.f32 %v208, 0.0
  %v273 = vmax.f32 %v209, 0.0
  %v274 = vmax.f32 %v210, 0.0
  %v275 = vmax.f32 %v211, 0.0
  %v276 = vmax.f32 %v212, 0.0
  %v277 = vmax.f32 %v213, 0.0
  %v278 = vmax.f32 %v214, 0.0
  %v279 = vmax.f32 %v215, 0.0
  %v280 = vmax.f32 %v216, 0.0
  %v281 = vmax.f32 %v217, 0.0
  %v282 = vmax.f32 %v218, 0.0
  %v283 = vmax.f32 %v219, 0.0
  %284 = vst [vmem:[%s3] sm:$0xff] %v220
  %285 = vst [vmem:[%s3 + $0x8] sm:$0xff] %v221
  %286 = vst [vmem:[%s3 + $0x10] sm:$0xff] %v222
  %287 = vst [vmem:[%s3 + $0x18] sm:$0xff] %v223
  %288 = vst [vmem:[%s3 + $0x20] sm:$0xff] %v224
  %289 = vst [vmem:[%s3 + $0x28] sm:$0xff] %v225
  %290 = vst [vmem:[%s3 + $0x30] sm:$0xff] %v226
  %291 = vst [vmem:[%s3 + $0x38] sm:$0xff] %v227
  %292 = vst [vmem:[%s3 + $0x40] sm:$0xff] %v228
  %293 = vst [vmem:[%s3 + $0x48] sm:$0xff] %v229
  %294 = vst [vmem:[%s3 + $0x50] sm:$0xff] %v230
  %295 = vst [vmem:[%s3 + $0x58] sm:$0xff] %v231
  %296 = vst [vmem:[%s3 + $0x60] sm:$0xff] %v232
  %297 = vst [vmem:[%s3 + $0x68] sm:$0xff] %v233
  %298 = vst [vmem:[%s3 + $0x70] sm:$0xff] %v234
  %299 = vst [vmem:[%s3 + $0x78] sm:$0xff] %v235
  %300 = vst [vmem:[%s3 + $0x80] sm:$0xff] %v236
  %301 = vst [vmem:[%s3 + $0x88] sm:$0xff] %v237
  %302 = vst [vmem:[%s3 + $0x90] sm:$0xff] %v238
  %303 = vst [vmem:[%s3 + $0x98] sm:$0xff] %v239
  %304 = vst [vmem:[%s3 + $0xa0] sm:$0xff] %v240
  %305 = vst [vmem:[%s3 + $0xa8] sm:$0xff] %v241
  %306 = vst [vmem:[%s3 + $0xb0] sm:$0xff] %v242
  %307 = vst [vmem:[%s3 + $0xb8] sm:$0xff] %v243
  %308 = vst [vmem:[%s3 + $0xc0] sm:$0xff] %v244
  %309 = vst [vmem:[%s3 + $0xc8] sm:$0xff] %v245
  %310 = vst [vmem:[%s3 + $0xd0] sm:$0xff] %v246
  %311 = vst [vmem:[%s3 + $0xd8] sm:$0xff] %v247
  %312 = vst [vmem:[%s3 + $0xe0] sm:$0xff] %v248
  %313 = vst [vmem:[%s3 + $0xe8] sm:$0xff] %v249
  %314 = vst [vmem:[%s3 + $0xf0] sm:$0xff] %v250
  %315 = vst [vmem:[%s3 + $0xf8] sm:$0xff] %v251
  %316 = vst [vmem:[%s3 + $0x100] sm:$0xff] %v252
  %317 = vst [vmem:[%s3 + $0x108] sm:$0xff] %v253
  %318 = vst [vmem:[%s3 + $0x110] sm:$0xff] %v254
  %319 = vst [vmem:[%s3 + $0x118] sm:$0xff] %v255
  %320 = vst [vmem:[%s3 + $0x120] sm:$0xff] %v256
  %321 = vst [vmem:[%s3 + $0x128] sm:$0xff] %v257
  %322 = vst [vmem:[%s3 + $0x130] sm:$0xff] %v258
  %323 = vst [vmem:[%s3 + $0x138] sm:$0xff] %v259
  %324 = vst [vmem:[%s3 + $0x140] sm:$0xff] %v260
  %325 = vst [vmem:[%s3 + $0x148] sm:$0xff] %v261
  %326 = vst [vmem:[%s3 + $0x150] sm:$0xff] %v262
  %327 = vst [vmem:[%s3 + $0x158] sm:$0xff] %v263
  %328 = vst [vmem:[%s3 + $0x160] sm:$0xff] %v264
  %329 = vst [vmem:[%s3 + $0x168] sm:$0xff] %v265
  %330 = vst [vmem:[%s3 + $0x170] sm:$0xff] %v266
  %331 = vst [vmem:[%s3 + $0x178] sm:$0xff] %v267
  %332 = vst [vmem:[%s3 + $0x180] sm:$0xff] %v268
  %333 = vst [vmem:[%s3 + $0x188] sm:$0xff] %v269
  %334 = vst [vmem:[%s3 + $0x190] sm:$0xff] %v270
  %335 = vst [vmem:[%s3 + $0x198] sm:$0xff] %v271
  %336 = vst [vmem:[%s3 + $0x1a0] sm:$0xff] %v272
  %337 = vst [vmem:[%s3 + $0x1a8] sm:$0xff] %v273
  %338 = vst [vmem:[%s3 + $0x1b0] sm:$0xff] %v274
  %339 = vst [vmem:[%s3 + $0x1b8] sm:$0xff] %v275
  %340 = vst [vmem:[%s3 + $0x1c0] sm:$0xff] %v276
  %341 = vst [vmem:[%s3 + $0x1c8] sm:$0xff] %v277
  %342 = vst [vmem:[%s3 + $0x1d0] sm:$0xff] %v278
  %343 = vst [vmem:[%s3 + $0x1d8] sm:$0xff] %v279
  %344 = vst [vmem:[%s3 + $0x1e0] sm:$0xff] %v280
  %345 = vst [vmem:[%s3 + $0x1e8] sm:$0xff] %v281
  %346 = vst [vmem:[%s3 + $0x1f0] sm:$0xff] %v282
  %347 = vst [vmem:[%s3 + $0x1f8] sm:$0xff] %v283
  // Predicated region
  $region14: #{netg_forward.16} parent=0 // pred_check
    _
  $region15: #{netg_forward.16} parent=0 // pred_check_branch
    %349 = sbr.rel (0) target = $region17
  $region16: #{netg_forward.16} parent=0 // pred_region
    _
  $region17: #{netg_forward.16} parent=0 // pred_fallthru
    _
  // Predicated region
  $region18: #{netg_forward.16} parent=0 // pred_check
    _
  $region19: #{netg_forward.16} parent=0 // pred_check_branch
    %351 = sbr.rel (0) target = $region21
  $region20: #{netg_forward.16} parent=0 // pred_region
    _
  $region21: #{netg_forward.16} parent=0 // pred_fallthru
    _

// kernel: netg_forward.15
$region0: #{netg_forward.15}
  #allocation0 [shape = 'u32[]', space=smem, size = 0x4, offset = 0x4, fixed_abs, tag = 'smem constant byte address 0x4 - core index']
  #allocation1 [shape = 'u32[144,128]{1,0:T(1,128)}', space=vmem, size = 0x12000, scoped, tag = 'internal scratch']
  %s0 = inlined_call_operand.vmem [shape: bf16[512,72], index: 0, kind: input, shape index: {}]
  %s1 = inlined_call_operand.vmem [shape: bf16[72,128], index: 1, kind: input, shape index: {}]
  %s2 = inlined_call_operand.vmem [shape: f32[512,128], index: 2, kind: output, shape index: {0}]
  %s3 = inlined_call_operand.vmem [shape: f32[1,128], index: 3, kind: output, shape index: {1}]
  %s4 = inlined_call_operand.vmem [shape: f32[1,128], index: 4, kind: output, shape index: {2}]
  %5 = xla_tuple %s2, %s3, %s4
  %s6 = sld [smem:[#allocation0]]
  $region38: #{netg_forward.15} parent=0
    _
  %s8 = ssub.s32 1, %s6
  %s9 = scalar_select 0, %s8, %s6
  // Predicated region
  $region2: #{netg_forward.15} parent=0 // pred_check
    _
  $region3: #{netg_forward.15} parent=0 // pred_check_branch
    %11 = sbr.rel (0) target = $region5
  $region4: #{netg_forward.15} parent=0 // pred_region
    _
  $region5: #{netg_forward.15} parent=0 // pred_fallthru
    _
  // Predicated region
  $region6: #{netg_forward.15} parent=0 // pred_check
    _
  $region7: #{netg_forward.15} parent=0 // pred_check_branch
    %13 = sbr.rel (0) target = $region9
  $region8: #{netg_forward.15} parent=0 // pred_region
    _
  $region9: #{netg_forward.15} parent=0 // pred_fallthru
    _
  %v15 = vld [vmem:[%s0] sm:$0xf]
  %v16 = vld [vmem:[%s0 + $0x4] sm:$0xf]
  %v17 = vld [vmem:[%s0 + $0x8] sm:$0xf]
  %v18 = vld [vmem:[%s0 + $0xc] sm:$0xf]
  %v19 = vld [vmem:[%s0 + $0x10] sm:$0xf]
  %v20 = vld [vmem:[%s0 + $0x14] sm:$0xf]
  %v21 = vld [vmem:[%s0 + $0x18] sm:$0xf]
  %v22 = vld [vmem:[%s0 + $0x1c] sm:$0xf]
  %v23 = vld [vmem:[%s0 + $0x20] sm:$0xf]
  %v24 = vld [vmem:[%s0 + $0x24] sm:$0xf]
  %v25 = vld [vmem:[%s0 + $0x28] sm:$0xf]
  %v26 = vld [vmem:[%s0 + $0x2c] sm:$0xf]
  %v27 = vld [vmem:[%s0 + $0x30] sm:$0xf]
  %v28 = vld [vmem:[%s0 + $0x34] sm:$0xf]
  %v29 = vld [vmem:[%s0 + $0x38] sm:$0xf]
  %v30 = vld [vmem:[%s0 + $0x3c] sm:$0xf]
  %v31 = vld [vmem:[%s0 + $0x40] sm:$0xf]
  %v32 = vld [vmem:[%s0 + $0x44] sm:$0xf]
  %v33 = vld [vmem:[%s0 + $0x48] sm:$0xf]
  %v34 = vld [vmem:[%s0 + $0x4c] sm:$0xf]
  %v35 = vld [vmem:[%s0 + $0x50] sm:$0xf]
  %v36 = vld [vmem:[%s0 + $0x54] sm:$0xf]
  %v37 = vld [vmem:[%s0 + $0x58] sm:$0xf]
  %v38 = vld [vmem:[%s0 + $0x5c] sm:$0xf]
  %v39 = vld [vmem:[%s0 + $0x60] sm:$0xf]
  %v40 = vld [vmem:[%s0 + $0x64] sm:$0xf]
  %v41 = vld [vmem:[%s0 + $0x68] sm:$0xf]
  %v42 = vld [vmem:[%s0 + $0x6c] sm:$0xf]
  %v43 = vld [vmem:[%s0 + $0x70] sm:$0xf]
  %v44 = vld [vmem:[%s0 + $0x74] sm:$0xf]
  %v45 = vld [vmem:[%s0 + $0x78] sm:$0xf]
  %v46 = vld [vmem:[%s0 + $0x7c] sm:$0xf]
  %v47 = vld [vmem:[%s0 + $0x80] sm:$0xf]
  %v48 = vld [vmem:[%s0 + $0x84] sm:$0xf]
  %v49 = vld [vmem:[%s0 + $0x88] sm:$0xf]
  %v50 = vld [vmem:[%s0 + $0x8c] sm:$0xf]
  %v51 = vld [vmem:[%s0 + $0x90] sm:$0xf]
  %v52 = vld [vmem:[%s0 + $0x94] sm:$0xf]
  %v53 = vld [vmem:[%s0 + $0x98] sm:$0xf]
  %v54 = vld [vmem:[%s0 + $0x9c] sm:$0xf]
  %v55 = vld [vmem:[%s0 + $0xa0] sm:$0xf]
  %v56 = vld [vmem:[%s0 + $0xa4] sm:$0xf]
  %v57 = vld [vmem:[%s0 + $0xa8] sm:$0xf]
  %v58 = vld [vmem:[%s0 + $0xac] sm:$0xf]
  %v59 = vld [vmem:[%s0 + $0xb0] sm:$0xf]
  %v60 = vld [vmem:[%s0 + $0xb4] sm:$0xf]
  %v61 = vld [vmem:[%s0 + $0xb8] sm:$0xf]
  %v62 = vld [vmem:[%s0 + $0xbc] sm:$0xf]
  %v63 = vld [vmem:[%s0 + $0xc0] sm:$0xf]
  %v64 = vld [vmem:[%s0 + $0xc4] sm:$0xf]
  %v65 = vld [vmem:[%s0 + $0xc8] sm:$0xf]
  %v66 = vld [vmem:[%s0 + $0xcc] sm:$0xf]
  %v67 = vld [vmem:[%s0 + $0xd0] sm:$0xf]
  %v68 = vld [vmem:[%s0 + $0xd4] sm:$0xf]
  %v69 = vld [vmem:[%s0 + $0xd8] sm:$0xf]
  %v70 = vld [vmem:[%s0 + $0xdc] sm:$0xf]
  %v71 = vld [vmem:[%s0 + $0xe0] sm:$0xf]
  %v72 = vld [vmem:[%s0 + $0xe4] sm:$0xf]
  %v73 = vld [vmem:[%s0 + $0xe8] sm:$0xf]
  %v74 = vld [vmem:[%s0 + $0xec] sm:$0xf]
  %v75 = vld [vmem:[%s0 + $0xf0] sm:$0xf]
  %v76 = vld [vmem:[%s0 + $0xf4] sm:$0xf]
  %v77 = vld [vmem:[%s0 + $0xf8] sm:$0xf]
  %v78 = vld [vmem:[%s0 + $0xfc] sm:$0xf]
  %v79 = vld [vmem:[%s1] sm:$0xf]
  %v80 = vld [vmem:[%s1 + $0x4] sm:$0xf]
  %v81 = vld [vmem:[%s1 + $0x8] sm:$0xf]
  %v82 = vld [vmem:[%s1 + $0xc] sm:$0xf]
  %v83 = vld [vmem:[%s1 + $0x10] sm:$0xf]
  %v84 = vld [vmem:[%s1 + $0x14] sm:$0xf]
  %v85 = vld [vmem:[%s1 + $0x18] sm:$0xf]
  %v86 = vld [vmem:[%s1 + $0x1c] sm:$0xf]
  %v87 = vld [vmem:[%s1 + $0x20] sm:$0xf]
  %v152 = vunpack.c.l.b16 %v15
  %v153 = vunpack.c.l.b16 %v16
  %v154 = vunpack.c.l.b16 %v17
  %v155 = vunpack.c.l.b16 %v18
  %v156 = vunpack.c.l.b16 %v19
  %v157 = vunpack.c.l.b16 %v20
  %v158 = vunpack.c.l.b16 %v21
  %v159 = vunpack.c.l.b16 %v22
  %v160 = vunpack.c.l.b16 %v23
  %v161 = vunpack.c.l.b16 %v24
  %v162 = vunpack.c.l.b16 %v25
  %v163 = vunpack.c.l.b16 %v26
  %v164 = vunpack.c.l.b16 %v27
  %v165 = vunpack.c.l.b16 %v28
  %v166 = vunpack.c.l.b16 %v29
  %v167 = vunpack.c.l.b16 %v30
  %v168 = vunpack.c.l.b16 %v31
  %v169 = vunpack.c.l.b16 %v32
  %v170 = vunpack.c.l.b16 %v33
  %v171 = vunpack.c.l.b16 %v34
  %v172 = vunpack.c.l.b16 %v35
  %v173 = vunpack.c.l.b16 %v36
  %v174 = vunpack.c.l.b16 %v37
  %v175 = vunpack.c.l.b16 %v38
  %v176 = vunpack.c.l.b16 %v39
  %v177 = vunpack.c.l.b16 %v40
  %v178 = vunpack.c.l.b16 %v41
  %v179 = vunpack.c.l.b16 %v42
  %v180 = vunpack.c.l.b16 %v43
  %v181 = vunpack.c.l.b16 %v44
  %v182 = vunpack.c.l.b16 %v45
  %v183 = vunpack.c.l.b16 %v46
  %v184 = vunpack.c.l.b16 %v47
  %v185 = vunpack.c.l.b16 %v48
  %v186 = vunpack.c.l.b16 %v49
  %v187 = vunpack.c.l.b16 %v50
  %v188 = vunpack.c.l.b16 %v51
  %v189 = vunpack.c.l.b16 %v52
  %v190 = vunpack.c.l.b16 %v53
  %v191 = vunpack.c.l.b16 %v54
  %v192 = vunpack.c.l.b16 %v55
  %v193 = vunpack.c.l.b16 %v56
  %v194 = vunpack.c.l.b16 %v57
  %v195 = vunpack.c.l.b16 %v58
  %v196 = vunpack.c.l.b16 %v59
  %v197 = vunpack.c.l.b16 %v60
  %v198 = vunpack.c.l.b16 %v61
  %v199 = vunpack.c.l.b16 %v62
  %v200 = vunpack.c.l.b16 %v63
  %v201 = vunpack.c.l.b16 %v64
  %v202 = vunpack.c.l.b16 %v65
  %v203 = vunpack.c.l.b16 %v66
  %v204 = vunpack.c.l.b16 %v67
  %v205 = vunpack.c.l.b16 %v68
  %v206 = vunpack.c.l.b16 %v69
  %v207 = vunpack.c.l.b16 %v70
  %v208 = vunpack.c.l.b16 %v71
  %v209 = vunpack.c.l.b16 %v72
  %v210 = vunpack.c.l.b16 %v73
  %v211 = vunpack.c.l.b16 %v74
  %v212 = vunpack.c.l.b16 %v75
  %v213 = vunpack.c.l.b16 %v76
  %v214 = vunpack.c.l.b16 %v77
  %v215 = vunpack.c.l.b16 %v78
  %v216 = vpack.c.b16 %v153, %v152
  %v217 = vpack.c.b16 %v155, %v154
  %v218 = vpack.c.b16 %v157, %v156
  %v219 = vpack.c.b16 %v159, %v158
  %v220 = vpack.c.b16 %v161, %v160
  %v221 = vpack.c.b16 %v163, %v162
  %v222 = vpack.c.b16 %v165, %v164
  %v223 = vpack.c.b16 %v167, %v166
  %v224 = vpack.c.b16 %v169, %v168
  %v225 = vpack.c.b16 %v171, %v170
  %v226 = vpack.c.b16 %v173, %v172
  %v227 = vpack.c.b16 %v175, %v174
  %v228 = vpack.c.b16 %v177, %v176
  %v229 = vpack.c.b16 %v179, %v178
  %v230 = vpack.c.b16 %v181, %v180
  %v231 = vpack.c.b16 %v183, %v182
  %v232 = vpack.c.b16 %v185, %v184
  %v233 = vpack.c.b16 %v187, %v186
  %v234 = vpack.c.b16 %v189, %v188
  %v235 = vpack.c.b16 %v191, %v190
  %v236 = vpack.c.b16 %v193, %v192
  %v237 = vpack.c.b16 %v195, %v194
  %v238 = vpack.c.b16 %v197, %v196
  %v239 = vpack.c.b16 %v199, %v198
  %v240 = vpack.c.b16 %v201, %v200
  %v241 = vpack.c.b16 %v203, %v202
  %v242 = vpack.c.b16 %v205, %v204
  %v243 = vpack.c.b16 %v207, %v206
  %v244 = vpack.c.b16 %v209, %v208
  %v245 = vpack.c.b16 %v211, %v210
  %v246 = vpack.c.b16 %v213, %v212
  %v247 = vpack.c.b16 %v215, %v214
  %v257 = vunpack.c.l.b16 %v79
  %v258 = vunpack.c.l.b16 %v80
  %v259 = vunpack.c.l.b16 %v81
  %v260 = vunpack.c.l.b16 %v82
  %v261 = vunpack.c.l.b16 %v83
  %v262 = vunpack.c.l.b16 %v84
  %v263 = vunpack.c.l.b16 %v85
  %v264 = vunpack.c.l.b16 %v86
  %v265 = vunpack.c.l.b16 %v87
  %v266 = vpack.c.b16 %v258, %v257
  %v267 = vpack.c.b16 %v260, %v259
  %v268 = vpack.c.b16 %v262, %v261
  %v269 = vpack.c.b16 %v264, %v263
  %v270 = vpack.c.b16 %v265, %v265
  %vm275 = vcmask 588800
  %v277 = vsel %vm275, %v216, 0
  %v280 = vsel %vm275, %v217, 0
  %v283 = vsel %vm275, %v218, 0
  %v286 = vsel %vm275, %v219, 0
  %v289 = vsel %vm275, %v220, 0
  %v292 = vsel %vm275, %v221, 0
  %v295 = vsel %vm275, %v222, 0
  %v298 = vsel %vm275, %v223, 0
  %v301 = vsel %vm275, %v224, 0
  %v304 = vsel %vm275, %v225, 0
  %v307 = vsel %vm275, %v226, 0
  %v310 = vsel %vm275, %v227, 0
  %v313 = vsel %vm275, %v228, 0
  %v316 = vsel %vm275, %v229, 0
  %v319 = vsel %vm275, %v230, 0
  %v322 = vsel %vm275, %v231, 0
  %v325 = vsel %vm275, %v232, 0
  %v328 = vsel %vm275, %v233, 0
  %v331 = vsel %vm275, %v234, 0
  %v334 = vsel %vm275, %v235, 0
  %v337 = vsel %vm275, %v236, 0
  %v340 = vsel %vm275, %v237, 0
  %v343 = vsel %vm275, %v238, 0
  %v346 = vsel %vm275, %v239, 0
  %v349 = vsel %vm275, %v240, 0
  %v352 = vsel %vm275, %v241, 0
  %v355 = vsel %vm275, %v242, 0
  %v358 = vsel %vm275, %v243, 0
  %v361 = vsel %vm275, %v244, 0
  %v364 = vsel %vm275, %v245, 0
  %v367 = vsel %vm275, %v246, 0
  %v370 = vsel %vm275, %v247, 0
  %vm372 = vcmask 1043456
  %v374 = vsel %vm372, %v270, 0
  %376 = vmatprep.subr.bf16.mxu0 0
  %377 = vmatpush1.bf16.msra.mxu0 %v266
  %378 = vmatprep.subr.bf16.mxu0 0
  %379 = vmatpush1.bf16.msra.mxu0 %v267
  %380 = vmatprep.subr.bf16.mxu0 0
  %381 = vmatpush1.bf16.msra.mxu0 %v268
  %382 = vmatprep.subr.bf16.mxu0 0
  %383 = vmatpush1.bf16.msra.mxu0 %v269
  %384 = vmatprep.subr.bf16.mxu0 0
  %385 = vmatpush1.bf16.msra.mxu0 %v374
  %386 = vmatprep.subr.bf16.mxu0 0
  %387 = vmatpush1.bf16.msra.mxu0 0
  %388 = vmatprep.subr.bf16.mxu0 0
  %389 = vmatpush1.bf16.msra.mxu0 0
  %390 = vmatprep.subr.bf16.mxu0 0
  %391 = vmatpush1.bf16.msra.mxu0 0
  %392 = vmatprep.subr.bf16.mxu0 0
  %393 = vmatpush1.bf16.msra.mxu0 0
  %394 = vmatprep.subr.bf16.mxu0 0
  %395 = vmatpush1.bf16.msra.mxu0 0
  %396 = vmatprep.subr.bf16.mxu0 0
  %397 = vmatpush1.bf16.msra.mxu0 0
  %398 = vmatprep.subr.bf16.mxu0 0
  %399 = vmatpush1.bf16.msra.mxu0 0
  %400 = vmatprep.subr.bf16.mxu0 0
  %401 = vmatpush1.bf16.msra.mxu0 0
  %402 = vmatprep.subr.bf16.mxu0 0
  %403 = vmatpush1.bf16.msra.mxu0 0
  %404 = vmatprep.subr.bf16.mxu0 0
  %405 = vmatpush1.bf16.msra.mxu0 0
  %406 = vmatprep.subr.bf16.mxu0 0
  %407 = vmatpush1.bf16.msra.mxu0 0
  %408 = vmatprep.mubr.bf16.mxu0 0
  %409 = vmatmul.mubr.bf16.gmra.mrb[0].mxu0 %v277
  %v410 = vpop.f32.mrb[0].mxu0
  %v411 = vadd.f32 0.0, %v410
  %v412 = vpop.f32.mrb[0].mxu0
  %v413 = vpop.f32.mrb[0].mxu0
  %v414 = vadd.f32 0.0, %v413
  %v415 = vpop.f32.mrb[0].mxu0
  %416 = vmatprep.mubr.bf16.mxu0 0
  %417 = vmatmul.mubr.bf16.gmra.mrb[0].mxu0 %v280
  %v418 = vpop.f32.mrb[0].mxu0
  %v419 = vadd.f32 0.0, %v418
  %v420 = vpop.f32.mrb[0].mxu0
  %v421 = vpop.f32.mrb[0].mxu0
  %v422 = vadd.f32 0.0, %v421
  %v423 = vpop.f32.mrb[0].mxu0
  %424 = vmatprep.mubr.bf16.mxu0 0
  %425 = vmatmul.mubr.bf16.gmra.mrb[0].mxu0 %v283
  %v426 = vpop.f32.mrb[0].mxu0
  %v427 = vadd.f32 0.0, %v426
  %v428 = vpop.f32.mrb[0].mxu0
  %v429 = vpop.f32.mrb[0].mxu0
  %v430 = vadd.f32 0.0, %v429
  %v431 = vpop.f32.mrb[0].mxu0
  %432 = vmatprep.mubr.bf16.mxu0 0
  %433 = vmatmul.mubr.bf16.gmra.mrb[0].mxu0 %v286
  %v434 = vpop.f32.mrb[0].mxu0
  %v435 = vadd.f32 0.0, %v434
  %v436 = vpop.f32.mrb[0].mxu0
  %v437 = vpop.f32.mrb[0].mxu0
  %v438 = vadd.f32 0.0, %v437
  %v439 = vpop.f32.mrb[0].mxu0
  %440 = vmatprep.mubr.bf16.mxu0 0
  %441 = vmatmul.mubr.bf16.gmra.mrb[0].mxu0 %v289
  %v442 = vpop.f32.mrb[0].mxu0
  %v443 = vadd.f32 0.0, %v442
  %v444 = vpop.f32.mrb[0].mxu0
  %v445 = vpop.f32.mrb[0].mxu0
  %v446 = vadd.f32 0.0, %v445
  %v447 = vpop.f32.mrb[0].mxu0
  %448 = vmatprep.mubr.bf16.mxu0 0
  %449 = vmatmul.mubr.bf16.gmra.mrb[0].mxu0 %v292
  %v450 = vpop.f32.mrb[0].mxu0
  %v451 = vadd.f32 0.0, %v450
  %v452 = vpop.f32.mrb[0].mxu0
  %v453 = vpop.f32.mrb[0].mxu0
  %v454 = vadd.f32 0.0, %v453
  %v455 = vpop.f32.mrb[0].mxu0
  %456 = vmatprep.mubr.bf16.mxu0 0
  %457 = vmatmul.mubr.bf16.gmra.mrb[0].mxu0 %v295
  %v458 = vpop.f32.mrb[0].mxu0
  %v459 = vadd.f32 0.0, %v458
  %v460 = vpop.f32.mrb[0].mxu0
  %v461 = vpop.f32.mrb[0].mxu0
  %v462 = vadd.f32 0.0, %v461
  %v463 = vpop.f32.mrb[0].mxu0
  %464 = vmatprep.mubr.bf16.mxu0 0
  %465 = vmatmul.mubr.bf16.gmra.mrb[0].mxu0 %v298
  %v466 = vpop.f32.mrb[0].mxu0
  %v467 = vadd.f32 0.0, %v466
  %v468 = vpop.f32.mrb[0].mxu0
  %v469 = vpop.f32.mrb[0].mxu0
  %v470 = vadd.f32 0.0, %v469
  %v471 = vpop.f32.mrb[0].mxu0
  %472 = vmatprep.mubr.bf16.mxu0 0
  %473 = vmatmul.mubr.bf16.gmra.mrb[0].mxu0 %v301
  %v474 = vpop.f32.mrb[0].mxu0
  %v475 = vadd.f32 0.0, %v474
  %v476 = vpop.f32.mrb[0].mxu0
  %v477 = vpop.f32.mrb[0].mxu0
  %v478 = vadd.f32 0.0, %v477
  %v479 = vpop.f32.mrb[0].mxu0
  %480 = vmatprep.mubr.bf16.mxu0 0
  %481 = vmatmul.mubr.bf16.gmra.mrb[0].mxu0 %v304
  %v482 = vpop.f32.mrb[0].mxu0
  %v483 = vadd.f32 0.0, %v482
  %v484 = vpop.f32.mrb[0].mxu0
  %v485 = vpop.f32.mrb[0].mxu0
  %v486 = vadd.f32 0.0, %v485
  %v487 = vpop.f32.mrb[0].mxu0
  %488 = vmatprep.mubr.bf16.mxu0 0
  %489 = vmatmul.mubr.bf16.gmra.mrb[0].mxu0 %v307
  %v490 = vpop.f32.mrb[0].mxu0
  %v491 = vadd.f32 0.0, %v490
  %v492 = vpop.f32.mrb[0].mxu0
  %v493 = vpop.f32.mrb[0].mxu0
  %v494 = vadd.f32 0.0, %v493
  %v495 = vpop.f32.mrb[0].mxu0
  %496 = vmatprep.mubr.bf16.mxu0 0
  %497 = vmatmul.mubr.bf16.gmra.mrb[0].mxu0 %v310
  %v498 = vpop.f32.mrb[0].mxu0
  %v499 = vadd.f32 0.0, %v498
  %v500 = vpop.f32.mrb[0].mxu0
  %v501 = vpop.f32.mrb[0].mxu0
  %v502 = vadd.f32 0.0, %v501
  %v503 = vpop.f32.mrb[0].mxu0
  %504 = vmatprep.mubr.bf16.mxu0 0
  %505 = vmatmul.mubr.bf16.gmra.mrb[0].mxu0 %v313
  %v506 = vpop.f32.mrb[0].mxu0
  %v507 = vadd.f32 0.0, %v506
  %v508 = vpop.f32.mrb[0].mxu0
  %v509 = vpop.f32.mrb[0].mxu0
  %v510 = vadd.f32 0.0, %v509
  %v511 = vpop.f32.mrb[0].mxu0
  %512 = vmatprep.mubr.bf16.mxu0 0
  %513 = vmatmul.mubr.bf16.gmra.mrb[0].mxu0 %v316
  %v514 = vpop.f32.mrb[0].mxu0
  %v515 = vadd.f32 0.0, %v514
  %v516 = vpop.f32.mrb[0].mxu0
  %v517 = vpop.f32.mrb[0].mxu0
  %v518 = vadd.f32 0.0, %v517
  %v519 = vpop.f32.mrb[0].mxu0
  %520 = vmatprep.mubr.bf16.mxu0 0
  %521 = vmatmul.mubr.bf16.gmra.mrb[0].mxu0 %v319
  %v522 = vpop.f32.mrb[0].mxu0
  %v523 = vadd.f32 0.0, %v522
  %v524 = vpop.f32.mrb[0].mxu0
  %v525 = vpop.f32.mrb[0].mxu0
  %v526 = vadd.f32 0.0, %v525
  %v527 = vpop.f32.mrb[0].mxu0
  %528 = vmatprep.mubr.bf16.mxu0 0
  %529 = vmatmul.mubr.bf16.gmra.mrb[0].mxu0 %v322
  %v530 = vpop.f32.mrb[0].mxu0
  %v531 = vadd.f32 0.0, %v530
  %v532 = vpop.f32.mrb[0].mxu0
  %v533 = vpop.f32.mrb[0].mxu0
  %v534 = vadd.f32 0.0, %v533
  %v535 = vpop.f32.mrb[0].mxu0
  %536 = vmatprep.mubr.bf16.mxu0 0
  %537 = vmatmul.mubr.bf16.gmra.mrb[0].mxu0 %v325
  %v538 = vpop.f32.mrb[0].mxu0
  %v539 = vadd.f32 0.0, %v538
  %v540 = vpop.f32.mrb[0].mxu0
  %v541 = vpop.f32.mrb[0].mxu0
  %v542 = vadd.f32 0.0, %v541
  %v543 = vpop.f32.mrb[0].mxu0
  %544 = vmatprep.mubr.bf16.mxu0 0
  %545 = vmatmul.mubr.bf16.gmra.mrb[0].mxu0 %v328
  %v546 = vpop.f32.mrb[0].mxu0
  %v547 = vadd.f32 0.0, %v546
  %v548 = vpop.f32.mrb[0].mxu0
  %v549 = vpop.f32.mrb[0].mxu0
  %v550 = vadd.f32 0.0, %v549
  %v551 = vpop.f32.mrb[0].mxu0
  %552 = vmatprep.mubr.bf16.mxu0 0
  %553 = vmatmul.mubr.bf16.gmra.mrb[0].mxu0 %v331
  %v554 = vpop.f32.mrb[0].mxu0
  %v555 = vadd.f32 0.0, %v554
  %v556 = vpop.f32.mrb[0].mxu0
  %v557 = vpop.f32.mrb[0].mxu0
  %v558 = vadd.f32 0.0, %v557
  %v559 = vpop.f32.mrb[0].mxu0
  %560 = vmatprep.mubr.bf16.mxu0 0
  %561 = vmatmul.mubr.bf16.gmra.mrb[0].mxu0 %v334
  %v562 = vpop.f32.mrb[0].mxu0
  %v563 = vadd.f32 0.0, %v562
  %v564 = vpop.f32.mrb[0].mxu0
  %v565 = vpop.f32.mrb[0].mxu0
  %v566 = vadd.f32 0.0, %v565
  %v567 = vpop.f32.mrb[0].mxu0
  %568 = vmatprep.mubr.bf16.mxu0 0
  %569 = vmatmul.mubr.bf16.gmra.mrb[0].mxu0 %v337
  %v570 = vpop.f32.mrb[0].mxu0
  %v571 = vadd.f32 0.0, %v570
  %v572 = vpop.f32.mrb[0].mxu0
  %v573 = vpop.f32.mrb[0].mxu0
  %v574 = vadd.f32 0.0, %v573
  %v575 = vpop.f32.mrb[0].mxu0
  %576 = vmatprep.mubr.bf16.mxu0 0
  %577 = vmatmul.mubr.bf16.gmra.mrb[0].mxu0 %v340
  %v578 = vpop.f32.mrb[0].mxu0
  %v579 = vadd.f32 0.0, %v578
  %v580 = vpop.f32.mrb[0].mxu0
  %v581 = vpop.f32.mrb[0].mxu0
  %v582 = vadd.f32 0.0, %v581
  %v583 = vpop.f32.mrb[0].mxu0
  %584 = vmatprep.mubr.bf16.mxu0 0
  %585 = vmatmul.mubr.bf16.gmra.mrb[0].mxu0 %v343
  %v586 = vpop.f32.mrb[0].mxu0
  %v587 = vadd.f32 0.0, %v586
  %v588 = vpop.f32.mrb[0].mxu0
  %v589 = vpop.f32.mrb[0].mxu0
  %v590 = vadd.f32 0.0, %v589
  %v591 = vpop.f32.mrb[0].mxu0
  %592 = vmatprep.mubr.bf16.mxu0 0
  %593 = vmatmul.mubr.bf16.gmra.mrb[0].mxu0 %v346
  %v594 = vpop.f32.mrb[0].mxu0
  %v595 = vadd.f32 0.0, %v594
  %v596 = vpop.f32.mrb[0].mxu0
  %v597 = vpop.f32.mrb[0].mxu0
  %v598 = vadd.f32 0.0, %v597
  %v599 = vpop.f32.mrb[0].mxu0
  %600 = vmatprep.mubr.bf16.mxu0 0
  %601 = vmatmul.mubr.bf16.gmra.mrb[0].mxu0 %v349
  %v602 = vpop.f32.mrb[0].mxu0
  %v603 = vadd.f32 0.0, %v602
  %v604 = vpop.f32.mrb[0].mxu0
  %v605 = vpop.f32.mrb[0].mxu0
  %v606 = vadd.f32 0.0, %v605
  %v607 = vpop.f32.mrb[0].mxu0
  %608 = vmatprep.mubr.bf16.mxu0 0
  %609 = vmatmul.mubr.bf16.gmra.mrb[0].mxu0 %v352
  %v610 = vpop.f32.mrb[0].mxu0
  %v611 = vadd.f32 0.0, %v610
  %v612 = vpop.f32.mrb[0].mxu0
  %v613 = vpop.f32.mrb[0].mxu0
  %v614 = vadd.f32 0.0, %v613
  %v615 = vpop.f32.mrb[0].mxu0
  %616 = vmatprep.mubr.bf16.mxu0 0
  %617 = vmatmul.mubr.bf16.gmra.mrb[0].mxu0 %v355
  %v618 = vpop.f32.mrb[0].mxu0
  %v619 = vadd.f32 0.0, %v618
  %v620 = vpop.f32.mrb[0].mxu0
  %v621 = vpop.f32.mrb[0].mxu0
  %v622 = vadd.f32 0.0, %v621
  %v623 = vpop.f32.mrb[0].mxu0
  %624 = vmatprep.mubr.bf16.mxu0 0
  %625 = vmatmul.mubr.bf16.gmra.mrb[0].mxu0 %v358
  %v626 = vpop.f32.mrb[0].mxu0
  %v627 = vadd.f32 0.0, %v626
  %v628 = vpop.f32.mrb[0].mxu0
  %v629 = vpop.f32.mrb[0].mxu0
  %v630 = vadd.f32 0.0, %v629
  %v631 = vpop.f32.mrb[0].mxu0
  %632 = vmatprep.mubr.bf16.mxu0 0
  %633 = vmatmul.mubr.bf16.gmra.mrb[0].mxu0 %v361
  %v634 = vpop.f32.mrb[0].mxu0
  %v635 = vadd.f32 0.0, %v634
  %v636 = vpop.f32.mrb[0].mxu0
  %v637 = vpop.f32.mrb[0].mxu0
  %v638 = vadd.f32 0.0, %v637
  %v639 = vpop.f32.mrb[0].mxu0
  %640 = vmatprep.mubr.bf16.mxu0 0
  %641 = vmatmul.mubr.bf16.gmra.mrb[0].mxu0 %v364
  %v642 = vpop.f32.mrb[0].mxu0
  %v643 = vadd.f32 0.0, %v642
  %v644 = vpop.f32.mrb[0].mxu0
  %v645 = vpop.f32.mrb[0].mxu0
  %v646 = vadd.f32 0.0, %v645
  %v647 = vpop.f32.mrb[0].mxu0
  %648 = vmatprep.mubr.bf16.mxu0 0
  %649 = vmatmul.mubr.bf16.gmra.mrb[0].mxu0 %v367
  %v650 = vpop.f32.mrb[0].mxu0
  %v651 = vadd.f32 0.0, %v650
  %v652 = vpop.f32.mrb[0].mxu0
  %v653 = vpop.f32.mrb[0].mxu0
  %v654 = vadd.f32 0.0, %v653
  %v655 = vpop.f32.mrb[0].mxu0
  %656 = vmatprep.mubr.bf16.mxu0 0
  %657 = vmatmul.mubr.bf16.gmra.mrb[0].mxu0 %v370
  %v658 = vpop.f32.mrb[0].mxu0
  %v659 = vadd.f32 0.0, %v658
  %v660 = vpop.f32.mrb[0].mxu0
  %v661 = vpop.f32.mrb[0].mxu0
  %v662 = vadd.f32 0.0, %v661
  %v663 = vpop.f32.mrb[0].mxu0
  %664 = vdwg.mxu0
  %665 = vst [vmem:[%s2] sm:$0xff] %v411
  %666 = vst [vmem:[%s2 + $0x8] sm:$0xff] %v414
  %667 = vst [vmem:[%s2 + $0x10] sm:$0xff] %v419
  %668 = vst [vmem:[%s2 + $0x18] sm:$0xff] %v422
  %669 = vst [vmem:[%s2 + $0x20] sm:$0xff] %v427
  %670 = vst [vmem:[%s2 + $0x28] sm:$0xff] %v430
  %671 = vst [vmem:[%s2 + $0x30] sm:$0xff] %v435
  %672 = vst [vmem:[%s2 + $0x38] sm:$0xff] %v438
  %673 = vst [vmem:[%s2 + $0x40] sm:$0xff] %v443
  %674 = vst [vmem:[%s2 + $0x48] sm:$0xff] %v446
  %675 = vst [vmem:[%s2 + $0x50] sm:$0xff] %v451
  %676 = vst [vmem:[%s2 + $0x58] sm:$0xff] %v454
  %677 = vst [vmem:[%s2 + $0x60] sm:$0xff] %v459
  %678 = vst [vmem:[%s2 + $0x68] sm:$0xff] %v462
  %679 = vst [vmem:[%s2 + $0x70] sm:$0xff] %v467
  %680 = vst [vmem:[%s2 + $0x78] sm:$0xff] %v470
  %681 = vst [vmem:[%s2 + $0x80] sm:$0xff] %v475
  %682 = vst [vmem:[%s2 + $0x88] sm:$0xff] %v478
  %683 = vst [vmem:[%s2 + $0x90] sm:$0xff] %v483
  %684 = vst [vmem:[%s2 + $0x98] sm:$0xff] %v486
  %685 = vst [vmem:[%s2 + $0xa0] sm:$0xff] %v491
  %686 = vst [vmem:[%s2 + $0xa8] sm:$0xff] %v494
  %687 = vst [vmem:[%s2 + $0xb0] sm:$0xff] %v499
  %688 = vst [vmem:[%s2 + $0xb8] sm:$0xff] %v502
  %689 = vst [vmem:[%s2 + $0xc0] sm:$0xff] %v507
  %690 = vst [vmem:[%s2 + $0xc8] sm:$0xff] %v510
  %691 = vst [vmem:[%s2 + $0xd0] sm:$0xff] %v515
  %692 = vst [vmem:[%s2 + $0xd8] sm:$0xff] %v518
  %693 = vst [vmem:[%s2 + $0xe0] sm:$0xff] %v523
  %694 = vst [vmem:[%s2 + $0xe8] sm:$0xff] %v526
  %695 = vst [vmem:[%s2 + $0xf0] sm:$0xff] %v531
  %696 = vst [vmem:[%s2 + $0xf8] sm:$0xff] %v534
  %697 = vst [vmem:[%s2 + $0x100] sm:$0xff] %v539
  %698 = vst [vmem:[%s2 + $0x108] sm:$0xff] %v542
  %699 = vst [vmem:[%s2 + $0x110] sm:$0xff] %v547
  %700 = vst [vmem:[%s2 + $0x118] sm:$0xff] %v550
  %701 = vst [vmem:[%s2 + $0x120] sm:$0xff] %v555
  %702 = vst [vmem:[%s2 + $0x128] sm:$0xff] %v558
  %703 = vst [vmem:[%s2 + $0x130] sm:$0xff] %v563
  %704 = vst [vmem:[%s2 + $0x138] sm:$0xff] %v566
  %705 = vst [vmem:[%s2 + $0x140] sm:$0xff] %v571
  %706 = vst [vmem:[%s2 + $0x148] sm:$0xff] %v574
  %707 = vst [vmem:[%s2 + $0x150] sm:$0xff] %v579
  %708 = vst [vmem:[%s2 + $0x158] sm:$0xff] %v582
  %709 = vst [vmem:[%s2 + $0x160] sm:$0xff] %v587
  %710 = vst [vmem:[%s2 + $0x168] sm:$0xff] %v590
  %711 = vst [vmem:[%s2 + $0x170] sm:$0xff] %v595
  %712 = vst [vmem:[%s2 + $0x178] sm:$0xff] %v598
  %713 = vst [vmem:[%s2 + $0x180] sm:$0xff] %v603
  %714 = vst [vmem:[%s2 + $0x188] sm:$0xff] %v606
  %715 = vst [vmem:[%s2 + $0x190] sm:$0xff] %v611
  %716 = vst [vmem:[%s2 + $0x198] sm:$0xff] %v614
  %717 = vst [vmem:[%s2 + $0x1a0] sm:$0xff] %v619
  %718 = vst [vmem:[%s2 + $0x1a8] sm:$0xff] %v622
  %719 = vst [vmem:[%s2 + $0x1b0] sm:$0xff] %v627
  %720 = vst [vmem:[%s2 + $0x1b8] sm:$0xff] %v630
  %721 = vst [vmem:[%s2 + $0x1c0] sm:$0xff] %v635
  %722 = vst [vmem:[%s2 + $0x1c8] sm:$0xff] %v638
  %723 = vst [vmem:[%s2 + $0x1d0] sm:$0xff] %v643
  %724 = vst [vmem:[%s2 + $0x1d8] sm:$0xff] %v646
  %725 = vst [vmem:[%s2 + $0x1e0] sm:$0xff] %v651
  %726 = vst [vmem:[%s2 + $0x1e8] sm:$0xff] %v654
  %727 = vst [vmem:[%s2 + $0x1f0] sm:$0xff] %v659
  %728 = vst [vmem:[%s2 + $0x1f8] sm:$0xff] %v662
  %p729 = scmp.eq.s32.totalorder 0, 0
  // Predicated region
  $region10: #{netg_forward.15} parent=0 // pred_check
    %p730 = pneg %p729
  $region11: #{netg_forward.15} parent=0 // pred_check_branch
    %732 = sbr.rel (%p730) target = $region13
  $region12: #{netg_forward.15} parent=0 // pred_region
    %733 = vst [vmem:[%s3] sm:$0x1] 0.0
    %734 = vst [vmem:[%s4] sm:$0x1] 0.0
  $region13: #{netg_forward.15} parent=0 // pred_fallthru
    _
  %v735 = vld [vmem:[%s3] sm:$0x1]
  %v736 = vadd.f32 %v411, %v414
  %v737 = vadd.f32 %v736, %v419
  %v738 = vadd.f32 %v737, %v422
  %v739 = vadd.f32 %v738, %v427
  %v740 = vadd.f32 %v739, %v430
  %v741 = vadd.f32 %v740, %v435
  %v742 = vadd.f32 %v741, %v438
  %v743 = vadd.f32 %v742, %v443
  %v744 = vadd.f32 %v743, %v446
  %v745 = vadd.f32 %v744, %v451
  %v746 = vadd.f32 %v745, %v454
  %v747 = vadd.f32 %v746, %v459
  %v748 = vadd.f32 %v747, %v462
  %v749 = vadd.f32 %v748, %v467
  %v750 = vadd.f32 %v749, %v470
  %v751 = vadd.f32 %v750, %v475
  %v752 = vadd.f32 %v751, %v478
  %v753 = vadd.f32 %v752, %v483
  %v754 = vadd.f32 %v753, %v486
  %v755 = vadd.f32 %v754, %v491
  %v756 = vadd.f32 %v755, %v494
  %v757 = vadd.f32 %v756, %v499
  %v758 = vadd.f32 %v757, %v502
  %v759 = vadd.f32 %v758, %v507
  %v760 = vadd.f32 %v759, %v510
  %v761 = vadd.f32 %v760, %v515
  %v762 = vadd.f32 %v761, %v518
  %v763 = vadd.f32 %v762, %v523
  %v764 = vadd.f32 %v763, %v526
  %v765 = vadd.f32 %v764, %v531
  %v766 = vadd.f32 %v765, %v534
  %v767 = vadd.f32 %v766, %v539
  %v768 = vadd.f32 %v767, %v542
  %v769 = vadd.f32 %v768, %v547
  %v770 = vadd.f32 %v769, %v550
  %v771 = vadd.f32 %v770, %v555
  %v772 = vadd.f32 %v771, %v558
  %v773 = vadd.f32 %v772, %v563
  %v774 = vadd.f32 %v773, %v566
  %v775 = vadd.f32 %v774, %v571
  %v776 = vadd.f32 %v775, %v574
  %v777 = vadd.f32 %v776, %v579
  %v778 = vadd.f32 %v777, %v582
  %v779 = vadd.f32 %v778, %v587
  %v780 = vadd.f32 %v779, %v590
  %v781 = vadd.f32 %v780, %v595
  %v782 = vadd.f32 %v781, %v598
  %v783 = vadd.f32 %v782, %v603
  %v784 = vadd.f32 %v783, %v606
  %v785 = vadd.f32 %v784, %v611
  %v786 = vadd.f32 %v785, %v614
  %v787 = vadd.f32 %v786, %v619
  %v788 = vadd.f32 %v787, %v622
  %v789 = vadd.f32 %v788, %v627
  %v790 = vadd.f32 %v789, %v630
  %v791 = vadd.f32 %v790, %v635
  %v792 = vadd.f32 %v791, %v638
  %v793 = vadd.f32 %v792, %v643
  %v794 = vadd.f32 %v793, %v646
  %v795 = vadd.f32 %v794, %v651
  %v796 = vadd.f32 %v795, %v654
  %v797 = vadd.f32 %v796, %v659
  %v798 = vadd.f32 %v797, %v662
  %v799 = vrot.slane %v798, 4
  %v800 = vadd.f32 %v798, %v799
  %v801 = vrot.slane %v800, 2
  %v802 = vadd.f32 %v800, %v801
  %v803 = vrot.slane %v802, 1
  %v804 = vadd.f32 %v802, %v803
  %v805 = vadd.f32 %v735, %v804
  %806 = vst [vmem:[%s3] sm:$0x1] %v805
  %v807 = vld [vmem:[%s4] sm:$0x1]
  %v808 = vmul.f32 %v411, %v411
  %v809 = vmul.f32 %v414, %v414
  %v810 = vmul.f32 %v419, %v419
  %v811 = vmul.f32 %v422, %v422
  %v812 = vmul.f32 %v427, %v427
  %v813 = vmul.f32 %v430, %v430
  %v814 = vmul.f32 %v435, %v435
  %v815 = vmul.f32 %v438, %v438
  %v816 = vmul.f32 %v443, %v443
  %v817 = vmul.f32 %v446, %v446
  %v818 = vmul.f32 %v451, %v451
  %v819 = vmul.f32 %v454, %v454
  %v820 = vmul.f32 %v459, %v459
  %v821 = vmul.f32 %v462, %v462
  %v822 = vmul.f32 %v467, %v467
  %v823 = vmul.f32 %v470, %v470
  %v824 = vmul.f32 %v475, %v475
  %v825 = vmul.f32 %v478, %v478
  %v826 = vmul.f32 %v483, %v483
  %v827 = vmul.f32 %v486, %v486
  %v828 = vmul.f32 %v491, %v491
  %v829 = vmul.f32 %v494, %v494
  %v830 = vmul.f32 %v499, %v499
  %v831 = vmul.f32 %v502, %v502
  %v832 = vmul.f32 %v507, %v507
  %v833 = vmul.f32 %v510, %v510
  %v834 = vmul.f32 %v515, %v515
  %v835 = vmul.f32 %v518, %v518
  %v836 = vmul.f32 %v523, %v523
  %v837 = vmul.f32 %v526, %v526
  %v838 = vmul.f32 %v531, %v531
  %v839 = vmul.f32 %v534, %v534
  %v840 = vmul.f32 %v539, %v539
  %v841 = vmul.f32 %v542, %v542
  %v842 = vmul.f32 %v547, %v547
  %v843 = vmul.f32 %v550, %v550
  %v844 = vmul.f32 %v555, %v555
  %v845 = vmul.f32 %v558, %v558
  %v846 = vmul.f32 %v563, %v563
  %v847 = vmul.f32 %v566, %v566
  %v848 = vmul.f32 %v571, %v571
  %v849 = vmul.f32 %v574, %v574
  %v850 = vmul.f32 %v579, %v579
  %v851 = vmul.f32 %v582, %v582
  %v852 = vmul.f32 %v587, %v587
  %v853 = vmul.f32 %v590, %v590
  %v854 = vmul.f32 %v595, %v595
  %v855 = vmul.f32 %v598, %v598
  %v856 = vmul.f32 %v603, %v603
  %v857 = vmul.f32 %v606, %v606
  %v858 = vmul.f32 %v611, %v611
  %v859 = vmul.f32 %v614, %v614
  %v860 = vmul.f32 %v619, %v619
  %v861 = vmul.f32 %v622, %v622
  %v862 = vmul.f32 %v627, %v627
  %v863 = vmul.f32 %v630, %v630
  %v864 = vmul.f32 %v635, %v635
  %v865 = vmul.f32 %v638, %v638
  %v866 = vmul.f32 %v643, %v643
  %v867 = vmul.f32 %v646, %v646
  %v868 = vmul.f32 %v651, %v651
  %v869 = vmul.f32 %v654, %v654
  %v870 = vmul.f32 %v659, %v659
  %v871 = vmul.f32 %v662, %v662
  %v872 = vadd.f32 %v808, %v809
  %v873 = vadd.f32 %v872, %v810
  %v874 = vadd.f32 %v873, %v811
  %v875 = vadd.f32 %v874, %v812
  %v876 = vadd.f32 %v875, %v813
  %v877 = vadd.f32 %v876, %v814
  %v878 = vadd.f32 %v877, %v815
  %v879 = vadd.f32 %v878, %v816
  %v880 = vadd.f32 %v879, %v817
  %v881 = vadd.f32 %v880, %v818
  %v882 = vadd.f32 %v881, %v819
  %v883 = vadd.f32 %v882, %v820
  %v884 = vadd.f32 %v883, %v821
  %v885 = vadd.f32 %v884, %v822
  %v886 = vadd.f32 %v885, %v823
  %v887 = vadd.f32 %v886, %v824
  %v888 = vadd.f32 %v887, %v825
  %v889 = vadd.f32 %v888, %v826
  %v890 = vadd.f32 %v889, %v827
  %v891 = vadd.f32 %v890, %v828
  %v892 = vadd.f32 %v891, %v829
  %v893 = vadd.f32 %v892, %v830
  %v894 = vadd.f32 %v893, %v831
  %v895 = vadd.f32 %v894, %v832
  %v896 = vadd.f32 %v895, %v833
  %v897 = vadd.f32 %v896, %v834
  %v898 = vadd.f32 %v897, %v835
  %v899 = vadd.f32 %v898, %v836
  %v900 = vadd.f32 %v899, %v837
  %v901 = vadd.f32 %v900, %v838
  %v902 = vadd.f32 %v901, %v839
  %v903 = vadd.f32 %v902, %v840
  %v904 = vadd.f32 %v903, %v841
  %v905 = vadd.f32 %v904, %v842
  %v906 = vadd.f32 %v905, %v843
  %v907 = vadd.f32 %v906, %v844
  %v908 = vadd.f32 %v907, %v845
  %v909 = vadd.f32 %v908, %v846
  %v910 = vadd.f32 %v909, %v847
  %v911 = vadd.f32 %v910, %v848
  %v912 = vadd.f32 %v911, %v849
  %v913 = vadd.f32 %v912, %v850
  %v914 = vadd.f32 %v913, %v851
  %v915 = vadd.f32 %v914, %v852
  %v916 = vadd.f32 %v915, %v853
  %v917 = vadd.f32 %v916, %v854
  %v918 = vadd.f32 %v917, %v855
  %v919 = vadd.f32 %v918, %v856
  %v920 = vadd.f32 %v919, %v857
  %v921 = vadd.f32 %v920, %v858
  %v922 = vadd.f32 %v921, %v859
  %v923 = vadd.f32 %v922, %v860
  %v924 = vadd.f32 %v923, %v861
  %v925 = vadd.f32 %v924, %v862
  %v926 = vadd.f32 %v925, %v863
  %v927 = vadd.f32 %v926, %v864
  %v928 = vadd.f32 %v927, %v865
  %v929 = vadd.f32 %v928, %v866
  %v930 = vadd.f32 %v929, %v867
  %v931 = vadd.f32 %v930, %v868
  %v932 = vadd.f32 %v931, %v869
  %v933 = vadd.f32 %v932, %v870
  %v934 = vadd.f32 %v933, %v871
  %v935 = vrot.slane %v934, 4
  %v936 = vadd.f32 %v934, %v935
  %v937 = vrot.slane %v936, 2
  %v938 = vadd.f32 %v936, %v937
  %v939 = vrot.slane %v938, 1
  %v940 = vadd.f32 %v938, %v939
  %v941 = vadd.f32 %v807, %v940
  %942 = vst [vmem:[%s4] sm:$0x1] %v941
  // Predicated region
  $region14: #{netg_forward.15} parent=0 // pred_check
    _
  $region15: #{netg_forward.15} parent=0 // pred_check_branch
    %944 = sbr.rel (0) target = $region17
  $region16: #{netg_forward.15} parent=0 // pred_region
    _
  $region17: #{netg_forward.15} parent=0 // pred_fallthru
    _
  // Predicated region
  $region18: #{netg_forward.15} parent=0 // pred_check
    _
  $region19: #{netg_forward.15} parent=0 // pred_check_branch
    %946 = sbr.rel (0) target = $region21
  $region20: #{netg_forward.15} parent=0 // pred_region
    _
  $region21: #{netg_forward.15} parent=0 // pred_fallthru
    _
  // Predicated region
  $region22: #{netg_forward.15} parent=0 // pred_check
    _
  $region23: #{netg_forward.15} parent=0 // pred_check_branch
    %948 = sbr.rel (0) target = $region25
  $region24: #{netg_forward.15} parent=0 // pred_region
    _
  $region25: #{netg_forward.15} parent=0 // pred_fallthru
    _
  // Predicated region
  $region26: #{netg_forward.15} parent=0 // pred_check
    _
  $region27: #{netg_forward.15} parent=0 // pred_check_branch
    %950 = sbr.rel (0) target = $region29
  $region28: #{netg_forward.15} parent=0 // pred_region
    _
  $region29: #{netg_forward.15} parent=0 // pred_fallthru
    _
  // Predicated region
  $region30: #{netg_forward.15} parent=0 // pred_check
    _
  $region31: #{netg_forward.15} parent=0 // pred_check_branch
    %952 = sbr.rel (0) target = $region33
  $region32: #{netg_forward.15} parent=0 // pred_region
    _
  $region33: #{netg_forward.15} parent=0 // pred_fallthru
    _
  // Predicated region
  $region34: #{netg_forward.15} parent=0 // pred_check
    _
  $region35: #{netg_forward.15} parent=0 // pred_check_branch
    %954 = sbr.rel (0) target = $region37
  $region36: #{netg_forward.15} parent=0 // pred_region
    _
  $region37: #{netg_forward.15} parent=0 // pred_fallthru
    _

// kernel: netg_forward.17
$region0: #{netg_forward.17}
  #allocation0 [shape = 'u32[]', space=smem, size = 0x4, offset = 0x4, fixed_abs, tag = 'smem constant byte address 0x4 - core index']
  #allocation1 [shape = 'u32[144,128]{1,0:T(1,128)}', space=vmem, size = 0x12000, scoped, tag = 'internal scratch']
  %s0 = inlined_call_operand.vmem [shape: bf16[2048,36], index: 0, kind: input, shape index: {}]
  %s1 = inlined_call_operand.vmem [shape: bf16[36,128], index: 1, kind: input, shape index: {}]
  %s2 = inlined_call_operand.vmem [shape: f32[2048,128], index: 2, kind: output, shape index: {}]
  %s3 = sld [smem:[#allocation0]]
  $region18: #{netg_forward.17} parent=0
    _
  %s5 = ssub.s32 1, %s3
  %s6 = scalar_select 0, %s5, %s3
  // Predicated region
  $region2: #{netg_forward.17} parent=0 // pred_check
    _
  $region3: #{netg_forward.17} parent=0 // pred_check_branch
    %8 = sbr.rel (0) target = $region5
  $region4: #{netg_forward.17} parent=0 // pred_region
    _
  $region5: #{netg_forward.17} parent=0 // pred_fallthru
    _
  // Predicated region
  $region6: #{netg_forward.17} parent=0 // pred_check
    _
  $region7: #{netg_forward.17} parent=0 // pred_check_branch
    %10 = sbr.rel (0) target = $region9
  $region8: #{netg_forward.17} parent=0 // pred_region
    _
  $region9: #{netg_forward.17} parent=0 // pred_fallthru
    _
  %v12 = vld [vmem:[%s0] sm:$0xf]
  %v13 = vld [vmem:[%s0 + $0x4] sm:$0xf]
  %v14 = vld [vmem:[%s0 + $0x8] sm:$0xf]
  %v15 = vld [vmem:[%s0 + $0xc] sm:$0xf]
  %v16 = vld [vmem:[%s0 + $0x10] sm:$0xf]
  %v17 = vld [vmem:[%s0 + $0x14] sm:$0xf]
  %v18 = vld [vmem:[%s0 + $0x18] sm:$0xf]
  %v19 = vld [vmem:[%s0 + $0x1c] sm:$0xf]
  %v20 = vld [vmem:[%s0 + $0x20] sm:$0xf]
  %v21 = vld [vmem:[%s0 + $0x24] sm:$0xf]
  %v22 = vld [vmem:[%s0 + $0x28] sm:$0xf]
  %v23 = vld [vmem:[%s0 + $0x2c] sm:$0xf]
  %v24 = vld [vmem:[%s0 + $0x30] sm:$0xf]
  %v25 = vld [vmem:[%s0 + $0x34] sm:$0xf]
  %v26 = vld [vmem:[%s0 + $0x38] sm:$0xf]
  %v27 = vld [vmem:[%s0 + $0x3c] sm:$0xf]
  %v28 = vld [vmem:[%s0 + $0x40] sm:$0xf]
  %v29 = vld [vmem:[%s0 + $0x44] sm:$0xf]
  %v30 = vld [vmem:[%s0 + $0x48] sm:$0xf]
  %v31 = vld [vmem:[%s0 + $0x4c] sm:$0xf]
  %v32 = vld [vmem:[%s0 + $0x50] sm:$0xf]
  %v33 = vld [vmem:[%s0 + $0x54] sm:$0xf]
  %v34 = vld [vmem:[%s0 + $0x58] sm:$0xf]
  %v35 = vld [vmem:[%s0 + $0x5c] sm:$0xf]
  %v36 = vld [vmem:[%s0 + $0x60] sm:$0xf]
  %v37 = vld [vmem:[%s0 + $0x64] sm:$0xf]
  %v38 = vld [vmem:[%s0 + $0x68] sm:$0xf]
  %v39 = vld [vmem:[%s0 + $0x6c] sm:$0xf]
  %v40 = vld [vmem:[%s0 + $0x70] sm:$0xf]
  %v41 = vld [vmem:[%s0 + $0x74] sm:$0xf]
  %v42 = vld [vmem:[%s0 + $0x78] sm:$0xf]
  %v43 = vld [vmem:[%s0 + $0x7c] sm:$0xf]
  %v44 = vld [vmem:[%s0 + $0x80] sm:$0xf]
  %v45 = vld [vmem:[%s0 + $0x84] sm:$0xf]
  %v46 = vld [vmem:[%s0 + $0x88] sm:$0xf]
  %v47 = vld [vmem:[%s0 + $0x8c] sm:$0xf]
  %v48 = vld [vmem:[%s0 + $0x90] sm:$0xf]
  %v49 = vld [vmem:[%s0 + $0x94] sm:$0xf]
  %v50 = vld [vmem:[%s0 + $0x98] sm:$0xf]
  %v51 = vld [vmem:[%s0 + $0x9c] sm:$0xf]
  %v52 = vld [vmem:[%s0 + $0xa0] sm:$0xf]
  %v53 = vld [vmem:[%s0 + $0xa4] sm:$0xf]
  %v54 = vld [vmem:[%s0 + $0xa8] sm:$0xf]
  %v55 = vld [vmem:[%s0 + $0xac] sm:$0xf]
  %v56 = vld [vmem:[%s0 + $0xb0] sm:$0xf]
  %v57 = vld [vmem:[%s0 + $0xb4] sm:$0xf]
  %v58 = vld [vmem:[%s0 + $0xb8] sm:$0xf]
  %v59 = vld [vmem:[%s0 + $0xbc] sm:$0xf]
  %v60 = vld [vmem:[%s0 + $0xc0] sm:$0xf]
  %v61 = vld [vmem:[%s0 + $0xc4] sm:$0xf]
  %v62 = vld [vmem:[%s0 + $0xc8] sm:$0xf]
  %v63 = vld [vmem:[%s0 + $0xcc] sm:$0xf]
  %v64 = vld [vmem:[%s0 + $0xd0] sm:$0xf]
  %v65 = vld [vmem:[%s0 + $0xd4] sm:$0xf]
  %v66 = vld [vmem:[%s0 + $0xd8] sm:$0xf]
  %v67 = vld [vmem:[%s0 + $0xdc] sm:$0xf]
  %v68 = vld [vmem:[%s0 + $0xe0] sm:$0xf]
  %v69 = vld [vmem:[%s0 + $0xe4] sm:$0xf]
  %v70 = vld [vmem:[%s0 + $0xe8] sm:$0xf]
  %v71 = vld [vmem:[%s0 + $0xec] sm:$0xf]
  %v72 = vld [vmem:[%s0 + $0xf0] sm:$0xf]
  %v73 = vld [vmem:[%s0 + $0xf4] sm:$0xf]
  %v74 = vld [vmem:[%s0 + $0xf8] sm:$0xf]
  %v75 = vld [vmem:[%s0 + $0xfc] sm:$0xf]
  %v76 = vld [vmem:[%s0 + $0x100] sm:$0xf]
  %v77 = vld [vmem:[%s0 + $0x104] sm:$0xf]
  %v78 = vld [vmem:[%s0 + $0x108] sm:$0xf]
  %v79 = vld [vmem:[%s0 + $0x10c] sm:$0xf]
  %v80 = vld [vmem:[%s0 + $0x110] sm:$0xf]
  %v81 = vld [vmem:[%s0 + $0x114] sm:$0xf]
  %v82 = vld [vmem:[%s0 + $0x118] sm:$0xf]
  %v83 = vld [vmem:[%s0 + $0x11c] sm:$0xf]
  %v84 = vld [vmem:[%s0 + $0x120] sm:$0xf]
  %v85 = vld [vmem:[%s0 + $0x124] sm:$0xf]
  %v86 = vld [vmem:[%s0 + $0x128] sm:$0xf]
  %v87 = vld [vmem:[%s0 + $0x12c] sm:$0xf]
  %v88 = vld [vmem:[%s0 + $0x130] sm:$0xf]
  %v89 = vld [vmem:[%s0 + $0x134] sm:$0xf]
  %v90 = vld [vmem:[%s0 + $0x138] sm:$0xf]
  %v91 = vld [vmem:[%s0 + $0x13c] sm:$0xf]
  %v92 = vld [vmem:[%s0 + $0x140] sm:$0xf]
  %v93 = vld [vmem:[%s0 + $0x144] sm:$0xf]
  %v94 = vld [vmem:[%s0 + $0x148] sm:$0xf]
  %v95 = vld [vmem:[%s0 + $0x14c] sm:$0xf]
  %v96 = vld [vmem:[%s0 + $0x150] sm:$0xf]
  %v97 = vld [vmem:[%s0 + $0x154] sm:$0xf]
  %v98 = vld [vmem:[%s0 + $0x158] sm:$0xf]
  %v99 = vld [vmem:[%s0 + $0x15c] sm:$0xf]
  %v100 = vld [vmem:[%s0 + $0x160] sm:$0xf]
  %v101 = vld [vmem:[%s0 + $0x164] sm:$0xf]
  %v102 = vld [vmem:[%s0 + $0x168] sm:$0xf]
  %v103 = vld [vmem:[%s0 + $0x16c] sm:$0xf]
  %v104 = vld [vmem:[%s0 + $0x170] sm:$0xf]
  %v105 = vld [vmem:[%s0 + $0x174] sm:$0xf]
  %v106 = vld [vmem:[%s0 + $0x178] sm:$0xf]
  %v107 = vld [vmem:[%s0 + $0x17c] sm:$0xf]
  %v108 = vld [vmem:[%s0 + $0x180] sm:$0xf]
  %v109 = vld [vmem:[%s0 + $0x184] sm:$0xf]
  %v110 = vld [vmem:[%s0 + $0x188] sm:$0xf]
  %v111 = vld [vmem:[%s0 + $0x18c] sm:$0xf]
  %v112 = vld [vmem:[%s0 + $0x190] sm:$0xf]
  %v113 = vld [vmem:[%s0 + $0x194] sm:$0xf]
  %v114 = vld [vmem:[%s0 + $0x198] sm:$0xf]
  %v115 = vld [vmem:[%s0 + $0x19c] sm:$0xf]
  %v116 = vld [vmem:[%s0 + $0x1a0] sm:$0xf]
  %v117 = vld [vmem:[%s0 + $0x1a4] sm:$0xf]
  %v118 = vld [vmem:[%s0 + $0x1a8] sm:$0xf]
  %v119 = vld [vmem:[%s0 + $0x1ac] sm:$0xf]
  %v120 = vld [vmem:[%s0 + $0x1b0] sm:$0xf]
  %v121 = vld [vmem:[%s0 + $0x1b4] sm:$0xf]
  %v122 = vld [vmem:[%s0 + $0x1b8] sm:$0xf]
  %v123 = vld [vmem:[%s0 + $0x1bc] sm:$0xf]
  %v124 = vld [vmem:[%s0 + $0x1c0] sm:$0xf]
  %v125 = vld [vmem:[%s0 + $0x1c4] sm:$0xf]
  %v126 = vld [vmem:[%s0 + $0x1c8] sm:$0xf]
  %v127 = vld [vmem:[%s0 + $0x1cc] sm:$0xf]
  %v128 = vld [vmem:[%s0 + $0x1d0] sm:$0xf]
  %v129 = vld [vmem:[%s0 + $0x1d4] sm:$0xf]
  %v130 = vld [vmem:[%s0 + $0x1d8] sm:$0xf]
  %v131 = vld [vmem:[%s0 + $0x1dc] sm:$0xf]
  %v132 = vld [vmem:[%s0 + $0x1e0] sm:$0xf]
  %v133 = vld [vmem:[%s0 + $0x1e4] sm:$0xf]
  %v134 = vld [vmem:[%s0 + $0x1e8] sm:$0xf]
  %v135 = vld [vmem:[%s0 + $0x1ec] sm:$0xf]
  %v136 = vld [vmem:[%s0 + $0x1f0] sm:$0xf]
  %v137 = vld [vmem:[%s0 + $0x1f4] sm:$0xf]
  %v138 = vld [vmem:[%s0 + $0x1f8] sm:$0xf]
  %v139 = vld [vmem:[%s0 + $0x1fc] sm:$0xf]
  %v140 = vld [vmem:[%s0 + $0x200] sm:$0xf]
  %v141 = vld [vmem:[%s0 + $0x204] sm:$0xf]
  %v142 = vld [vmem:[%s0 + $0x208] sm:$0xf]
  %v143 = vld [vmem:[%s0 + $0x20c] sm:$0xf]
  %v144 = vld [vmem:[%s0 + $0x210] sm:$0xf]
  %v145 = vld [vmem:[%s0 + $0x214] sm:$0xf]
  %v146 = vld [vmem:[%s0 + $0x218] sm:$0xf]
  %v147 = vld [vmem:[%s0 + $0x21c] sm:$0xf]
  %v148 = vld [vmem:[%s0 + $0x220] sm:$0xf]
  %v149 = vld [vmem:[%s0 + $0x224] sm:$0xf]
  %v150 = vld [vmem:[%s0 + $0x228] sm:$0xf]
  %v151 = vld [vmem:[%s0 + $0x22c] sm:$0xf]
  %v152 = vld [vmem:[%s0 + $0x230] sm:$0xf]
  %v153 = vld [vmem:[%s0 + $0x234] sm:$0xf]
  %v154 = vld [vmem:[%s0 + $0x238] sm:$0xf]
  %v155 = vld [vmem:[%s0 + $0x23c] sm:$0xf]
  %v156 = vld [vmem:[%s0 + $0x240] sm:$0xf]
  %v157 = vld [vmem:[%s0 + $0x244] sm:$0xf]
  %v158 = vld [vmem:[%s0 + $0x248] sm:$0xf]
  %v159 = vld [vmem:[%s0 + $0x24c] sm:$0xf]
  %v160 = vld [vmem:[%s0 + $0x250] sm:$0xf]
  %v161 = vld [vmem:[%s0 + $0x254] sm:$0xf]
  %v162 = vld [vmem:[%s0 + $0x258] sm:$0xf]
  %v163 = vld [vmem:[%s0 + $0x25c] sm:$0xf]
  %v164 = vld [vmem:[%s0 + $0x260] sm:$0xf]
  %v165 = vld [vmem:[%s0 + $0x264] sm:$0xf]
  %v166 = vld [vmem:[%s0 + $0x268] sm:$0xf]
  %v167 = vld [vmem:[%s0 + $0x26c] sm:$0xf]
  %v168 = vld [vmem:[%s0 + $0x270] sm:$0xf]
  %v169 = vld [vmem:[%s0 + $0x274] sm:$0xf]
  %v170 = vld [vmem:[%s0 + $0x278] sm:$0xf]
  %v171 = vld [vmem:[%s0 + $0x27c] sm:$0xf]
  %v172 = vld [vmem:[%s0 + $0x280] sm:$0xf]
  %v173 = vld [vmem:[%s0 + $0x284] sm:$0xf]
  %v174 = vld [vmem:[%s0 + $0x288] sm:$0xf]
  %v175 = vld [vmem:[%s0 + $0x28c] sm:$0xf]
  %v176 = vld [vmem:[%s0 + $0x290] sm:$0xf]
  %v177 = vld [vmem:[%s0 + $0x294] sm:$0xf]
  %v178 = vld [vmem:[%s0 + $0x298] sm:$0xf]
  %v179 = vld [vmem:[%s0 + $0x29c] sm:$0xf]
  %v180 = vld [vmem:[%s0 + $0x2a0] sm:$0xf]
  %v181 = vld [vmem:[%s0 + $0x2a4] sm:$0xf]
  %v182 = vld [vmem:[%s0 + $0x2a8] sm:$0xf]
  %v183 = vld [vmem:[%s0 + $0x2ac] sm:$0xf]
  %v184 = vld [vmem:[%s0 + $0x2b0] sm:$0xf]
  %v185 = vld [vmem:[%s0 + $0x2b4] sm:$0xf]
  %v186 = vld [vmem:[%s0 + $0x2b8] sm:$0xf]
  %v187 = vld [vmem:[%s0 + $0x2bc] sm:$0xf]
  %v188 = vld [vmem:[%s0 + $0x2c0] sm:$0xf]
  %v189 = vld [vmem:[%s0 + $0x2c4] sm:$0xf]
  %v190 = vld [vmem:[%s0 + $0x2c8] sm:$0xf]
  %v191 = vld [vmem:[%s0 + $0x2cc] sm:$0xf]
  %v192 = vld [vmem:[%s0 + $0x2d0] sm:$0xf]
  %v193 = vld [vmem:[%s0 + $0x2d4] sm:$0xf]
  %v194 = vld [vmem:[%s0 + $0x2d8] sm:$0xf]
  %v195 = vld [vmem:[%s0 + $0x2dc] sm:$0xf]
  %v196 = vld [vmem:[%s0 + $0x2e0] sm:$0xf]
  %v197 = vld [vmem:[%s0 + $0x2e4] sm:$0xf]
  %v198 = vld [vmem:[%s0 + $0x2e8] sm:$0xf]
  %v199 = vld [vmem:[%s0 + $0x2ec] sm:$0xf]
  %v200 = vld [vmem:[%s0 + $0x2f0] sm:$0xf]
  %v201 = vld [vmem:[%s0 + $0x2f4] sm:$0xf]
  %v202 = vld [vmem:[%s0 + $0x2f8] sm:$0xf]
  %v203 = vld [vmem:[%s0 + $0x2fc] sm:$0xf]
  %v204 = vld [vmem:[%s0 + $0x300] sm:$0xf]
  %v205 = vld [vmem:[%s0 + $0x304] sm:$0xf]
  %v206 = vld [vmem:[%s0 + $0x308] sm:$0xf]
  %v207 = vld [vmem:[%s0 + $0x30c] sm:$0xf]
  %v208 = vld [vmem:[%s0 + $0x310] sm:$0xf]
  %v209 = vld [vmem:[%s0 + $0x314] sm:$0xf]
  %v210 = vld [vmem:[%s0 + $0x318] sm:$0xf]
  %v211 = vld [vmem:[%s0 + $0x31c] sm:$0xf]
  %v212 = vld [vmem:[%s0 + $0x320] sm:$0xf]
  %v213 = vld [vmem:[%s0 + $0x324] sm:$0xf]
  %v214 = vld [vmem:[%s0 + $0x328] sm:$0xf]
  %v215 = vld [vmem:[%s0 + $0x32c] sm:$0xf]
  %v216 = vld [vmem:[%s0 + $0x330] sm:$0xf]
  %v217 = vld [vmem:[%s0 + $0x334] sm:$0xf]
  %v218 = vld [vmem:[%s0 + $0x338] sm:$0xf]
  %v219 = vld [vmem:[%s0 + $0x33c] sm:$0xf]
  %v220 = vld [vmem:[%s0 + $0x340] sm:$0xf]
  %v221 = vld [vmem:[%s0 + $0x344] sm:$0xf]
  %v222 = vld [vmem:[%s0 + $0x348] sm:$0xf]
  %v223 = vld [vmem:[%s0 + $0x34c] sm:$0xf]
  %v224 = vld [vmem:[%s0 + $0x350] sm:$0xf]
  %v225 = vld [vmem:[%s0 + $0x354] sm:$0xf]
  %v226 = vld [vmem:[%s0 + $0x358] sm:$0xf]
  %v227 = vld [vmem:[%s0 + $0x35c] sm:$0xf]
  %v228 = vld [vmem:[%s0 + $0x360] sm:$0xf]
  %v229 = vld [vmem:[%s0 + $0x364] sm:$0xf]
  %v230 = vld [vmem:[%s0 + $0x368] sm:$0xf]
  %v231 = vld [vmem:[%s0 + $0x36c] sm:$0xf]
  %v232 = vld [vmem:[%s0 + $0x370] sm:$0xf]
  %v233 = vld [vmem:[%s0 + $0x374] sm:$0xf]
  %v234 = vld [vmem:[%s0 + $0x378] sm:$0xf]
  %v235 = vld [vmem:[%s0 + $0x37c] sm:$0xf]
  %v236 = vld [vmem:[%s0 + $0x380] sm:$0xf]
  %v237 = vld [vmem:[%s0 + $0x384] sm:$0xf]
  %v238 = vld [vmem:[%s0 + $0x388] sm:$0xf]
  %v239 = vld [vmem:[%s0 + $0x38c] sm:$0xf]
  %v240 = vld [vmem:[%s0 + $0x390] sm:$0xf]
  %v241 = vld [vmem:[%s0 + $0x394] sm:$0xf]
  %v242 = vld [vmem:[%s0 + $0x398] sm:$0xf]
  %v243 = vld [vmem:[%s0 + $0x39c] sm:$0xf]
  %v244 = vld [vmem:[%s0 + $0x3a0] sm:$0xf]
  %v245 = vld [vmem:[%s0 + $0x3a4] sm:$0xf]
  %v246 = vld [vmem:[%s0 + $0x3a8] sm:$0xf]
  %v247 = vld [vmem:[%s0 + $0x3ac] sm:$0xf]
  %v248 = vld [vmem:[%s0 + $0x3b0] sm:$0xf]
  %v249 = vld [vmem:[%s0 + $0x3b4] sm:$0xf]
  %v250 = vld [vmem:[%s0 + $0x3b8] sm:$0xf]
  %v251 = vld [vmem:[%s0 + $0x3bc] sm:$0xf]
  %v252 = vld [vmem:[%s0 + $0x3c0] sm:$0xf]
  %v253 = vld [vmem:[%s0 + $0x3c4] sm:$0xf]
  %v254 = vld [vmem:[%s0 + $0x3c8] sm:$0xf]
  %v255 = vld [vmem:[%s0 + $0x3cc] sm:$0xf]
  %v256 = vld [vmem:[%s0 + $0x3d0] sm:$0xf]
  %v257 = vld [vmem:[%s0 + $0x3d4] sm:$0xf]
  %v258 = vld [vmem:[%s0 + $0x3d8] sm:$0xf]
  %v259 = vld [vmem:[%s0 + $0x3dc] sm:$0xf]
  %v260 = vld [vmem:[%s0 + $0x3e0] sm:$0xf]
  %v261 = vld [vmem:[%s0 + $0x3e4] sm:$0xf]
  %v262 = vld [vmem:[%s0 + $0x3e8] sm:$0xf]
  %v263 = vld [vmem:[%s0 + $0x3ec] sm:$0xf]
  %v264 = vld [vmem:[%s0 + $0x3f0] sm:$0xf]
  %v265 = vld [vmem:[%s0 + $0x3f4] sm:$0xf]
  %v266 = vld [vmem:[%s0 + $0x3f8] sm:$0xf]
  %v267 = vld [vmem:[%s0 + $0x3fc] sm:$0xf]
  %v268 = vld [vmem:[%s1] sm:$0xf]
  %v269 = vld [vmem:[%s1 + $0x4] sm:$0xf]
  %v270 = vld [vmem:[%s1 + $0x8] sm:$0xf]
  %v271 = vld [vmem:[%s1 + $0xc] sm:$0xf]
  %v272 = vld [vmem:[%s1 + $0x10] sm:$0x3]
  %v529 = vunpack.c.l.b16 %v12
  %v530 = vunpack.c.l.b16 %v13
  %v531 = vunpack.c.l.b16 %v14
  %v532 = vunpack.c.l.b16 %v15
  %v533 = vunpack.c.l.b16 %v16
  %v534 = vunpack.c.l.b16 %v17
  %v535 = vunpack.c.l.b16 %v18
  %v536 = vunpack.c.l.b16 %v19
  %v537 = vunpack.c.l.b16 %v20
  %v538 = vunpack.c.l.b16 %v21
  %v539 = vunpack.c.l.b16 %v22
  %v540 = vunpack.c.l.b16 %v23
  %v541 = vunpack.c.l.b16 %v24
  %v542 = vunpack.c.l.b16 %v25
  %v543 = vunpack.c.l.b16 %v26
  %v544 = vunpack.c.l.b16 %v27
  %v545 = vunpack.c.l.b16 %v28
  %v546 = vunpack.c.l.b16 %v29
  %v547 = vunpack.c.l.b16 %v30
  %v548 = vunpack.c.l.b16 %v31
  %v549 = vunpack.c.l.b16 %v32
  %v550 = vunpack.c.l.b16 %v33
  %v551 = vunpack.c.l.b16 %v34
  %v552 = vunpack.c.l.b16 %v35
  %v553 = vunpack.c.l.b16 %v36
  %v554 = vunpack.c.l.b16 %v37
  %v555 = vunpack.c.l.b16 %v38
  %v556 = vunpack.c.l.b16 %v39
  %v557 = vunpack.c.l.b16 %v40
  %v558 = vunpack.c.l.b16 %v41
  %v559 = vunpack.c.l.b16 %v42
  %v560 = vunpack.c.l.b16 %v43
  %v561 = vunpack.c.l.b16 %v44
  %v562 = vunpack.c.l.b16 %v45
  %v563 = vunpack.c.l.b16 %v46
  %v564 = vunpack.c.l.b16 %v47
  %v565 = vunpack.c.l.b16 %v48
  %v566 = vunpack.c.l.b16 %v49
  %v567 = vunpack.c.l.b16 %v50
  %v568 = vunpack.c.l.b16 %v51
  %v569 = vunpack.c.l.b16 %v52
  %v570 = vunpack.c.l.b16 %v53
  %v571 = vunpack.c.l.b16 %v54
  %v572 = vunpack.c.l.b16 %v55
  %v573 = vunpack.c.l.b16 %v56
  %v574 = vunpack.c.l.b16 %v57
  %v575 = vunpack.c.l.b16 %v58
  %v576 = vunpack.c.l.b16 %v59
  %v577 = vunpack.c.l.b16 %v60
  %v578 = vunpack.c.l.b16 %v61
  %v579 = vunpack.c.l.b16 %v62
  %v580 = vunpack.c.l.b16 %v63
  %v581 = vunpack.c.l.b16 %v64
  %v582 = vunpack.c.l.b16 %v65
  %v583 = vunpack.c.l.b16 %v66
  %v584 = vunpack.c.l.b16 %v67
  %v585 = vunpack.c.l.b16 %v68
  %v586 = vunpack.c.l.b16 %v69
  %v587 = vunpack.c.l.b16 %v70
  %v588 = vunpack.c.l.b16 %v71
  %v589 = vunpack.c.l.b16 %v72
  %v590 = vunpack.c.l.b16 %v73
  %v591 = vunpack.c.l.b16 %v74
  %v592 = vunpack.c.l.b16 %v75
  %v593 = vunpack.c.l.b16 %v76
  %v594 = vunpack.c.l.b16 %v77
  %v595 = vunpack.c.l.b16 %v78
  %v596 = vunpack.c.l.b16 %v79
  %v597 = vunpack.c.l.b16 %v80
  %v598 = vunpack.c.l.b16 %v81
  %v599 = vunpack.c.l.b16 %v82
  %v600 = vunpack.c.l.b16 %v83
  %v601 = vunpack.c.l.b16 %v84
  %v602 = vunpack.c.l.b16 %v85
  %v603 = vunpack.c.l.b16 %v86
  %v604 = vunpack.c.l.b16 %v87
  %v605 = vunpack.c.l.b16 %v88
  %v606 = vunpack.c.l.b16 %v89
  %v607 = vunpack.c.l.b16 %v90
  %v608 = vunpack.c.l.b16 %v91
  %v609 = vunpack.c.l.b16 %v92
  %v610 = vunpack.c.l.b16 %v93
  %v611 = vunpack.c.l.b16 %v94
  %v612 = vunpack.c.l.b16 %v95
  %v613 = vunpack.c.l.b16 %v96
  %v614 = vunpack.c.l.b16 %v97
  %v615 = vunpack.c.l.b16 %v98
  %v616 = vunpack.c.l.b16 %v99
  %v617 = vunpack.c.l.b16 %v100
  %v618 = vunpack.c.l.b16 %v101
  %v619 = vunpack.c.l.b16 %v102
  %v620 = vunpack.c.l.b16 %v103
  %v621 = vunpack.c.l.b16 %v104
  %v622 = vunpack.c.l.b16 %v105
  %v623 = vunpack.c.l.b16 %v106
  %v624 = vunpack.c.l.b16 %v107
  %v625 = vunpack.c.l.b16 %v108
  %v626 = vunpack.c.l.b16 %v109
  %v627 = vunpack.c.l.b16 %v110
  %v628 = vunpack.c.l.b16 %v111
  %v629 = vunpack.c.l.b16 %v112
  %v630 = vunpack.c.l.b16 %v113
  %v631 = vunpack.c.l.b16 %v114
  %v632 = vunpack.c.l.b16 %v115
  %v633 = vunpack.c.l.b16 %v116
  %v634 = vunpack.c.l.b16 %v117
  %v635 = vunpack.c.l.b16 %v118
  %v636 = vunpack.c.l.b16 %v119
  %v637 = vunpack.c.l.b16 %v120
  %v638 = vunpack.c.l.b16 %v121
  %v639 = vunpack.c.l.b16 %v122
  %v640 = vunpack.c.l.b16 %v123
  %v641 = vunpack.c.l.b16 %v124
  %v642 = vunpack.c.l.b16 %v125
  %v643 = vunpack.c.l.b16 %v126
  %v644 = vunpack.c.l.b16 %v127
  %v645 = vunpack.c.l.b16 %v128
  %v646 = vunpack.c.l.b16 %v129
  %v647 = vunpack.c.l.b16 %v130
  %v648 = vunpack.c.l.b16 %v131
  %v649 = vunpack.c.l.b16 %v132
  %v650 = vunpack.c.l.b16 %v133
  %v651 = vunpack.c.l.b16 %v134
  %v652 = vunpack.c.l.b16 %v135
  %v653 = vunpack.c.l.b16 %v136
  %v654 = vunpack.c.l.b16 %v137
  %v655 = vunpack.c.l.b16 %v138
  %v656 = vunpack.c.l.b16 %v139
  %v657 = vunpack.c.l.b16 %v140
  %v658 = vunpack.c.l.b16 %v141
  %v659 = vunpack.c.l.b16 %v142
  %v660 = vunpack.c.l.b16 %v143
  %v661 = vunpack.c.l.b16 %v144
  %v662 = vunpack.c.l.b16 %v145
  %v663 = vunpack.c.l.b16 %v146
  %v664 = vunpack.c.l.b16 %v147
  %v665 = vunpack.c.l.b16 %v148
  %v666 = vunpack.c.l.b16 %v149
  %v667 = vunpack.c.l.b16 %v150
  %v668 = vunpack.c.l.b16 %v151
  %v669 = vunpack.c.l.b16 %v152
  %v670 = vunpack.c.l.b16 %v153
  %v671 = vunpack.c.l.b16 %v154
  %v672 = vunpack.c.l.b16 %v155
  %v673 = vunpack.c.l.b16 %v156
  %v674 = vunpack.c.l.b16 %v157
  %v675 = vunpack.c.l.b16 %v158
  %v676 = vunpack.c.l.b16 %v159
  %v677 = vunpack.c.l.b16 %v160
  %v678 = vunpack.c.l.b16 %v161
  %v679 = vunpack.c.l.b16 %v162
  %v680 = vunpack.c.l.b16 %v163
  %v681 = vunpack.c.l.b16 %v164
  %v682 = vunpack.c.l.b16 %v165
  %v683 = vunpack.c.l.b16 %v166
  %v684 = vunpack.c.l.b16 %v167
  %v685 = vunpack.c.l.b16 %v168
  %v686 = vunpack.c.l.b16 %v169
  %v687 = vunpack.c.l.b16 %v170
  %v688 = vunpack.c.l.b16 %v171
  %v689 = vunpack.c.l.b16 %v172
  %v690 = vunpack.c.l.b16 %v173
  %v691 = vunpack.c.l.b16 %v174
  %v692 = vunpack.c.l.b16 %v175
  %v693 = vunpack.c.l.b16 %v176
  %v694 = vunpack.c.l.b16 %v177
  %v695 = vunpack.c.l.b16 %v178
  %v696 = vunpack.c.l.b16 %v179
  %v697 = vunpack.c.l.b16 %v180
  %v698 = vunpack.c.l.b16 %v181
  %v699 = vunpack.c.l.b16 %v182
  %v700 = vunpack.c.l.b16 %v183
  %v701 = vunpack.c.l.b16 %v184
  %v702 = vunpack.c.l.b16 %v185
  %v703 = vunpack.c.l.b16 %v186
  %v704 = vunpack.c.l.b16 %v187
  %v705 = vunpack.c.l.b16 %v188
  %v706 = vunpack.c.l.b16 %v189
  %v707 = vunpack.c.l.b16 %v190
  %v708 = vunpack.c.l.b16 %v191
  %v709 = vunpack.c.l.b16 %v192
  %v710 = vunpack.c.l.b16 %v193
  %v711 = vunpack.c.l.b16 %v194
  %v712 = vunpack.c.l.b16 %v195
  %v713 = vunpack.c.l.b16 %v196
  %v714 = vunpack.c.l.b16 %v197
  %v715 = vunpack.c.l.b16 %v198
  %v716 = vunpack.c.l.b16 %v199
  %v717 = vunpack.c.l.b16 %v200
  %v718 = vunpack.c.l.b16 %v201
  %v719 = vunpack.c.l.b16 %v202
  %v720 = vunpack.c.l.b16 %v203
  %v721 = vunpack.c.l.b16 %v204
  %v722 = vunpack.c.l.b16 %v205
  %v723 = vunpack.c.l.b16 %v206
  %v724 = vunpack.c.l.b16 %v207
  %v725 = vunpack.c.l.b16 %v208
  %v726 = vunpack.c.l.b16 %v209
  %v727 = vunpack.c.l.b16 %v210
  %v728 = vunpack.c.l.b16 %v211
  %v729 = vunpack.c.l.b16 %v212
  %v730 = vunpack.c.l.b16 %v213
  %v731 = vunpack.c.l.b16 %v214
  %v732 = vunpack.c.l.b16 %v215
  %v733 = vunpack.c.l.b16 %v216
  %v734 = vunpack.c.l.b16 %v217
  %v735 = vunpack.c.l.b16 %v218
  %v736 = vunpack.c.l.b16 %v219
  %v737 = vunpack.c.l.b16 %v220
  %v738 = vunpack.c.l.b16 %v221
  %v739 = vunpack.c.l.b16 %v222
  %v740 = vunpack.c.l.b16 %v223
  %v741 = vunpack.c.l.b16 %v224
  %v742 = vunpack.c.l.b16 %v225
  %v743 = vunpack.c.l.b16 %v226
  %v744 = vunpack.c.l.b16 %v227
  %v745 = vunpack.c.l.b16 %v228
  %v746 = vunpack.c.l.b16 %v229
  %v747 = vunpack.c.l.b16 %v230
  %v748 = vunpack.c.l.b16 %v231
  %v749 = vunpack.c.l.b16 %v232
  %v750 = vunpack.c.l.b16 %v233
  %v751 = vunpack.c.l.b16 %v234
  %v752 = vunpack.c.l.b16 %v235
  %v753 = vunpack.c.l.b16 %v236
  %v754 = vunpack.c.l.b16 %v237
  %v755 = vunpack.c.l.b16 %v238
  %v756 = vunpack.c.l.b16 %v239
  %v757 = vunpack.c.l.b16 %v240
  %v758 = vunpack.c.l.b16 %v241
  %v759 = vunpack.c.l.b16 %v242
  %v760 = vunpack.c.l.b16 %v243
  %v761 = vunpack.c.l.b16 %v244
  %v762 = vunpack.c.l.b16 %v245
  %v763 = vunpack.c.l.b16 %v246
  %v764 = vunpack.c.l.b16 %v247
  %v765 = vunpack.c.l.b16 %v248
  %v766 = vunpack.c.l.b16 %v249
  %v767 = vunpack.c.l.b16 %v250
  %v768 = vunpack.c.l.b16 %v251
  %v769 = vunpack.c.l.b16 %v252
  %v770 = vunpack.c.l.b16 %v253
  %v771 = vunpack.c.l.b16 %v254
  %v772 = vunpack.c.l.b16 %v255
  %v773 = vunpack.c.l.b16 %v256
  %v774 = vunpack.c.l.b16 %v257
  %v775 = vunpack.c.l.b16 %v258
  %v776 = vunpack.c.l.b16 %v259
  %v777 = vunpack.c.l.b16 %v260
  %v778 = vunpack.c.l.b16 %v261
  %v779 = vunpack.c.l.b16 %v262
  %v780 = vunpack.c.l.b16 %v263
  %v781 = vunpack.c.l.b16 %v264
  %v782 = vunpack.c.l.b16 %v265
  %v783 = vunpack.c.l.b16 %v266
  %v784 = vunpack.c.l.b16 %v267
  %v785 = vpack.c.b16 %v530, %v529
  %v786 = vpack.c.b16 %v532, %v531
  %v787 = vpack.c.b16 %v534, %v533
  %v788 = vpack.c.b16 %v536, %v535
  %v789 = vpack.c.b16 %v538, %v537
  %v790 = vpack.c.b16 %v540, %v539
  %v791 = vpack.c.b16 %v542, %v541
  %v792 = vpack.c.b16 %v544, %v543
  %v793 = vpack.c.b16 %v546, %v545
  %v794 = vpack.c.b16 %v548, %v547
  %v795 = vpack.c.b16 %v550, %v549
  %v796 = vpack.c.b16 %v552, %v551
  %v797 = vpack.c.b16 %v554, %v553
  %v798 = vpack.c.b16 %v556, %v555
  %v799 = vpack.c.b16 %v558, %v557
  %v800 = vpack.c.b16 %v560, %v559
  %v801 = vpack.c.b16 %v562, %v561
  %v802 = vpack.c.b16 %v564, %v563
  %v803 = vpack.c.b16 %v566, %v565
  %v804 = vpack.c.b16 %v568, %v567
  %v805 = vpack.c.b16 %v570, %v569
  %v806 = vpack.c.b16 %v572, %v571
  %v807 = vpack.c.b16 %v574, %v573
  %v808 = vpack.c.b16 %v576, %v575
  %v809 = vpack.c.b16 %v578, %v577
  %v810 = vpack.c.b16 %v580, %v579
  %v811 = vpack.c.b16 %v582, %v581
  %v812 = vpack.c.b16 %v584, %v583
  %v813 = vpack.c.b16 %v586, %v585
  %v814 = vpack.c.b16 %v588, %v587
  %v815 = vpack.c.b16 %v590, %v589
  %v816 = vpack.c.b16 %v592, %v591
  %v817 = vpack.c.b16 %v594, %v593
  %v818 = vpack.c.b16 %v596, %v595
  %v819 = vpack.c.b16 %v598, %v597
  %v820 = vpack.c.b16 %v600, %v599
  %v821 = vpack.c.b16 %v602, %v601
  %v822 = vpack.c.b16 %v604, %v603
  %v823 = vpack.c.b16 %v606, %v605
  %v824 = vpack.c.b16 %v608, %v607
  %v825 = vpack.c.b16 %v610, %v609
  %v826 = vpack.c.b16 %v612, %v611
  %v827 = vpack.c.b16 %v614, %v613
  %v828 = vpack.c.b16 %v616, %v615
  %v829 = vpack.c.b16 %v618, %v617
  %v830 = vpack.c.b16 %v620, %v619
  %v831 = vpack.c.b16 %v622, %v621
  %v832 = vpack.c.b16 %v624, %v623
  %v833 = vpack.c.b16 %v626, %v625
  %v834 = vpack.c.b16 %v628, %v627
  %v835 = vpack.c.b16 %v630, %v629
  %v836 = vpack.c.b16 %v632, %v631
  %v837 = vpack.c.b16 %v634, %v633
  %v838 = vpack.c.b16 %v636, %v635
  %v839 = vpack.c.b16 %v638, %v637
  %v840 = vpack.c.b16 %v640, %v639
  %v841 = vpack.c.b16 %v642, %v641
  %v842 = vpack.c.b16 %v644, %v643
  %v843 = vpack.c.b16 %v646, %v645
  %v844 = vpack.c.b16 %v648, %v647
  %v845 = vpack.c.b16 %v650, %v649
  %v846 = vpack.c.b16 %v652, %v651
  %v847 = vpack.c.b16 %v654, %v653
  %v848 = vpack.c.b16 %v656, %v655
  %v849 = vpack.c.b16 %v658, %v657
  %v850 = vpack.c.b16 %v660, %v659
  %v851 = vpack.c.b16 %v662, %v661
  %v852 = vpack.c.b16 %v664, %v663
  %v853 = vpack.c.b16 %v666, %v665
  %v854 = vpack.c.b16 %v668, %v667
  %v855 = vpack.c.b16 %v670, %v669
  %v856 = vpack.c.b16 %v672, %v671
  %v857 = vpack.c.b16 %v674, %v673
  %v858 = vpack.c.b16 %v676, %v675
  %v859 = vpack.c.b16 %v678, %v677
  %v860 = vpack.c.b16 %v680, %v679
  %v861 = vpack.c.b16 %v682, %v681
  %v862 = vpack.c.b16 %v684, %v683
  %v863 = vpack.c.b16 %v686, %v685
  %v864 = vpack.c.b16 %v688, %v687
  %v865 = vpack.c.b16 %v690, %v689
  %v866 = vpack.c.b16 %v692, %v691
  %v867 = vpack.c.b16 %v694, %v693
  %v868 = vpack.c.b16 %v696, %v695
  %v869 = vpack.c.b16 %v698, %v697
  %v870 = vpack.c.b16 %v700, %v699
  %v871 = vpack.c.b16 %v702, %v701
  %v872 = vpack.c.b16 %v704, %v703
  %v873 = vpack.c.b16 %v706, %v705
  %v874 = vpack.c.b16 %v708, %v707
  %v875 = vpack.c.b16 %v710, %v709
  %v876 = vpack.c.b16 %v712, %v711
  %v877 = vpack.c.b16 %v714, %v713
  %v878 = vpack.c.b16 %v716, %v715
  %v879 = vpack.c.b16 %v718, %v717
  %v880 = vpack.c.b16 %v720, %v719
  %v881 = vpack.c.b16 %v722, %v721
  %v882 = vpack.c.b16 %v724, %v723
  %v883 = vpack.c.b16 %v726, %v725
  %v884 = vpack.c.b16 %v728, %v727
  %v885 = vpack.c.b16 %v730, %v729
  %v886 = vpack.c.b16 %v732, %v731
  %v887 = vpack.c.b16 %v734, %v733
  %v888 = vpack.c.b16 %v736, %v735
  %v889 = vpack.c.b16 %v738, %v737
  %v890 = vpack.c.b16 %v740, %v739
  %v891 = vpack.c.b16 %v742, %v741
  %v892 = vpack.c.b16 %v744, %v743
  %v893 = vpack.c.b16 %v746, %v745
  %v894 = vpack.c.b16 %v748, %v747
  %v895 = vpack.c.b16 %v750, %v749
  %v896 = vpack.c.b16 %v752, %v751
  %v897 = vpack.c.b16 %v754, %v753
  %v898 = vpack.c.b16 %v756, %v755
  %v899 = vpack.c.b16 %v758, %v757
  %v900 = vpack.c.b16 %v760, %v759
  %v901 = vpack.c.b16 %v762, %v761
  %v902 = vpack.c.b16 %v764, %v763
  %v903 = vpack.c.b16 %v766, %v765
  %v904 = vpack.c.b16 %v768, %v767
  %v905 = vpack.c.b16 %v770, %v769
  %v906 = vpack.c.b16 %v772, %v771
  %v907 = vpack.c.b16 %v774, %v773
  %v908 = vpack.c.b16 %v776, %v775
  %v909 = vpack.c.b16 %v778, %v777
  %v910 = vpack.c.b16 %v780, %v779
  %v911 = vpack.c.b16 %v782, %v781
  %v912 = vpack.c.b16 %v784, %v783
  %v918 = vunpack.c.l.b16 %v268
  %v919 = vunpack.c.l.b16 %v269
  %v920 = vunpack.c.l.b16 %v270
  %v921 = vunpack.c.l.b16 %v271
  %v922 = vunpack.c.l.b16 %v272
  %v923 = vpack.c.b16 %v919, %v918
  %v924 = vpack.c.b16 %v921, %v920
  %v925 = vpack.c.b16 %v922, %v922
  %vm928 = vcmask 293888
  %v930 = vsel %vm928, %v785, 0
  %v933 = vsel %vm928, %v786, 0
  %v936 = vsel %vm928, %v787, 0
  %v939 = vsel %vm928, %v788, 0
  %v942 = vsel %vm928, %v789, 0
  %v945 = vsel %vm928, %v790, 0
  %v948 = vsel %vm928, %v791, 0
  %v951 = vsel %vm928, %v792, 0
  %v954 = vsel %vm928, %v793, 0
  %v957 = vsel %vm928, %v794, 0
  %v960 = vsel %vm928, %v795, 0
  %v963 = vsel %vm928, %v796, 0
  %v966 = vsel %vm928, %v797, 0
  %v969 = vsel %vm928, %v798, 0
  %v972 = vsel %vm928, %v799, 0
  %v975 = vsel %vm928, %v800, 0
  %v978 = vsel %vm928, %v801, 0
  %v981 = vsel %vm928, %v802, 0
  %v984 = vsel %vm928, %v803, 0
  %v987 = vsel %vm928, %v804, 0
  %v990 = vsel %vm928, %v805, 0
  %v993 = vsel %vm928, %v806, 0
  %v996 = vsel %vm928, %v807, 0
  %v999 = vsel %vm928, %v808, 0
  %v1002 = vsel %vm928, %v809, 0
  %v1005 = vsel %vm928, %v810, 0
  %v1008 = vsel %vm928, %v811, 0
  %v1011 = vsel %vm928, %v812, 0
  %v1014 = vsel %vm928, %v813, 0
  %v1017 = vsel %vm928, %v814, 0
  %v1020 = vsel %vm928, %v815, 0
  %v1023 = vsel %vm928, %v816, 0
  %v1026 = vsel %vm928, %v817, 0
  %v1029 = vsel %vm928, %v818, 0
  %v1032 = vsel %vm928, %v819, 0
  %v1035 = vsel %vm928, %v820, 0
  %v1038 = vsel %vm928, %v821, 0
  %v1041 = vsel %vm928, %v822, 0
  %v1044 = vsel %vm928, %v823, 0
  %v1047 = vsel %vm928, %v824, 0
  %v1050 = vsel %vm928, %v825, 0
  %v1053 = vsel %vm928, %v826, 0
  %v1056 = vsel %vm928, %v827, 0
  %v1059 = vsel %vm928, %v828, 0
  %v1062 = vsel %vm928, %v829, 0
  %v1065 = vsel %vm928, %v830, 0
  %v1068 = vsel %vm928, %v831, 0
  %v1071 = vsel %vm928, %v832, 0
  %v1074 = vsel %vm928, %v833, 0
  %v1077 = vsel %vm928, %v834, 0
  %v1080 = vsel %vm928, %v835, 0
  %v1083 = vsel %vm928, %v836, 0
  %v1086 = vsel %vm928, %v837, 0
  %v1089 = vsel %vm928, %v838, 0
  %v1092 = vsel %vm928, %v839, 0
  %v1095 = vsel %vm928, %v840, 0
  %v1098 = vsel %vm928, %v841, 0
  %v1101 = vsel %vm928, %v842, 0
  %v1104 = vsel %vm928, %v843, 0
  %v1107 = vsel %vm928, %v844, 0
  %v1110 = vsel %vm928, %v845, 0
  %v1113 = vsel %vm928, %v846, 0
  %v1116 = vsel %vm928, %v847, 0
  %v1119 = vsel %vm928, %v848, 0
  %v1122 = vsel %vm928, %v849, 0
  %v1125 = vsel %vm928, %v850, 0
  %v1128 = vsel %vm928, %v851, 0
  %v1131 = vsel %vm928, %v852, 0
  %v1134 = vsel %vm928, %v853, 0
  %v1137 = vsel %vm928, %v854, 0
  %v1140 = vsel %vm928, %v855, 0
  %v1143 = vsel %vm928, %v856, 0
  %v1146 = vsel %vm928, %v857, 0
  %v1149 = vsel %vm928, %v858, 0
  %v1152 = vsel %vm928, %v859, 0
  %v1155 = vsel %vm928, %v860, 0
  %v1158 = vsel %vm928, %v861, 0
  %v1161 = vsel %vm928, %v862, 0
  %v1164 = vsel %vm928, %v863, 0
  %v1167 = vsel %vm928, %v864, 0
  %v1170 = vsel %vm928, %v865, 0
  %v1173 = vsel %vm928, %v866, 0
  %v1176 = vsel %vm928, %v867, 0
  %v1179 = vsel %vm928, %v868, 0
  %v1182 = vsel %vm928, %v869, 0
  %v1185 = vsel %vm928, %v870, 0
  %v1188 = vsel %vm928, %v871, 0
  %v1191 = vsel %vm928, %v872, 0
  %v1194 = vsel %vm928, %v873, 0
  %v1197 = vsel %vm928, %v874, 0
  %v1200 = vsel %vm928, %v875, 0
  %v1203 = vsel %vm928, %v876, 0
  %v1206 = vsel %vm928, %v877, 0
  %v1209 = vsel %vm928, %v878, 0
  %v1212 = vsel %vm928, %v879, 0
  %v1215 = vsel %vm928, %v880, 0
  %v1218 = vsel %vm928, %v881, 0
  %v1221 = vsel %vm928, %v882, 0
  %v1224 = vsel %vm928, %v883, 0
  %v1227 = vsel %vm928, %v884, 0
  %v1230 = vsel %vm928, %v885, 0
  %v1233 = vsel %vm928, %v886, 0
  %v1236 = vsel %vm928, %v887, 0
  %v1239 = vsel %vm928, %v888, 0
  %v1242 = vsel %vm928, %v889, 0
  %v1245 = vsel %vm928, %v890, 0
  %v1248 = vsel %vm928, %v891, 0
  %v1251 = vsel %vm928, %v892, 0
  %v1254 = vsel %vm928, %v893, 0
  %v1257 = vsel %vm928, %v894, 0
  %v1260 = vsel %vm928, %v895, 0
  %v1263 = vsel %vm928, %v896, 0
  %v1266 = vsel %vm928, %v897, 0
  %v1269 = vsel %vm928, %v898, 0
  %v1272 = vsel %vm928, %v899, 0
  %v1275 = vsel %vm928, %v900, 0
  %v1278 = vsel %vm928, %v901, 0
  %v1281 = vsel %vm928, %v902, 0
  %v1284 = vsel %vm928, %v903, 0
  %v1287 = vsel %vm928, %v904, 0
  %v1290 = vsel %vm928, %v905, 0
  %v1293 = vsel %vm928, %v906, 0
  %v1296 = vsel %vm928, %v907, 0
  %v1299 = vsel %vm928, %v908, 0
  %v1302 = vsel %vm928, %v909, 0
  %v1305 = vsel %vm928, %v910, 0
  %v1308 = vsel %vm928, %v911, 0
  %v1311 = vsel %vm928, %v912, 0
  %vm1313 = vcmask 1041408
  %v1315 = vsel %vm1313, %v925, 0
  %1317 = vmatprep.subr.bf16.mxu0 0
  %1318 = vmatpush1.bf16.msra.mxu0 %v923
  %1319 = vmatprep.subr.bf16.mxu0 0
  %1320 = vmatpush1.bf16.msra.mxu0 %v924
  %1321 = vmatprep.subr.bf16.mxu0 0
  %1322 = vmatpush1.bf16.msra.mxu0 %v1315
  %1323 = vmatprep.subr.bf16.mxu0 0
  %1324 = vmatpush1.bf16.msra.mxu0 0
  %1325 = vmatprep.subr.bf16.mxu0 0
  %1326 = vmatpush1.bf16.msra.mxu0 0
  %1327 = vmatprep.subr.bf16.mxu0 0
  %1328 = vmatpush1.bf16.msra.mxu0 0
  %1329 = vmatprep.subr.bf16.mxu0 0
  %1330 = vmatpush1.bf16.msra.mxu0 0
  %1331 = vmatprep.subr.bf16.mxu0 0
  %1332 = vmatpush1.bf16.msra.mxu0 0
  %1333 = vmatprep.subr.bf16.mxu0 0
  %1334 = vmatpush1.bf16.msra.mxu0 0
  %1335 = vmatprep.subr.bf16.mxu0 0
  %1336 = vmatpush1.bf16.msra.mxu0 0
  %1337 = vmatprep.subr.bf16.mxu0 0
  %1338 = vmatpush1.bf16.msra.mxu0 0
  %1339 = vmatprep.subr.bf16.mxu0 0
  %1340 = vmatpush1.bf16.msra.mxu0 0
  %1341 = vmatprep.subr.bf16.mxu0 0
  %1342 = vmatpush1.bf16.msra.mxu0 0
  %1343 = vmatprep.subr.bf16.mxu0 0
  %1344 = vmatpush1.bf16.msra.mxu0 0
  %1345 = vmatprep.subr.bf16.mxu0 0
  %1346 = vmatpush1.bf16.msra.mxu0 0
  %1347 = vmatprep.subr.bf16.mxu0 0
  %1348 = vmatpush1.bf16.msra.mxu0 0
  %1349 = vmatprep.mubr.bf16.mxu0 0
  %1350 = vmatmul.mubr.bf16.gmra.mrb[0].mxu0 %v930
  %v1351 = vpop.f32.mrb[0].mxu0
  %v1352 = vadd.f32 0.0, %v1351
  %v1353 = vpop.f32.mrb[0].mxu0
  %v1354 = vpop.f32.mrb[0].mxu0
  %v1355 = vadd.f32 0.0, %v1354
  %v1356 = vpop.f32.mrb[0].mxu0
  %1357 = vmatprep.mubr.bf16.mxu0 0
  %1358 = vmatmul.mubr.bf16.gmra.mrb[0].mxu0 %v933
  %v1359 = vpop.f32.mrb[0].mxu0
  %v1360 = vadd.f32 0.0, %v1359
  %v1361 = vpop.f32.mrb[0].mxu0
  %v1362 = vpop.f32.mrb[0].mxu0
  %v1363 = vadd.f32 0.0, %v1362
  %v1364 = vpop.f32.mrb[0].mxu0
  %1365 = vmatprep.mubr.bf16.mxu0 0
  %1366 = vmatmul.mubr.bf16.gmra.mrb[0].mxu0 %v936
  %v1367 = vpop.f32.mrb[0].mxu0
  %v1368 = vadd.f32 0.0, %v1367
  %v1369 = vpop.f32.mrb[0].mxu0
  %v1370 = vpop.f32.mrb[0].mxu0
  %v1371 = vadd.f32 0.0, %v1370
  %v1372 = vpop.f32.mrb[0].mxu0
  %1373 = vmatprep.mubr.bf16.mxu0 0
  %1374 = vmatmul.mubr.bf16.gmra.mrb[0].mxu0 %v939
  %v1375 = vpop.f32.mrb[0].mxu0
  %v1376 = vadd.f32 0.0, %v1375
  %v1377 = vpop.f32.mrb[0].mxu0
  %v1378 = vpop.f32.mrb[0].mxu0
  %v1379 = vadd.f32 0.0, %v1378
  %v1380 = vpop.f32.mrb[0].mxu0
  %1381 = vmatprep.mubr.bf16.mxu0 0
  %1382 = vmatmul.mubr.bf16.gmra.mrb[0].mxu0 %v942
  %v1383 = vpop.f32.mrb[0].mxu0
  %v1384 = vadd.f32 0.0, %v1383
  %v1385 = vpop.f32.mrb[0].mxu0
  %v1386 = vpop.f32.mrb[0].mxu0
  %v1387 = vadd.f32 0.0, %v1386
  %v1388 = vpop.f32.mrb[0].mxu0
  %1389 = vmatprep.mubr.bf16.mxu0 0
  %1390 = vmatmul.mubr.bf16.gmra.mrb[0].mxu0 %v945
  %v1391 = vpop.f32.mrb[0].mxu0
  %v1392 = vadd.f32 0.0, %v1391
  %v1393 = vpop.f32.mrb[0].mxu0
  %v1394 = vpop.f32.mrb[0].mxu0
  %v1395 = vadd.f32 0.0, %v1394
  %v1396 = vpop.f32.mrb[0].mxu0
  %1397 = vmatprep.mubr.bf16.mxu0 0
  %1398 = vmatmul.mubr.bf16.gmra.mrb[0].mxu0 %v948
  %v1399 = vpop.f32.mrb[0].mxu0
  %v1400 = vadd.f32 0.0, %v1399
  %v1401 = vpop.f32.mrb[0].mxu0
  %v1402 = vpop.f32.mrb[0].mxu0
  %v1403 = vadd.f32 0.0, %v1402
  %v1404 = vpop.f32.mrb[0].mxu0
  %1405 = vmatprep.mubr.bf16.mxu0 0
  %1406 = vmatmul.mubr.bf16.gmra.mrb[0].mxu0 %v951
  %v1407 = vpop.f32.mrb[0].mxu0
  %v1408 = vadd.f32 0.0, %v1407
  %v1409 = vpop.f32.mrb[0].mxu0
  %v1410 = vpop.f32.mrb[0].mxu0
  %v1411 = vadd.f32 0.0, %v1410
  %v1412 = vpop.f32.mrb[0].mxu0
  %1413 = vmatprep.mubr.bf16.mxu0 0
  %1414 = vmatmul.mubr.bf16.gmra.mrb[0].mxu0 %v954
  %v1415 = vpop.f32.mrb[0].mxu0
  %v1416 = vadd.f32 0.0, %v1415
  %v1417 = vpop.f32.mrb[0].mxu0
  %v1418 = vpop.f32.mrb[0].mxu0
  %v1419 = vadd.f32 0.0, %v1418
  %v1420 = vpop.f32.mrb[0].mxu0
  %1421 = vmatprep.mubr.bf16.mxu0 0
  %1422 = vmatmul.mubr.bf16.gmra.mrb[0].mxu0 %v957
  %v1423 = vpop.f32.mrb[0].mxu0
  %v1424 = vadd.f32 0.0, %v1423
  %v1425 = vpop.f32.mrb[0].mxu0
  %v1426 = vpop.f32.mrb[0].mxu0
  %v1427 = vadd.f32 0.0, %v1426
  %v1428 = vpop.f32.mrb[0].mxu0
  %1429 = vmatprep.mubr.bf16.mxu0 0
  %1430 = vmatmul.mubr.bf16.gmra.mrb[0].mxu0 %v960
  %v1431 = vpop.f32.mrb[0].mxu0
  %v1432 = vadd.f32 0.0, %v1431
  %v1433 = vpop.f32.mrb[0].mxu0
  %v1434 = vpop.f32.mrb[0].mxu0
  %v1435 = vadd.f32 0.0, %v1434
  %v1436 = vpop.f32.mrb[0].mxu0
  %1437 = vmatprep.mubr.bf16.mxu0 0
  %1438 = vmatmul.mubr.bf16.gmra.mrb[0].mxu0 %v963
  %v1439 = vpop.f32.mrb[0].mxu0
  %v1440 = vadd.f32 0.0, %v1439
  %v1441 = vpop.f32.mrb[0].mxu0
  %v1442 = vpop.f32.mrb[0].mxu0
  %v1443 = vadd.f32 0.0, %v1442
  %v1444 = vpop.f32.mrb[0].mxu0
  %1445 = vmatprep.mubr.bf16.mxu0 0
  %1446 = vmatmul.mubr.bf16.gmra.mrb[0].mxu0 %v966
  %v1447 = vpop.f32.mrb[0].mxu0
  %v1448 = vadd.f32 0.0, %v1447
  %v1449 = vpop.f32.mrb[0].mxu0
  %v1450 = vpop.f32.mrb[0].mxu0
  %v1451 = vadd.f32 0.0, %v1450
  %v1452 = vpop.f32.mrb[0].mxu0
  %1453 = vmatprep.mubr.bf16.mxu0 0
  %1454 = vmatmul.mubr.bf16.gmra.mrb[0].mxu0 %v969
  %v1455 = vpop.f32.mrb[0].mxu0
  %v1456 = vadd.f32 0.0, %v1455
  %v1457 = vpop.f32.mrb[0].mxu0
  %v1458 = vpop.f32.mrb[0].mxu0
  %v1459 = vadd.f32 0.0, %v1458
  %v1460 = vpop.f32.mrb[0].mxu0
  %1461 = vmatprep.mubr.bf16.mxu0 0
  %1462 = vmatmul.mubr.bf16.gmra.mrb[0].mxu0 %v972
  %v1463 = vpop.f32.mrb[0].mxu0
  %v1464 = vadd.f32 0.0, %v1463
  %v1465 = vpop.f32.mrb[0].mxu0
  %v1466 = vpop.f32.mrb[0].mxu0
  %v1467 = vadd.f32 0.0, %v1466
  %v1468 = vpop.f32.mrb[0].mxu0
  %1469 = vmatprep.mubr.bf16.mxu0 0
  %1470 = vmatmul.mubr.bf16.gmra.mrb[0].mxu0 %v975
  %v1471 = vpop.f32.mrb[0].mxu0
  %v1472 = vadd.f32 0.0, %v1471
  %v1473 = vpop.f32.mrb[0].mxu0
  %v1474 = vpop.f32.mrb[0].mxu0
  %v1475 = vadd.f32 0.0, %v1474
  %v1476 = vpop.f32.mrb[0].mxu0
  %1477 = vmatprep.mubr.bf16.mxu0 0
  %1478 = vmatmul.mubr.bf16.gmra.mrb[0].mxu0 %v978
  %v1479 = vpop.f32.mrb[0].mxu0
  %v1480 = vadd.f32 0.0, %v1479
  %v1481 = vpop.f32.mrb[0].mxu0
  %v1482 = vpop.f32.mrb[0].mxu0
  %v1483 = vadd.f32 0.0, %v1482
  %v1484 = vpop.f32.mrb[0].mxu0
  %1485 = vmatprep.mubr.bf16.mxu0 0
  %1486 = vmatmul.mubr.bf16.gmra.mrb[0].mxu0 %v981
  %v1487 = vpop.f32.mrb[0].mxu0
  %v1488 = vadd.f32 0.0, %v1487
  %v1489 = vpop.f32.mrb[0].mxu0
  %v1490 = vpop.f32.mrb[0].mxu0
  %v1491 = vadd.f32 0.0, %v1490
  %v1492 = vpop.f32.mrb[0].mxu0
  %1493 = vmatprep.mubr.bf16.mxu0 0
  %1494 = vmatmul.mubr.bf16.gmra.mrb[0].mxu0 %v984
  %v1495 = vpop.f32.mrb[0].mxu0
  %v1496 = vadd.f32 0.0, %v1495
  %v1497 = vpop.f32.mrb[0].mxu0
  %v1498 = vpop.f32.mrb[0].mxu0
  %v1499 = vadd.f32 0.0, %v1498
  %v1500 = vpop.f32.mrb[0].mxu0
  %1501 = vmatprep.mubr.bf16.mxu0 0
  %1502 = vmatmul.mubr.bf16.gmra.mrb[0].mxu0 %v987
  %v1503 = vpop.f32.mrb[0].mxu0
  %v1504 = vadd.f32 0.0, %v1503
  %v1505 = vpop.f32.mrb[0].mxu0
  %v1506 = vpop.f32.mrb[0].mxu0
  %v1507 = vadd.f32 0.0, %v1506
  %v1508 = vpop.f32.mrb[0].mxu0
  %1509 = vmatprep.mubr.bf16.mxu0 0
  %1510 = vmatmul.mubr.bf16.gmra.mrb[0].mxu0 %v990
  %v1511 = vpop.f32.mrb[0].mxu0
  %v1512 = vadd.f32 0.0, %v1511
  %v1513 = vpop.f32.mrb[0].mxu0
  %v1514 = vpop.f32.mrb[0].mxu0
  %v1515 = vadd.f32 0.0, %v1514
  %v1516 = vpop.f32.mrb[0].mxu0
  %1517 = vmatprep.mubr.bf16.mxu0 0
  %1518 = vmatmul.mubr.bf16.gmra.mrb[0].mxu0 %v993
  %v1519 = vpop.f32.mrb[0].mxu0
  %v1520 = vadd.f32 0.0, %v1519
  %v1521 = vpop.f32.mrb[0].mxu0
  %v1522 = vpop.f32.mrb[0].mxu0
  %v1523 = vadd.f32 0.0, %v1522
  %v1524 = vpop.f32.mrb[0].mxu0
  %1525 = vmatprep.mubr.bf16.mxu0 0
  %1526 = vmatmul.mubr.bf16.gmra.mrb[0].mxu0 %v996
  %v1527 = vpop.f32.mrb[0].mxu0
  %v1528 = vadd.f32 0.0, %v1527
  %v1529 = vpop.f32.mrb[0].mxu0
  %v1530 = vpop.f32.mrb[0].mxu0
  %v1531 = vadd.f32 0.0, %v1530
  %v1532 = vpop.f32.mrb[0].mxu0
  %1533 = vmatprep.mubr.bf16.mxu0 0
  %1534 = vmatmul.mubr.bf16.gmra.mrb[0].mxu0 %v999
  %v1535 = vpop.f32.mrb[0].mxu0
  %v1536 = vadd.f32 0.0, %v1535
  %v1537 = vpop.f32.mrb[0].mxu0
  %v1538 = vpop.f32.mrb[0].mxu0
  %v1539 = vadd.f32 0.0, %v1538
  %v1540 = vpop.f32.mrb[0].mxu0
  %1541 = vmatprep.mubr.bf16.mxu0 0
  %1542 = vmatmul.mubr.bf16.gmra.mrb[0].mxu0 %v1002
  %v1543 = vpop.f32.mrb[0].mxu0
  %v1544 = vadd.f32 0.0, %v1543
  %v1545 = vpop.f32.mrb[0].mxu0
  %v1546 = vpop.f32.mrb[0].mxu0
  %v1547 = vadd.f32 0.0, %v1546
  %v1548 = vpop.f32.mrb[0].mxu0
  %1549 = vmatprep.mubr.bf16.mxu0 0
  %1550 = vmatmul.mubr.bf16.gmra.mrb[0].mxu0 %v1005
  %v1551 = vpop.f32.mrb[0].mxu0
  %v1552 = vadd.f32 0.0, %v1551
  %v1553 = vpop.f32.mrb[0].mxu0
  %v1554 = vpop.f32.mrb[0].mxu0
  %v1555 = vadd.f32 0.0, %v1554
  %v1556 = vpop.f32.mrb[0].mxu0
  %1557 = vmatprep.mubr.bf16.mxu0 0
  %1558 = vmatmul.mubr.bf16.gmra.mrb[0].mxu0 %v1008
  %v1559 = vpop.f32.mrb[0].mxu0
  %v1560 = vadd.f32 0.0, %v1559
  %v1561 = vpop.f32.mrb[0].mxu0
  %v1562 = vpop.f32.mrb[0].mxu0
  %v1563 = vadd.f32 0.0, %v1562
  %v1564 = vpop.f32.mrb[0].mxu0
  %1565 = vmatprep.mubr.bf16.mxu0 0
  %1566 = vmatmul.mubr.bf16.gmra.mrb[0].mxu0 %v1011
  %v1567 = vpop.f32.mrb[0].mxu0
  %v1568 = vadd.f32 0.0, %v1567
  %v1569 = vpop.f32.mrb[0].mxu0
  %v1570 = vpop.f32.mrb[0].mxu0
  %v1571 = vadd.f32 0.0, %v1570
  %v1572 = vpop.f32.mrb[0].mxu0
  %1573 = vmatprep.mubr.bf16.mxu0 0
  %1574 = vmatmul.mubr.bf16.gmra.mrb[0].mxu0 %v1014
  %v1575 = vpop.f32.mrb[0].mxu0
  %v1576 = vadd.f32 0.0, %v1575
  %v1577 = vpop.f32.mrb[0].mxu0
  %v1578 = vpop.f32.mrb[0].mxu0
  %v1579 = vadd.f32 0.0, %v1578
  %v1580 = vpop.f32.mrb[0].mxu0
  %1581 = vmatprep.mubr.bf16.mxu0 0
  %1582 = vmatmul.mubr.bf16.gmra.mrb[0].mxu0 %v1017
  %v1583 = vpop.f32.mrb[0].mxu0
  %v1584 = vadd.f32 0.0, %v1583
  %v1585 = vpop.f32.mrb[0].mxu0
  %v1586 = vpop.f32.mrb[0].mxu0
  %v1587 = vadd.f32 0.0, %v1586
  %v1588 = vpop.f32.mrb[0].mxu0
  %1589 = vmatprep.mubr.bf16.mxu0 0
  %1590 = vmatmul.mubr.bf16.gmra.mrb[0].mxu0 %v1020
  %v1591 = vpop.f32.mrb[0].mxu0
  %v1592 = vadd.f32 0.0, %v1591
  %v1593 = vpop.f32.mrb[0].mxu0
  %v1594 = vpop.f32.mrb[0].mxu0
  %v1595 = vadd.f32 0.0, %v1594
  %v1596 = vpop.f32.mrb[0].mxu0
  %1597 = vmatprep.mubr.bf16.mxu0 0
  %1598 = vmatmul.mubr.bf16.gmra.mrb[0].mxu0 %v1023
  %v1599 = vpop.f32.mrb[0].mxu0
  %v1600 = vadd.f32 0.0, %v1599
  %v1601 = vpop.f32.mrb[0].mxu0
  %v1602 = vpop.f32.mrb[0].mxu0
  %v1603 = vadd.f32 0.0, %v1602
  %v1604 = vpop.f32.mrb[0].mxu0
  %1605 = vmatprep.mubr.bf16.mxu0 0
  %1606 = vmatmul.mubr.bf16.gmra.mrb[0].mxu0 %v1026
  %v1607 = vpop.f32.mrb[0].mxu0
  %v1608 = vadd.f32 0.0, %v1607
  %v1609 = vpop.f32.mrb[0].mxu0
  %v1610 = vpop.f32.mrb[0].mxu0
  %v1611 = vadd.f32 0.0, %v1610
  %v1612 = vpop.f32.mrb[0].mxu0
  %1613 = vmatprep.mubr.bf16.mxu0 0
  %1614 = vmatmul.mubr.bf16.gmra.mrb[0].mxu0 %v1029
  %v1615 = vpop.f32.mrb[0].mxu0
  %v1616 = vadd.f32 0.0, %v1615
  %v1617 = vpop.f32.mrb[0].mxu0
  %v1618 = vpop.f32.mrb[0].mxu0
  %v1619 = vadd.f32 0.0, %v1618
  %v1620 = vpop.f32.mrb[0].mxu0
  %1621 = vmatprep.mubr.bf16.mxu0 0
  %1622 = vmatmul.mubr.bf16.gmra.mrb[0].mxu0 %v1032
  %v1623 = vpop.f32.mrb[0].mxu0
  %v1624 = vadd.f32 0.0, %v1623
  %v1625 = vpop.f32.mrb[0].mxu0
  %v1626 = vpop.f32.mrb[0].mxu0
  %v1627 = vadd.f32 0.0, %v1626
  %v1628 = vpop.f32.mrb[0].mxu0
  %1629 = vmatprep.mubr.bf16.mxu0 0
  %1630 = vmatmul.mubr.bf16.gmra.mrb[0].mxu0 %v1035
  %v1631 = vpop.f32.mrb[0].mxu0
  %v1632 = vadd.f32 0.0, %v1631
  %v1633 = vpop.f32.mrb[0].mxu0
  %v1634 = vpop.f32.mrb[0].mxu0
  %v1635 = vadd.f32 0.0, %v1634
  %v1636 = vpop.f32.mrb[0].mxu0
  %1637 = vmatprep.mubr.bf16.mxu0 0
  %1638 = vmatmul.mubr.bf16.gmra.mrb[0].mxu0 %v1038
  %v1639 = vpop.f32.mrb[0].mxu0
  %v1640 = vadd.f32 0.0, %v1639
  %v1641 = vpop.f32.mrb[0].mxu0
  %v1642 = vpop.f32.mrb[0].mxu0
  %v1643 = vadd.f32 0.0, %v1642
  %v1644 = vpop.f32.mrb[0].mxu0
  %1645 = vmatprep.mubr.bf16.mxu0 0
  %1646 = vmatmul.mubr.bf16.gmra.mrb[0].mxu0 %v1041
  %v1647 = vpop.f32.mrb[0].mxu0
  %v1648 = vadd.f32 0.0, %v1647
  %v1649 = vpop.f32.mrb[0].mxu0
  %v1650 = vpop.f32.mrb[0].mxu0
  %v1651 = vadd.f32 0.0, %v1650
  %v1652 = vpop.f32.mrb[0].mxu0
  %1653 = vmatprep.mubr.bf16.mxu0 0
  %1654 = vmatmul.mubr.bf16.gmra.mrb[0].mxu0 %v1044
  %v1655 = vpop.f32.mrb[0].mxu0
  %v1656 = vadd.f32 0.0, %v1655
  %v1657 = vpop.f32.mrb[0].mxu0
  %v1658 = vpop.f32.mrb[0].mxu0
  %v1659 = vadd.f32 0.0, %v1658
  %v1660 = vpop.f32.mrb[0].mxu0
  %1661 = vmatprep.mubr.bf16.mxu0 0
  %1662 = vmatmul.mubr.bf16.gmra.mrb[0].mxu0 %v1047
  %v1663 = vpop.f32.mrb[0].mxu0
  %v1664 = vadd.f32 0.0, %v1663
  %v1665 = vpop.f32.mrb[0].mxu0
  %v1666 = vpop.f32.mrb[0].mxu0
  %v1667 = vadd.f32 0.0, %v1666
  %v1668 = vpop.f32.mrb[0].mxu0
  %1669 = vmatprep.mubr.bf16.mxu0 0
  %1670 = vmatmul.mubr.bf16.gmra.mrb[0].mxu0 %v1050
  %v1671 = vpop.f32.mrb[0].mxu0
  %v1672 = vadd.f32 0.0, %v1671
  %v1673 = vpop.f32.mrb[0].mxu0
  %v1674 = vpop.f32.mrb[0].mxu0
  %v1675 = vadd.f32 0.0, %v1674
  %v1676 = vpop.f32.mrb[0].mxu0
  %1677 = vmatprep.mubr.bf16.mxu0 0
  %1678 = vmatmul.mubr.bf16.gmra.mrb[0].mxu0 %v1053
  %v1679 = vpop.f32.mrb[0].mxu0
  %v1680 = vadd.f32 0.0, %v1679
  %v1681 = vpop.f32.mrb[0].mxu0
  %v1682 = vpop.f32.mrb[0].mxu0
  %v1683 = vadd.f32 0.0, %v1682
  %v1684 = vpop.f32.mrb[0].mxu0
  %1685 = vmatprep.mubr.bf16.mxu0 0
  %1686 = vmatmul.mubr.bf16.gmra.mrb[0].mxu0 %v1056
  %v1687 = vpop.f32.mrb[0].mxu0
  %v1688 = vadd.f32 0.0, %v1687
  %v1689 = vpop.f32.mrb[0].mxu0
  %v1690 = vpop.f32.mrb[0].mxu0
  %v1691 = vadd.f32 0.0, %v1690
  %v1692 = vpop.f32.mrb[0].mxu0
  %1693 = vmatprep.mubr.bf16.mxu0 0
  %1694 = vmatmul.mubr.bf16.gmra.mrb[0].mxu0 %v1059
  %v1695 = vpop.f32.mrb[0].mxu0
  %v1696 = vadd.f32 0.0, %v1695
  %v1697 = vpop.f32.mrb[0].mxu0
  %v1698 = vpop.f32.mrb[0].mxu0
  %v1699 = vadd.f32 0.0, %v1698
  %v1700 = vpop.f32.mrb[0].mxu0
  %1701 = vmatprep.mubr.bf16.mxu0 0
  %1702 = vmatmul.mubr.bf16.gmra.mrb[0].mxu0 %v1062
  %v1703 = vpop.f32.mrb[0].mxu0
  %v1704 = vadd.f32 0.0, %v1703
  %v1705 = vpop.f32.mrb[0].mxu0
  %v1706 = vpop.f32.mrb[0].mxu0
  %v1707 = vadd.f32 0.0, %v1706
  %v1708 = vpop.f32.mrb[0].mxu0
  %1709 = vmatprep.mubr.bf16.mxu0 0
  %1710 = vmatmul.mubr.bf16.gmra.mrb[0].mxu0 %v1065
  %v1711 = vpop.f32.mrb[0].mxu0
  %v1712 = vadd.f32 0.0, %v1711
  %v1713 = vpop.f32.mrb[0].mxu0
  %v1714 = vpop.f32.mrb[0].mxu0
  %v1715 = vadd.f32 0.0, %v1714
  %v1716 = vpop.f32.mrb[0].mxu0
  %1717 = vmatprep.mubr.bf16.mxu0 0
  %1718 = vmatmul.mubr.bf16.gmra.mrb[0].mxu0 %v1068
  %v1719 = vpop.f32.mrb[0].mxu0
  %v1720 = vadd.f32 0.0, %v1719
  %v1721 = vpop.f32.mrb[0].mxu0
  %v1722 = vpop.f32.mrb[0].mxu0
  %v1723 = vadd.f32 0.0, %v1722
  %v1724 = vpop.f32.mrb[0].mxu0
  %1725 = vmatprep.mubr.bf16.mxu0 0
  %1726 = vmatmul.mubr.bf16.gmra.mrb[0].mxu0 %v1071
  %v1727 = vpop.f32.mrb[0].mxu0
  %v1728 = vadd.f32 0.0, %v1727
  %v1729 = vpop.f32.mrb[0].mxu0
  %v1730 = vpop.f32.mrb[0].mxu0
  %v1731 = vadd.f32 0.0, %v1730
  %v1732 = vpop.f32.mrb[0].mxu0
  %1733 = vmatprep.mubr.bf16.mxu0 0
  %1734 = vmatmul.mubr.bf16.gmra.mrb[0].mxu0 %v1074
  %v1735 = vpop.f32.mrb[0].mxu0
  %v1736 = vadd.f32 0.0, %v1735
  %v1737 = vpop.f32.mrb[0].mxu0
  %v1738 = vpop.f32.mrb[0].mxu0
  %v1739 = vadd.f32 0.0, %v1738
  %v1740 = vpop.f32.mrb[0].mxu0
  %1741 = vmatprep.mubr.bf16.mxu0 0
  %1742 = vmatmul.mubr.bf16.gmra.mrb[0].mxu0 %v1077
  %v1743 = vpop.f32.mrb[0].mxu0
  %v1744 = vadd.f32 0.0, %v1743
  %v1745 = vpop.f32.mrb[0].mxu0
  %v1746 = vpop.f32.mrb[0].mxu0
  %v1747 = vadd.f32 0.0, %v1746
  %v1748 = vpop.f32.mrb[0].mxu0
  %1749 = vmatprep.mubr.bf16.mxu0 0
  %1750 = vmatmul.mubr.bf16.gmra.mrb[0].mxu0 %v1080
  %v1751 = vpop.f32.mrb[0].mxu0
  %v1752 = vadd.f32 0.0, %v1751
  %v1753 = vpop.f32.mrb[0].mxu0
  %v1754 = vpop.f32.mrb[0].mxu0
  %v1755 = vadd.f32 0.0, %v1754
  %v1756 = vpop.f32.mrb[0].mxu0
  %1757 = vmatprep.mubr.bf16.mxu0 0
  %1758 = vmatmul.mubr.bf16.gmra.mrb[0].mxu0 %v1083
  %v1759 = vpop.f32.mrb[0].mxu0
  %v1760 = vadd.f32 0.0, %v1759
  %v1761 = vpop.f32.mrb[0].mxu0
  %v1762 = vpop.f32.mrb[0].mxu0
  %v1763 = vadd.f32 0.0, %v1762
  %v1764 = vpop.f32.mrb[0].mxu0
  %1765 = vmatprep.mubr.bf16.mxu0 0
  %1766 = vmatmul.mubr.bf16.gmra.mrb[0].mxu0 %v1086
  %v1767 = vpop.f32.mrb[0].mxu0
  %v1768 = vadd.f32 0.0, %v1767
  %v1769 = vpop.f32.mrb[0].mxu0
  %v1770 = vpop.f32.mrb[0].mxu0
  %v1771 = vadd.f32 0.0, %v1770
  %v1772 = vpop.f32.mrb[0].mxu0
  %1773 = vmatprep.mubr.bf16.mxu0 0
  %1774 = vmatmul.mubr.bf16.gmra.mrb[0].mxu0 %v1089
  %v1775 = vpop.f32.mrb[0].mxu0
  %v1776 = vadd.f32 0.0, %v1775
  %v1777 = vpop.f32.mrb[0].mxu0
  %v1778 = vpop.f32.mrb[0].mxu0
  %v1779 = vadd.f32 0.0, %v1778
  %v1780 = vpop.f32.mrb[0].mxu0
  %1781 = vmatprep.mubr.bf16.mxu0 0
  %1782 = vmatmul.mubr.bf16.gmra.mrb[0].mxu0 %v1092
  %v1783 = vpop.f32.mrb[0].mxu0
  %v1784 = vadd.f32 0.0, %v1783
  %v1785 = vpop.f32.mrb[0].mxu0
  %v1786 = vpop.f32.mrb[0].mxu0
  %v1787 = vadd.f32 0.0, %v1786
  %v1788 = vpop.f32.mrb[0].mxu0
  %1789 = vmatprep.mubr.bf16.mxu0 0
  %1790 = vmatmul.mubr.bf16.gmra.mrb[0].mxu0 %v1095
  %v1791 = vpop.f32.mrb[0].mxu0
  %v1792 = vadd.f32 0.0, %v1791
  %v1793 = vpop.f32.mrb[0].mxu0
  %v1794 = vpop.f32.mrb[0].mxu0
  %v1795 = vadd.f32 0.0, %v1794
  %v1796 = vpop.f32.mrb[0].mxu0
  %1797 = vmatprep.mubr.bf16.mxu0 0
  %1798 = vmatmul.mubr.bf16.gmra.mrb[0].mxu0 %v1098
  %v1799 = vpop.f32.mrb[0].mxu0
  %v1800 = vadd.f32 0.0, %v1799
  %v1801 = vpop.f32.mrb[0].mxu0
  %v1802 = vpop.f32.mrb[0].mxu0
  %v1803 = vadd.f32 0.0, %v1802
  %v1804 = vpop.f32.mrb[0].mxu0
  %1805 = vmatprep.mubr.bf16.mxu0 0
  %1806 = vmatmul.mubr.bf16.gmra.mrb[0].mxu0 %v1101
  %v1807 = vpop.f32.mrb[0].mxu0
  %v1808 = vadd.f32 0.0, %v1807
  %v1809 = vpop.f32.mrb[0].mxu0
  %v1810 = vpop.f32.mrb[0].mxu0
  %v1811 = vadd.f32 0.0, %v1810
  %v1812 = vpop.f32.mrb[0].mxu0
  %1813 = vmatprep.mubr.bf16.mxu0 0
  %1814 = vmatmul.mubr.bf16.gmra.mrb[0].mxu0 %v1104
  %v1815 = vpop.f32.mrb[0].mxu0
  %v1816 = vadd.f32 0.0, %v1815
  %v1817 = vpop.f32.mrb[0].mxu0
  %v1818 = vpop.f32.mrb[0].mxu0
  %v1819 = vadd.f32 0.0, %v1818
  %v1820 = vpop.f32.mrb[0].mxu0
  %1821 = vmatprep.mubr.bf16.mxu0 0
  %1822 = vmatmul.mubr.bf16.gmra.mrb[0].mxu0 %v1107
  %v1823 = vpop.f32.mrb[0].mxu0
  %v1824 = vadd.f32 0.0, %v1823
  %v1825 = vpop.f32.mrb[0].mxu0
  %v1826 = vpop.f32.mrb[0].mxu0
  %v1827 = vadd.f32 0.0, %v1826
  %v1828 = vpop.f32.mrb[0].mxu0
  %1829 = vmatprep.mubr.bf16.mxu0 0
  %1830 = vmatmul.mubr.bf16.gmra.mrb[0].mxu0 %v1110
  %v1831 = vpop.f32.mrb[0].mxu0
  %v1832 = vadd.f32 0.0, %v1831
  %v1833 = vpop.f32.mrb[0].mxu0
  %v1834 = vpop.f32.mrb[0].mxu0
  %v1835 = vadd.f32 0.0, %v1834
  %v1836 = vpop.f32.mrb[0].mxu0
  %1837 = vmatprep.mubr.bf16.mxu0 0
  %1838 = vmatmul.mubr.bf16.gmra.mrb[0].mxu0 %v1113
  %v1839 = vpop.f32.mrb[0].mxu0
  %v1840 = vadd.f32 0.0, %v1839
  %v1841 = vpop.f32.mrb[0].mxu0
  %v1842 = vpop.f32.mrb[0].mxu0
  %v1843 = vadd.f32 0.0, %v1842
  %v1844 = vpop.f32.mrb[0].mxu0
  %1845 = vmatprep.mubr.bf16.mxu0 0
  %1846 = vmatmul.mubr.bf16.gmra.mrb[0].mxu0 %v1116
  %v1847 = vpop.f32.mrb[0].mxu0
  %v1848 = vadd.f32 0.0, %v1847
  %v1849 = vpop.f32.mrb[0].mxu0
  %v1850 = vpop.f32.mrb[0].mxu0
  %v1851 = vadd.f32 0.0, %v1850
  %v1852 = vpop.f32.mrb[0].mxu0
  %1853 = vmatprep.mubr.bf16.mxu0 0
  %1854 = vmatmul.mubr.bf16.gmra.mrb[0].mxu0 %v1119
  %v1855 = vpop.f32.mrb[0].mxu0
  %v1856 = vadd.f32 0.0, %v1855
  %v1857 = vpop.f32.mrb[0].mxu0
  %v1858 = vpop.f32.mrb[0].mxu0
  %v1859 = vadd.f32 0.0, %v1858
  %v1860 = vpop.f32.mrb[0].mxu0
  %1861 = vmatprep.mubr.bf16.mxu0 0
  %1862 = vmatmul.mubr.bf16.gmra.mrb[0].mxu0 %v1122
  %v1863 = vpop.f32.mrb[0].mxu0
  %v1864 = vadd.f32 0.0, %v1863
  %v1865 = vpop.f32.mrb[0].mxu0
  %v1866 = vpop.f32.mrb[0].mxu0
  %v1867 = vadd.f32 0.0, %v1866
  %v1868 = vpop.f32.mrb[0].mxu0
  %1869 = vmatprep.mubr.bf16.mxu0 0
  %1870 = vmatmul.mubr.bf16.gmra.mrb[0].mxu0 %v1125
  %v1871 = vpop.f32.mrb[0].mxu0
  %v1872 = vadd.f32 0.0, %v1871
  %v1873 = vpop.f32.mrb[0].mxu0
  %v1874 = vpop.f32.mrb[0].mxu0
  %v1875 = vadd.f32 0.0, %v1874
  %v1876 = vpop.f32.mrb[0].mxu0
  %1877 = vmatprep.mubr.bf16.mxu0 0
  %1878 = vmatmul.mubr.bf16.gmra.mrb[0].mxu0 %v1128
  %v1879 = vpop.f32.mrb[0].mxu0
  %v1880 = vadd.f32 0.0, %v1879
  %v1881 = vpop.f32.mrb[0].mxu0
  %v1882 = vpop.f32.mrb[0].mxu0
  %v1883 = vadd.f32 0.0, %v1882
  %v1884 = vpop.f32.mrb[0].mxu0
  %1885 = vmatprep.mubr.bf16.mxu0 0
  %1886 = vmatmul.mubr.bf16.gmra.mrb[0].mxu0 %v1131
  %v1887 = vpop.f32.mrb[0].mxu0
  %v1888 = vadd.f32 0.0, %v1887
  %v1889 = vpop.f32.mrb[0].mxu0
  %v1890 = vpop.f32.mrb[0].mxu0
  %v1891 = vadd.f32 0.0, %v1890
  %v1892 = vpop.f32.mrb[0].mxu0
  %1893 = vmatprep.mubr.bf16.mxu0 0
  %1894 = vmatmul.mubr.bf16.gmra.mrb[0].mxu0 %v1134
  %v1895 = vpop.f32.mrb[0].mxu0
  %v1896 = vadd.f32 0.0, %v1895
  %v1897 = vpop.f32.mrb[0].mxu0
  %v1898 = vpop.f32.mrb[0].mxu0
  %v1899 = vadd.f32 0.0, %v1898
  %v1900 = vpop.f32.mrb[0].mxu0
  %1901 = vmatprep.mubr.bf16.mxu0 0
  %1902 = vmatmul.mubr.bf16.gmra.mrb[0].mxu0 %v1137
  %v1903 = vpop.f32.mrb[0].mxu0
  %v1904 = vadd.f32 0.0, %v1903
  %v1905 = vpop.f32.mrb[0].mxu0
  %v1906 = vpop.f32.mrb[0].mxu0
  %v1907 = vadd.f32 0.0, %v1906
  %v1908 = vpop.f32.mrb[0].mxu0
  %1909 = vmatprep.mubr.bf16.mxu0 0
  %1910 = vmatmul.mubr.bf16.gmra.mrb[0].mxu0 %v1140
  %v1911 = vpop.f32.mrb[0].mxu0
  %v1912 = vadd.f32 0.0, %v1911
  %v1913 = vpop.f32.mrb[0].mxu0
  %v1914 = vpop.f32.mrb[0].mxu0
  %v1915 = vadd.f32 0.0, %v1914
  %v1916 = vpop.f32.mrb[0].mxu0
  %1917 = vmatprep.mubr.bf16.mxu0 0
  %1918 = vmatmul.mubr.bf16.gmra.mrb[0].mxu0 %v1143
  %v1919 = vpop.f32.mrb[0].mxu0
  %v1920 = vadd.f32 0.0, %v1919
  %v1921 = vpop.f32.mrb[0].mxu0
  %v1922 = vpop.f32.mrb[0].mxu0
  %v1923 = vadd.f32 0.0, %v1922
  %v1924 = vpop.f32.mrb[0].mxu0
  %1925 = vmatprep.mubr.bf16.mxu0 0
  %1926 = vmatmul.mubr.bf16.gmra.mrb[0].mxu0 %v1146
  %v1927 = vpop.f32.mrb[0].mxu0
  %v1928 = vadd.f32 0.0, %v1927
  %v1929 = vpop.f32.mrb[0].mxu0
  %v1930 = vpop.f32.mrb[0].mxu0
  %v1931 = vadd.f32 0.0, %v1930
  %v1932 = vpop.f32.mrb[0].mxu0
  %1933 = vmatprep.mubr.bf16.mxu0 0
  %1934 = vmatmul.mubr.bf16.gmra.mrb[0].mxu0 %v1149
  %v1935 = vpop.f32.mrb[0].mxu0
  %v1936 = vadd.f32 0.0, %v1935
  %v1937 = vpop.f32.mrb[0].mxu0
  %v1938 = vpop.f32.mrb[0].mxu0
  %v1939 = vadd.f32 0.0, %v1938
  %v1940 = vpop.f32.mrb[0].mxu0
  %1941 = vmatprep.mubr.bf16.mxu0 0
  %1942 = vmatmul.mubr.bf16.gmra.mrb[0].mxu0 %v1152
  %v1943 = vpop.f32.mrb[0].mxu0
  %v1944 = vadd.f32 0.0, %v1943
  %v1945 = vpop.f32.mrb[0].mxu0
  %v1946 = vpop.f32.mrb[0].mxu0
  %v1947 = vadd.f32 0.0, %v1946
  %v1948 = vpop.f32.mrb[0].mxu0
  %1949 = vmatprep.mubr.bf16.mxu0 0
  %1950 = vmatmul.mubr.bf16.gmra.mrb[0].mxu0 %v1155
  %v1951 = vpop.f32.mrb[0].mxu0
  %v1952 = vadd.f32 0.0, %v1951
  %v1953 = vpop.f32.mrb[0].mxu0
  %v1954 = vpop.f32.mrb[0].mxu0
  %v1955 = vadd.f32 0.0, %v1954
  %v1956 = vpop.f32.mrb[0].mxu0
  %1957 = vmatprep.mubr.bf16.mxu0 0
  %1958 = vmatmul.mubr.bf16.gmra.mrb[0].mxu0 %v1158
  %v1959 = vpop.f32.mrb[0].mxu0
  %v1960 = vadd.f32 0.0, %v1959
  %v1961 = vpop.f32.mrb[0].mxu0
  %v1962 = vpop.f32.mrb[0].mxu0
  %v1963 = vadd.f32 0.0, %v1962
  %v1964 = vpop.f32.mrb[0].mxu0
  %1965 = vmatprep.mubr.bf16.mxu0 0
  %1966 = vmatmul.mubr.bf16.gmra.mrb[0].mxu0 %v1161
  %v1967 = vpop.f32.mrb[0].mxu0
  %v1968 = vadd.f32 0.0, %v1967
  %v1969 = vpop.f32.mrb[0].mxu0
  %v1970 = vpop.f32.mrb[0].mxu0
  %v1971 = vadd.f32 0.0, %v1970
  %v1972 = vpop.f32.mrb[0].mxu0
  %1973 = vmatprep.mubr.bf16.mxu0 0
  %1974 = vmatmul.mubr.bf16.gmra.mrb[0].mxu0 %v1164
  %v1975 = vpop.f32.mrb[0].mxu0
  %v1976 = vadd.f32 0.0, %v1975
  %v1977 = vpop.f32.mrb[0].mxu0
  %v1978 = vpop.f32.mrb[0].mxu0
  %v1979 = vadd.f32 0.0, %v1978
  %v1980 = vpop.f32.mrb[0].mxu0
  %1981 = vmatprep.mubr.bf16.mxu0 0
  %1982 = vmatmul.mubr.bf16.gmra.mrb[0].mxu0 %v1167
  %v1983 = vpop.f32.mrb[0].mxu0
  %v1984 = vadd.f32 0.0, %v1983
  %v1985 = vpop.f32.mrb[0].mxu0
  %v1986 = vpop.f32.mrb[0].mxu0
  %v1987 = vadd.f32 0.0, %v1986
  %v1988 = vpop.f32.mrb[0].mxu0
  %1989 = vmatprep.mubr.bf16.mxu0 0
  %1990 = vmatmul.mubr.bf16.gmra.mrb[0].mxu0 %v1170
  %v1991 = vpop.f32.mrb[0].mxu0
  %v1992 = vadd.f32 0.0, %v1991
  %v1993 = vpop.f32.mrb[0].mxu0
  %v1994 = vpop.f32.mrb[0].mxu0
  %v1995 = vadd.f32 0.0, %v1994
  %v1996 = vpop.f32.mrb[0].mxu0
  %1997 = vmatprep.mubr.bf16.mxu0 0
  %1998 = vmatmul.mubr.bf16.gmra.mrb[0].mxu0 %v1173
  %v1999 = vpop.f32.mrb[0].mxu0
  %v2000 = vadd.f32 0.0, %v1999
  %v2001 = vpop.f32.mrb[0].mxu0
  %v2002 = vpop.f32.mrb[0].mxu0
  %v2003 = vadd.f32 0.0, %v2002
  %v2004 = vpop.f32.mrb[0].mxu0
  %2005 = vmatprep.mubr.bf16.mxu0 0
  %2006 = vmatmul.mubr.bf16.gmra.mrb[0].mxu0 %v1176
  %v2007 = vpop.f32.mrb[0].mxu0
  %v2008 = vadd.f32 0.0, %v2007
  %v2009 = vpop.f32.mrb[0].mxu0
  %v2010 = vpop.f32.mrb[0].mxu0
  %v2011 = vadd.f32 0.0, %v2010
  %v2012 = vpop.f32.mrb[0].mxu0
  %2013 = vmatprep.mubr.bf16.mxu0 0
  %2014 = vmatmul.mubr.bf16.gmra.mrb[0].mxu0 %v1179
  %v2015 = vpop.f32.mrb[0].mxu0
  %v2016 = vadd.f32 0.0, %v2015
  %v2017 = vpop.f32.mrb[0].mxu0
  %v2018 = vpop.f32.mrb[0].mxu0
  %v2019 = vadd.f32 0.0, %v2018
  %v2020 = vpop.f32.mrb[0].mxu0
  %2021 = vmatprep.mubr.bf16.mxu0 0
  %2022 = vmatmul.mubr.bf16.gmra.mrb[0].mxu0 %v1182
  %v2023 = vpop.f32.mrb[0].mxu0
  %v2024 = vadd.f32 0.0, %v2023
  %v2025 = vpop.f32.mrb[0].mxu0
  %v2026 = vpop.f32.mrb[0].mxu0
  %v2027 = vadd.f32 0.0, %v2026
  %v2028 = vpop.f32.mrb[0].mxu0
  %2029 = vmatprep.mubr.bf16.mxu0 0
  %2030 = vmatmul.mubr.bf16.gmra.mrb[0].mxu0 %v1185
  %v2031 = vpop.f32.mrb[0].mxu0
  %v2032 = vadd.f32 0.0, %v2031
  %v2033 = vpop.f32.mrb[0].mxu0
  %v2034 = vpop.f32.mrb[0].mxu0
  %v2035 = vadd.f32 0.0, %v2034
  %v2036 = vpop.f32.mrb[0].mxu0
  %2037 = vmatprep.mubr.bf16.mxu0 0
  %2038 = vmatmul.mubr.bf16.gmra.mrb[0].mxu0 %v1188
  %v2039 = vpop.f32.mrb[0].mxu0
  %v2040 = vadd.f32 0.0, %v2039
  %v2041 = vpop.f32.mrb[0].mxu0
  %v2042 = vpop.f32.mrb[0].mxu0
  %v2043 = vadd.f32 0.0, %v2042
  %v2044 = vpop.f32.mrb[0].mxu0
  %2045 = vmatprep.mubr.bf16.mxu0 0
  %2046 = vmatmul.mubr.bf16.gmra.mrb[0].mxu0 %v1191
  %v2047 = vpop.f32.mrb[0].mxu0
  %v2048 = vadd.f32 0.0, %v2047
  %v2049 = vpop.f32.mrb[0].mxu0
  %v2050 = vpop.f32.mrb[0].mxu0
  %v2051 = vadd.f32 0.0, %v2050
  %v2052 = vpop.f32.mrb[0].mxu0
  %2053 = vmatprep.mubr.bf16.mxu0 0
  %2054 = vmatmul.mubr.bf16.gmra.mrb[0].mxu0 %v1194
  %v2055 = vpop.f32.mrb[0].mxu0
  %v2056 = vadd.f32 0.0, %v2055
  %v2057 = vpop.f32.mrb[0].mxu0
  %v2058 = vpop.f32.mrb[0].mxu0
  %v2059 = vadd.f32 0.0, %v2058
  %v2060 = vpop.f32.mrb[0].mxu0
  %2061 = vmatprep.mubr.bf16.mxu0 0
  %2062 = vmatmul.mubr.bf16.gmra.mrb[0].mxu0 %v1197
  %v2063 = vpop.f32.mrb[0].mxu0
  %v2064 = vadd.f32 0.0, %v2063
  %v2065 = vpop.f32.mrb[0].mxu0
  %v2066 = vpop.f32.mrb[0].mxu0
  %v2067 = vadd.f32 0.0, %v2066
  %v2068 = vpop.f32.mrb[0].mxu0
  %2069 = vmatprep.mubr.bf16.mxu0 0
  %2070 = vmatmul.mubr.bf16.gmra.mrb[0].mxu0 %v1200
  %v2071 = vpop.f32.mrb[0].mxu0
  %v2072 = vadd.f32 0.0, %v2071
  %v2073 = vpop.f32.mrb[0].mxu0
  %v2074 = vpop.f32.mrb[0].mxu0
  %v2075 = vadd.f32 0.0, %v2074
  %v2076 = vpop.f32.mrb[0].mxu0
  %2077 = vmatprep.mubr.bf16.mxu0 0
  %2078 = vmatmul.mubr.bf16.gmra.mrb[0].mxu0 %v1203
  %v2079 = vpop.f32.mrb[0].mxu0
  %v2080 = vadd.f32 0.0, %v2079
  %v2081 = vpop.f32.mrb[0].mxu0
  %v2082 = vpop.f32.mrb[0].mxu0
  %v2083 = vadd.f32 0.0, %v2082
  %v2084 = vpop.f32.mrb[0].mxu0
  %2085 = vmatprep.mubr.bf16.mxu0 0
  %2086 = vmatmul.mubr.bf16.gmra.mrb[0].mxu0 %v1206
  %v2087 = vpop.f32.mrb[0].mxu0
  %v2088 = vadd.f32 0.0, %v2087
  %v2089 = vpop.f32.mrb[0].mxu0
  %v2090 = vpop.f32.mrb[0].mxu0
  %v2091 = vadd.f32 0.0, %v2090
  %v2092 = vpop.f32.mrb[0].mxu0
  %2093 = vmatprep.mubr.bf16.mxu0 0
  %2094 = vmatmul.mubr.bf16.gmra.mrb[0].mxu0 %v1209
  %v2095 = vpop.f32.mrb[0].mxu0
  %v2096 = vadd.f32 0.0, %v2095
  %v2097 = vpop.f32.mrb[0].mxu0
  %v2098 = vpop.f32.mrb[0].mxu0
  %v2099 = vadd.f32 0.0, %v2098
  %v2100 = vpop.f32.mrb[0].mxu0
  %2101 = vmatprep.mubr.bf16.mxu0 0
  %2102 = vmatmul.mubr.bf16.gmra.mrb[0].mxu0 %v1212
  %v2103 = vpop.f32.mrb[0].mxu0
  %v2104 = vadd.f32 0.0, %v2103
  %v2105 = vpop.f32.mrb[0].mxu0
  %v2106 = vpop.f32.mrb[0].mxu0
  %v2107 = vadd.f32 0.0, %v2106
  %v2108 = vpop.f32.mrb[0].mxu0
  %2109 = vmatprep.mubr.bf16.mxu0 0
  %2110 = vmatmul.mubr.bf16.gmra.mrb[0].mxu0 %v1215
  %v2111 = vpop.f32.mrb[0].mxu0
  %v2112 = vadd.f32 0.0, %v2111
  %v2113 = vpop.f32.mrb[0].mxu0
  %v2114 = vpop.f32.mrb[0].mxu0
  %v2115 = vadd.f32 0.0, %v2114
  %v2116 = vpop.f32.mrb[0].mxu0
  %2117 = vmatprep.mubr.bf16.mxu0 0
  %2118 = vmatmul.mubr.bf16.gmra.mrb[0].mxu0 %v1218
  %v2119 = vpop.f32.mrb[0].mxu0
  %v2120 = vadd.f32 0.0, %v2119
  %v2121 = vpop.f32.mrb[0].mxu0
  %v2122 = vpop.f32.mrb[0].mxu0
  %v2123 = vadd.f32 0.0, %v2122
  %v2124 = vpop.f32.mrb[0].mxu0
  %2125 = vmatprep.mubr.bf16.mxu0 0
  %2126 = vmatmul.mubr.bf16.gmra.mrb[0].mxu0 %v1221
  %v2127 = vpop.f32.mrb[0].mxu0
  %v2128 = vadd.f32 0.0, %v2127
  %v2129 = vpop.f32.mrb[0].mxu0
  %v2130 = vpop.f32.mrb[0].mxu0
  %v2131 = vadd.f32 0.0, %v2130
  %v2132 = vpop.f32.mrb[0].mxu0
  %2133 = vmatprep.mubr.bf16.mxu0 0
  %2134 = vmatmul.mubr.bf16.gmra.mrb[0].mxu0 %v1224
  %v2135 = vpop.f32.mrb[0].mxu0
  %v2136 = vadd.f32 0.0, %v2135
  %v2137 = vpop.f32.mrb[0].mxu0
  %v2138 = vpop.f32.mrb[0].mxu0
  %v2139 = vadd.f32 0.0, %v2138
  %v2140 = vpop.f32.mrb[0].mxu0
  %2141 = vmatprep.mubr.bf16.mxu0 0
  %2142 = vmatmul.mubr.bf16.gmra.mrb[0].mxu0 %v1227
  %v2143 = vpop.f32.mrb[0].mxu0
  %v2144 = vadd.f32 0.0, %v2143
  %v2145 = vpop.f32.mrb[0].mxu0
  %v2146 = vpop.f32.mrb[0].mxu0
  %v2147 = vadd.f32 0.0, %v2146
  %v2148 = vpop.f32.mrb[0].mxu0
  %2149 = vmatprep.mubr.bf16.mxu0 0
  %2150 = vmatmul.mubr.bf16.gmra.mrb[0].mxu0 %v1230
  %v2151 = vpop.f32.mrb[0].mxu0
  %v2152 = vadd.f32 0.0, %v2151
  %v2153 = vpop.f32.mrb[0].mxu0
  %v2154 = vpop.f32.mrb[0].mxu0
  %v2155 = vadd.f32 0.0, %v2154
  %v2156 = vpop.f32.mrb[0].mxu0
  %2157 = vmatprep.mubr.bf16.mxu0 0
  %2158 = vmatmul.mubr.bf16.gmra.mrb[0].mxu0 %v1233
  %v2159 = vpop.f32.mrb[0].mxu0
  %v2160 = vadd.f32 0.0, %v2159
  %v2161 = vpop.f32.mrb[0].mxu0
  %v2162 = vpop.f32.mrb[0].mxu0
  %v2163 = vadd.f32 0.0, %v2162
  %v2164 = vpop.f32.mrb[0].mxu0
  %2165 = vmatprep.mubr.bf16.mxu0 0
  %2166 = vmatmul.mubr.bf16.gmra.mrb[0].mxu0 %v1236
  %v2167 = vpop.f32.mrb[0].mxu0
  %v2168 = vadd.f32 0.0, %v2167
  %v2169 = vpop.f32.mrb[0].mxu0
  %v2170 = vpop.f32.mrb[0].mxu0
  %v2171 = vadd.f32 0.0, %v2170
  %v2172 = vpop.f32.mrb[0].mxu0
  %2173 = vmatprep.mubr.bf16.mxu0 0
  %2174 = vmatmul.mubr.bf16.gmra.mrb[0].mxu0 %v1239
  %v2175 = vpop.f32.mrb[0].mxu0
  %v2176 = vadd.f32 0.0, %v2175
  %v2177 = vpop.f32.mrb[0].mxu0
  %v2178 = vpop.f32.mrb[0].mxu0
  %v2179 = vadd.f32 0.0, %v2178
  %v2180 = vpop.f32.mrb[0].mxu0
  %2181 = vmatprep.mubr.bf16.mxu0 0
  %2182 = vmatmul.mubr.bf16.gmra.mrb[0].mxu0 %v1242
  %v2183 = vpop.f32.mrb[0].mxu0
  %v2184 = vadd.f32 0.0, %v2183
  %v2185 = vpop.f32.mrb[0].mxu0
  %v2186 = vpop.f32.mrb[0].mxu0
  %v2187 = vadd.f32 0.0, %v2186
  %v2188 = vpop.f32.mrb[0].mxu0
  %2189 = vmatprep.mubr.bf16.mxu0 0
  %2190 = vmatmul.mubr.bf16.gmra.mrb[0].mxu0 %v1245
  %v2191 = vpop.f32.mrb[0].mxu0
  %v2192 = vadd.f32 0.0, %v2191
  %v2193 = vpop.f32.mrb[0].mxu0
  %v2194 = vpop.f32.mrb[0].mxu0
  %v2195 = vadd.f32 0.0, %v2194
  %v2196 = vpop.f32.mrb[0].mxu0
  %2197 = vmatprep.mubr.bf16.mxu0 0
  %2198 = vmatmul.mubr.bf16.gmra.mrb[0].mxu0 %v1248
  %v2199 = vpop.f32.mrb[0].mxu0
  %v2200 = vadd.f32 0.0, %v2199
  %v2201 = vpop.f32.mrb[0].mxu0
  %v2202 = vpop.f32.mrb[0].mxu0
  %v2203 = vadd.f32 0.0, %v2202
  %v2204 = vpop.f32.mrb[0].mxu0
  %2205 = vmatprep.mubr.bf16.mxu0 0
  %2206 = vmatmul.mubr.bf16.gmra.mrb[0].mxu0 %v1251
  %v2207 = vpop.f32.mrb[0].mxu0
  %v2208 = vadd.f32 0.0, %v2207
  %v2209 = vpop.f32.mrb[0].mxu0
  %v2210 = vpop.f32.mrb[0].mxu0
  %v2211 = vadd.f32 0.0, %v2210
  %v2212 = vpop.f32.mrb[0].mxu0
  %2213 = vmatprep.mubr.bf16.mxu0 0
  %2214 = vmatmul.mubr.bf16.gmra.mrb[0].mxu0 %v1254
  %v2215 = vpop.f32.mrb[0].mxu0
  %v2216 = vadd.f32 0.0, %v2215
  %v2217 = vpop.f32.mrb[0].mxu0
  %v2218 = vpop.f32.mrb[0].mxu0
  %v2219 = vadd.f32 0.0, %v2218
  %v2220 = vpop.f32.mrb[0].mxu0
  %2221 = vmatprep.mubr.bf16.mxu0 0
  %2222 = vmatmul.mubr.bf16.gmra.mrb[0].mxu0 %v1257
  %v2223 = vpop.f32.mrb[0].mxu0
  %v2224 = vadd.f32 0.0, %v2223
  %v2225 = vpop.f32.mrb[0].mxu0
  %v2226 = vpop.f32.mrb[0].mxu0
  %v2227 = vadd.f32 0.0, %v2226
  %v2228 = vpop.f32.mrb[0].mxu0
  %2229 = vmatprep.mubr.bf16.mxu0 0
  %2230 = vmatmul.mubr.bf16.gmra.mrb[0].mxu0 %v1260
  %v2231 = vpop.f32.mrb[0].mxu0
  %v2232 = vadd.f32 0.0, %v2231
  %v2233 = vpop.f32.mrb[0].mxu0
  %v2234 = vpop.f32.mrb[0].mxu0
  %v2235 = vadd.f32 0.0, %v2234
  %v2236 = vpop.f32.mrb[0].mxu0
  %2237 = vmatprep.mubr.bf16.mxu0 0
  %2238 = vmatmul.mubr.bf16.gmra.mrb[0].mxu0 %v1263
  %v2239 = vpop.f32.mrb[0].mxu0
  %v2240 = vadd.f32 0.0, %v2239
  %v2241 = vpop.f32.mrb[0].mxu0
  %v2242 = vpop.f32.mrb[0].mxu0
  %v2243 = vadd.f32 0.0, %v2242
  %v2244 = vpop.f32.mrb[0].mxu0
  %2245 = vmatprep.mubr.bf16.mxu0 0
  %2246 = vmatmul.mubr.bf16.gmra.mrb[0].mxu0 %v1266
  %v2247 = vpop.f32.mrb[0].mxu0
  %v2248 = vadd.f32 0.0, %v2247
  %v2249 = vpop.f32.mrb[0].mxu0
  %v2250 = vpop.f32.mrb[0].mxu0
  %v2251 = vadd.f32 0.0, %v2250
  %v2252 = vpop.f32.mrb[0].mxu0
  %2253 = vmatprep.mubr.bf16.mxu0 0
  %2254 = vmatmul.mubr.bf16.gmra.mrb[0].mxu0 %v1269
  %v2255 = vpop.f32.mrb[0].mxu0
  %v2256 = vadd.f32 0.0, %v2255
  %v2257 = vpop.f32.mrb[0].mxu0
  %v2258 = vpop.f32.mrb[0].mxu0
  %v2259 = vadd.f32 0.0, %v2258
  %v2260 = vpop.f32.mrb[0].mxu0
  %2261 = vmatprep.mubr.bf16.mxu0 0
  %2262 = vmatmul.mubr.bf16.gmra.mrb[0].mxu0 %v1272
  %v2263 = vpop.f32.mrb[0].mxu0
  %v2264 = vadd.f32 0.0, %v2263
  %v2265 = vpop.f32.mrb[0].mxu0
  %v2266 = vpop.f32.mrb[0].mxu0
  %v2267 = vadd.f32 0.0, %v2266
  %v2268 = vpop.f32.mrb[0].mxu0
  %2269 = vmatprep.mubr.bf16.mxu0 0
  %2270 = vmatmul.mubr.bf16.gmra.mrb[0].mxu0 %v1275
  %v2271 = vpop.f32.mrb[0].mxu0
  %v2272 = vadd.f32 0.0, %v2271
  %v2273 = vpop.f32.mrb[0].mxu0
  %v2274 = vpop.f32.mrb[0].mxu0
  %v2275 = vadd.f32 0.0, %v2274
  %v2276 = vpop.f32.mrb[0].mxu0
  %2277 = vmatprep.mubr.bf16.mxu0 0
  %2278 = vmatmul.mubr.bf16.gmra.mrb[0].mxu0 %v1278
  %v2279 = vpop.f32.mrb[0].mxu0
  %v2280 = vadd.f32 0.0, %v2279
  %v2281 = vpop.f32.mrb[0].mxu0
  %v2282 = vpop.f32.mrb[0].mxu0
  %v2283 = vadd.f32 0.0, %v2282
  %v2284 = vpop.f32.mrb[0].mxu0
  %2285 = vmatprep.mubr.bf16.mxu0 0
  %2286 = vmatmul.mubr.bf16.gmra.mrb[0].mxu0 %v1281
  %v2287 = vpop.f32.mrb[0].mxu0
  %v2288 = vadd.f32 0.0, %v2287
  %v2289 = vpop.f32.mrb[0].mxu0
  %v2290 = vpop.f32.mrb[0].mxu0
  %v2291 = vadd.f32 0.0, %v2290
  %v2292 = vpop.f32.mrb[0].mxu0
  %2293 = vmatprep.mubr.bf16.mxu0 0
  %2294 = vmatmul.mubr.bf16.gmra.mrb[0].mxu0 %v1284
  %v2295 = vpop.f32.mrb[0].mxu0
  %v2296 = vadd.f32 0.0, %v2295
  %v2297 = vpop.f32.mrb[0].mxu0
  %v2298 = vpop.f32.mrb[0].mxu0
  %v2299 = vadd.f32 0.0, %v2298
  %v2300 = vpop.f32.mrb[0].mxu0
  %2301 = vmatprep.mubr.bf16.mxu0 0
  %2302 = vmatmul.mubr.bf16.gmra.mrb[0].mxu0 %v1287
  %v2303 = vpop.f32.mrb[0].mxu0
  %v2304 = vadd.f32 0.0, %v2303
  %v2305 = vpop.f32.mrb[0].mxu0
  %v2306 = vpop.f32.mrb[0].mxu0
  %v2307 = vadd.f32 0.0, %v2306
  %v2308 = vpop.f32.mrb[0].mxu0
  %2309 = vmatprep.mubr.bf16.mxu0 0
  %2310 = vmatmul.mubr.bf16.gmra.mrb[0].mxu0 %v1290
  %v2311 = vpop.f32.mrb[0].mxu0
  %v2312 = vadd.f32 0.0, %v2311
  %v2313 = vpop.f32.mrb[0].mxu0
  %v2314 = vpop.f32.mrb[0].mxu0
  %v2315 = vadd.f32 0.0, %v2314
  %v2316 = vpop.f32.mrb[0].mxu0
  %2317 = vmatprep.mubr.bf16.mxu0 0
  %2318 = vmatmul.mubr.bf16.gmra.mrb[0].mxu0 %v1293
  %v2319 = vpop.f32.mrb[0].mxu0
  %v2320 = vadd.f32 0.0, %v2319
  %v2321 = vpop.f32.mrb[0].mxu0
  %v2322 = vpop.f32.mrb[0].mxu0
  %v2323 = vadd.f32 0.0, %v2322
  %v2324 = vpop.f32.mrb[0].mxu0
  %2325 = vmatprep.mubr.bf16.mxu0 0
  %2326 = vmatmul.mubr.bf16.gmra.mrb[0].mxu0 %v1296
  %v2327 = vpop.f32.mrb[0].mxu0
  %v2328 = vadd.f32 0.0, %v2327
  %v2329 = vpop.f32.mrb[0].mxu0
  %v2330 = vpop.f32.mrb[0].mxu0
  %v2331 = vadd.f32 0.0, %v2330
  %v2332 = vpop.f32.mrb[0].mxu0
  %2333 = vmatprep.mubr.bf16.mxu0 0
  %2334 = vmatmul.mubr.bf16.gmra.mrb[0].mxu0 %v1299
  %v2335 = vpop.f32.mrb[0].mxu0
  %v2336 = vadd.f32 0.0, %v2335
  %v2337 = vpop.f32.mrb[0].mxu0
  %v2338 = vpop.f32.mrb[0].mxu0
  %v2339 = vadd.f32 0.0, %v2338
  %v2340 = vpop.f32.mrb[0].mxu0
  %2341 = vmatprep.mubr.bf16.mxu0 0
  %2342 = vmatmul.mubr.bf16.gmra.mrb[0].mxu0 %v1302
  %v2343 = vpop.f32.mrb[0].mxu0
  %v2344 = vadd.f32 0.0, %v2343
  %v2345 = vpop.f32.mrb[0].mxu0
  %v2346 = vpop.f32.mrb[0].mxu0
  %v2347 = vadd.f32 0.0, %v2346
  %v2348 = vpop.f32.mrb[0].mxu0
  %2349 = vmatprep.mubr.bf16.mxu0 0
  %2350 = vmatmul.mubr.bf16.gmra.mrb[0].mxu0 %v1305
  %v2351 = vpop.f32.mrb[0].mxu0
  %v2352 = vadd.f32 0.0, %v2351
  %v2353 = vpop.f32.mrb[0].mxu0
  %v2354 = vpop.f32.mrb[0].mxu0
  %v2355 = vadd.f32 0.0, %v2354
  %v2356 = vpop.f32.mrb[0].mxu0
  %2357 = vmatprep.mubr.bf16.mxu0 0
  %2358 = vmatmul.mubr.bf16.gmra.mrb[0].mxu0 %v1308
  %v2359 = vpop.f32.mrb[0].mxu0
  %v2360 = vadd.f32 0.0, %v2359
  %v2361 = vpop.f32.mrb[0].mxu0
  %v2362 = vpop.f32.mrb[0].mxu0
  %v2363 = vadd.f32 0.0, %v2362
  %v2364 = vpop.f32.mrb[0].mxu0
  %2365 = vmatprep.mubr.bf16.mxu0 0
  %2366 = vmatmul.mubr.bf16.gmra.mrb[0].mxu0 %v1311
  %v2367 = vpop.f32.mrb[0].mxu0
  %v2368 = vadd.f32 0.0, %v2367
  %v2369 = vpop.f32.mrb[0].mxu0
  %v2370 = vpop.f32.mrb[0].mxu0
  %v2371 = vadd.f32 0.0, %v2370
  %v2372 = vpop.f32.mrb[0].mxu0
  %2373 = vdwg.mxu0
  %v2374 = vtanh.pop %v1352
  %v2375 = vtanh.pop %v1355
  %v2376 = vtanh.pop %v1360
  %v2377 = vtanh.pop %v1363
  %v2378 = vtanh.pop %v1368
  %v2379 = vtanh.pop %v1371
  %v2380 = vtanh.pop %v1376
  %v2381 = vtanh.pop %v1379
  %v2382 = vtanh.pop %v1384
  %v2383 = vtanh.pop %v1387
  %v2384 = vtanh.pop %v1392
  %v2385 = vtanh.pop %v1395
  %v2386 = vtanh.pop %v1400
  %v2387 = vtanh.pop %v1403
  %v2388 = vtanh.pop %v1408
  %v2389 = vtanh.pop %v1411
  %v2390 = vtanh.pop %v1416
  %v2391 = vtanh.pop %v1419
  %v2392 = vtanh.pop %v1424
  %v2393 = vtanh.pop %v1427
  %v2394 = vtanh.pop %v1432
  %v2395 = vtanh.pop %v1435
  %v2396 = vtanh.pop %v1440
  %v2397 = vtanh.pop %v1443
  %v2398 = vtanh.pop %v1448
  %v2399 = vtanh.pop %v1451
  %v2400 = vtanh.pop %v1456
  %v2401 = vtanh.pop %v1459
  %v2402 = vtanh.pop %v1464
  %v2403 = vtanh.pop %v1467
  %v2404 = vtanh.pop %v1472
  %v2405 = vtanh.pop %v1475
  %v2406 = vtanh.pop %v1480
  %v2407 = vtanh.pop %v1483
  %v2408 = vtanh.pop %v1488
  %v2409 = vtanh.pop %v1491
  %v2410 = vtanh.pop %v1496
  %v2411 = vtanh.pop %v1499
  %v2412 = vtanh.pop %v1504
  %v2413 = vtanh.pop %v1507
  %v2414 = vtanh.pop %v1512
  %v2415 = vtanh.pop %v1515
  %v2416 = vtanh.pop %v1520
  %v2417 = vtanh.pop %v1523
  %v2418 = vtanh.pop %v1528
  %v2419 = vtanh.pop %v1531
  %v2420 = vtanh.pop %v1536
  %v2421 = vtanh.pop %v1539
  %v2422 = vtanh.pop %v1544
  %v2423 = vtanh.pop %v1547
  %v2424 = vtanh.pop %v1552
  %v2425 = vtanh.pop %v1555
  %v2426 = vtanh.pop %v1560
  %v2427 = vtanh.pop %v1563
  %v2428 = vtanh.pop %v1568
  %v2429 = vtanh.pop %v1571
  %v2430 = vtanh.pop %v1576
  %v2431 = vtanh.pop %v1579
  %v2432 = vtanh.pop %v1584
  %v2433 = vtanh.pop %v1587
  %v2434 = vtanh.pop %v1592
  %v2435 = vtanh.pop %v1595
  %v2436 = vtanh.pop %v1600
  %v2437 = vtanh.pop %v1603
  %v2438 = vtanh.pop %v1608
  %v2439 = vtanh.pop %v1611
  %v2440 = vtanh.pop %v1616
  %v2441 = vtanh.pop %v1619
  %v2442 = vtanh.pop %v1624
  %v2443 = vtanh.pop %v1627
  %v2444 = vtanh.pop %v1632
  %v2445 = vtanh.pop %v1635
  %v2446 = vtanh.pop %v1640
  %v2447 = vtanh.pop %v1643
  %v2448 = vtanh.pop %v1648
  %v2449 = vtanh.pop %v1651
  %v2450 = vtanh.pop %v1656
  %v2451 = vtanh.pop %v1659
  %v2452 = vtanh.pop %v1664
  %v2453 = vtanh.pop %v1667
  %v2454 = vtanh.pop %v1672
  %v2455 = vtanh.pop %v1675
  %v2456 = vtanh.pop %v1680
  %v2457 = vtanh.pop %v1683
  %v2458 = vtanh.pop %v1688
  %v2459 = vtanh.pop %v1691
  %v2460 = vtanh.pop %v1696
  %v2461 = vtanh.pop %v1699
  %v2462 = vtanh.pop %v1704
  %v2463 = vtanh.pop %v1707
  %v2464 = vtanh.pop %v1712
  %v2465 = vtanh.pop %v1715
  %v2466 = vtanh.pop %v1720
  %v2467 = vtanh.pop %v1723
  %v2468 = vtanh.pop %v1728
  %v2469 = vtanh.pop %v1731
  %v2470 = vtanh.pop %v1736
  %v2471 = vtanh.pop %v1739
  %v2472 = vtanh.pop %v1744
  %v2473 = vtanh.pop %v1747
  %v2474 = vtanh.pop %v1752
  %v2475 = vtanh.pop %v1755
  %v2476 = vtanh.pop %v1760
  %v2477 = vtanh.pop %v1763
  %v2478 = vtanh.pop %v1768
  %v2479 = vtanh.pop %v1771
  %v2480 = vtanh.pop %v1776
  %v2481 = vtanh.pop %v1779
  %v2482 = vtanh.pop %v1784
  %v2483 = vtanh.pop %v1787
  %v2484 = vtanh.pop %v1792
  %v2485 = vtanh.pop %v1795
  %v2486 = vtanh.pop %v1800
  %v2487 = vtanh.pop %v1803
  %v2488 = vtanh.pop %v1808
  %v2489 = vtanh.pop %v1811
  %v2490 = vtanh.pop %v1816
  %v2491 = vtanh.pop %v1819
  %v2492 = vtanh.pop %v1824
  %v2493 = vtanh.pop %v1827
  %v2494 = vtanh.pop %v1832
  %v2495 = vtanh.pop %v1835
  %v2496 = vtanh.pop %v1840
  %v2497 = vtanh.pop %v1843
  %v2498 = vtanh.pop %v1848
  %v2499 = vtanh.pop %v1851
  %v2500 = vtanh.pop %v1856
  %v2501 = vtanh.pop %v1859
  %v2502 = vtanh.pop %v1864
  %v2503 = vtanh.pop %v1867
  %v2504 = vtanh.pop %v1872
  %v2505 = vtanh.pop %v1875
  %v2506 = vtanh.pop %v1880
  %v2507 = vtanh.pop %v1883
  %v2508 = vtanh.pop %v1888
  %v2509 = vtanh.pop %v1891
  %v2510 = vtanh.pop %v1896
  %v2511 = vtanh.pop %v1899
  %v2512 = vtanh.pop %v1904
  %v2513 = vtanh.pop %v1907
  %v2514 = vtanh.pop %v1912
  %v2515 = vtanh.pop %v1915
  %v2516 = vtanh.pop %v1920
  %v2517 = vtanh.pop %v1923
  %v2518 = vtanh.pop %v1928
  %v2519 = vtanh.pop %v1931
  %v2520 = vtanh.pop %v1936
  %v2521 = vtanh.pop %v1939
  %v2522 = vtanh.pop %v1944
  %v2523 = vtanh.pop %v1947
  %v2524 = vtanh.pop %v1952
  %v2525 = vtanh.pop %v1955
  %v2526 = vtanh.pop %v1960
  %v2527 = vtanh.pop %v1963
  %v2528 = vtanh.pop %v1968
  %v2529 = vtanh.pop %v1971
  %v2530 = vtanh.pop %v1976
  %v2531 = vtanh.pop %v1979
  %v2532 = vtanh.pop %v1984
  %v2533 = vtanh.pop %v1987
  %v2534 = vtanh.pop %v1992
  %v2535 = vtanh.pop %v1995
  %v2536 = vtanh.pop %v2000
  %v2537 = vtanh.pop %v2003
  %v2538 = vtanh.pop %v2008
  %v2539 = vtanh.pop %v2011
  %v2540 = vtanh.pop %v2016
  %v2541 = vtanh.pop %v2019
  %v2542 = vtanh.pop %v2024
  %v2543 = vtanh.pop %v2027
  %v2544 = vtanh.pop %v2032
  %v2545 = vtanh.pop %v2035
  %v2546 = vtanh.pop %v2040
  %v2547 = vtanh.pop %v2043
  %v2548 = vtanh.pop %v2048
  %v2549 = vtanh.pop %v2051
  %v2550 = vtanh.pop %v2056
  %v2551 = vtanh.pop %v2059
  %v2552 = vtanh.pop %v2064
  %v2553 = vtanh.pop %v2067
  %v2554 = vtanh.pop %v2072
  %v2555 = vtanh.pop %v2075
  %v2556 = vtanh.pop %v2080
  %v2557 = vtanh.pop %v2083
  %v2558 = vtanh.pop %v2088
  %v2559 = vtanh.pop %v2091
  %v2560 = vtanh.pop %v2096
  %v2561 = vtanh.pop %v2099
  %v2562 = vtanh.pop %v2104
  %v2563 = vtanh.pop %v2107
  %v2564 = vtanh.pop %v2112
  %v2565 = vtanh.pop %v2115
  %v2566 = vtanh.pop %v2120
  %v2567 = vtanh.pop %v2123
  %v2568 = vtanh.pop %v2128
  %v2569 = vtanh.pop %v2131
  %v2570 = vtanh.pop %v2136
  %v2571 = vtanh.pop %v2139
  %v2572 = vtanh.pop %v2144
  %v2573 = vtanh.pop %v2147
  %v2574 = vtanh.pop %v2152
  %v2575 = vtanh.pop %v2155
  %v2576 = vtanh.pop %v2160
  %v2577 = vtanh.pop %v2163
  %v2578 = vtanh.pop %v2168
  %v2579 = vtanh.pop %v2171
  %v2580 = vtanh.pop %v2176
  %v2581 = vtanh.pop %v2179
  %v2582 = vtanh.pop %v2184
  %v2583 = vtanh.pop %v2187
  %v2584 = vtanh.pop %v2192
  %v2585 = vtanh.pop %v2195
  %v2586 = vtanh.pop %v2200
  %v2587 = vtanh.pop %v2203
  %v2588 = vtanh.pop %v2208
  %v2589 = vtanh.pop %v2211
  %v2590 = vtanh.pop %v2216
  %v2591 = vtanh.pop %v2219
  %v2592 = vtanh.pop %v2224
  %v2593 = vtanh.pop %v2227
  %v2594 = vtanh.pop %v2232
  %v2595 = vtanh.pop %v2235
  %v2596 = vtanh.pop %v2240
  %v2597 = vtanh.pop %v2243
  %v2598 = vtanh.pop %v2248
  %v2599 = vtanh.pop %v2251
  %v2600 = vtanh.pop %v2256
  %v2601 = vtanh.pop %v2259
  %v2602 = vtanh.pop %v2264
  %v2603 = vtanh.pop %v2267
  %v2604 = vtanh.pop %v2272
  %v2605 = vtanh.pop %v2275
  %v2606 = vtanh.pop %v2280
  %v2607 = vtanh.pop %v2283
  %v2608 = vtanh.pop %v2288
  %v2609 = vtanh.pop %v2291
  %v2610 = vtanh.pop %v2296
  %v2611 = vtanh.pop %v2299
  %v2612 = vtanh.pop %v2304
  %v2613 = vtanh.pop %v2307
  %v2614 = vtanh.pop %v2312
  %v2615 = vtanh.pop %v2315
  %v2616 = vtanh.pop %v2320
  %v2617 = vtanh.pop %v2323
  %v2618 = vtanh.pop %v2328
  %v2619 = vtanh.pop %v2331
  %v2620 = vtanh.pop %v2336
  %v2621 = vtanh.pop %v2339
  %v2622 = vtanh.pop %v2344
  %v2623 = vtanh.pop %v2347
  %v2624 = vtanh.pop %v2352
  %v2625 = vtanh.pop %v2355
  %v2626 = vtanh.pop %v2360
  %v2627 = vtanh.pop %v2363
  %v2628 = vtanh.pop %v2368
  %v2629 = vtanh.pop %v2371
  %2630 = vst [vmem:[%s2] sm:$0xff] %v2374
  %2631 = vst [vmem:[%s2 + $0x8] sm:$0xff] %v2375
  %2632 = vst [vmem:[%s2 + $0x10] sm:$0xff] %v2376
  %2633 = vst [vmem:[%s2 + $0x18] sm:$0xff] %v2377
  %2634 = vst [vmem:[%s2 + $0x20] sm:$0xff] %v2378
  %2635 = vst [vmem:[%s2 + $0x28] sm:$0xff] %v2379
  %2636 = vst [vmem:[%s2 + $0x30] sm:$0xff] %v2380
  %2637 = vst [vmem:[%s2 + $0x38] sm:$0xff] %v2381
  %2638 = vst [vmem:[%s2 + $0x40] sm:$0xff] %v2382
  %2639 = vst [vmem:[%s2 + $0x48] sm:$0xff] %v2383
  %2640 = vst [vmem:[%s2 + $0x50] sm:$0xff] %v2384
  %2641 = vst [vmem:[%s2 + $0x58] sm:$0xff] %v2385
  %2642 = vst [vmem:[%s2 + $0x60] sm:$0xff] %v2386
  %2643 = vst [vmem:[%s2 + $0x68] sm:$0xff] %v2387
  %2644 = vst [vmem:[%s2 + $0x70] sm:$0xff] %v2388
  %2645 = vst [vmem:[%s2 + $0x78] sm:$0xff] %v2389
  %2646 = vst [vmem:[%s2 + $0x80] sm:$0xff] %v2390
  %2647 = vst [vmem:[%s2 + $0x88] sm:$0xff] %v2391
  %2648 = vst [vmem:[%s2 + $0x90] sm:$0xff] %v2392
  %2649 = vst [vmem:[%s2 + $0x98] sm:$0xff] %v2393
  %2650 = vst [vmem:[%s2 + $0xa0] sm:$0xff] %v2394
  %2651 = vst [vmem:[%s2 + $0xa8] sm:$0xff] %v2395
  %2652 = vst [vmem:[%s2 + $0xb0] sm:$0xff] %v2396
  %2653 = vst [vmem:[%s2 + $0xb8] sm:$0xff] %v2397
  %2654 = vst [vmem:[%s2 + $0xc0] sm:$0xff] %v2398
  %2655 = vst [vmem:[%s2 + $0xc8] sm:$0xff] %v2399
  %2656 = vst [vmem:[%s2 + $0xd0] sm:$0xff] %v2400
  %2657 = vst [vmem:[%s2 + $0xd8] sm:$0xff] %v2401
  %2658 = vst [vmem:[%s2 + $0xe0] sm:$0xff] %v2402
  %2659 = vst [vmem:[%s2 + $0xe8] sm:$0xff] %v2403
  %2660 = vst [vmem:[%s2 + $0xf0] sm:$0xff] %v2404
  %2661 = vst [vmem:[%s2 + $0xf8] sm:$0xff] %v2405
  %2662 = vst [vmem:[%s2 + $0x100] sm:$0xff] %v2406
  %2663 = vst [vmem:[%s2 + $0x108] sm:$0xff] %v2407
  %2664 = vst [vmem:[%s2 + $0x110] sm:$0xff] %v2408
  %2665 = vst [vmem:[%s2 + $0x118] sm:$0xff] %v2409
  %2666 = vst [vmem:[%s2 + $0x120] sm:$0xff] %v2410
  %2667 = vst [vmem:[%s2 + $0x128] sm:$0xff] %v2411
  %2668 = vst [vmem:[%s2 + $0x130] sm:$0xff] %v2412
  %2669 = vst [vmem:[%s2 + $0x138] sm:$0xff] %v2413
  %2670 = vst [vmem:[%s2 + $0x140] sm:$0xff] %v2414
  %2671 = vst [vmem:[%s2 + $0x148] sm:$0xff] %v2415
  %2672 = vst [vmem:[%s2 + $0x150] sm:$0xff] %v2416
  %2673 = vst [vmem:[%s2 + $0x158] sm:$0xff] %v2417
  %2674 = vst [vmem:[%s2 + $0x160] sm:$0xff] %v2418
  %2675 = vst [vmem:[%s2 + $0x168] sm:$0xff] %v2419
  %2676 = vst [vmem:[%s2 + $0x170] sm:$0xff] %v2420
  %2677 = vst [vmem:[%s2 + $0x178] sm:$0xff] %v2421
  %2678 = vst [vmem:[%s2 + $0x180] sm:$0xff] %v2422
  %2679 = vst [vmem:[%s2 + $0x188] sm:$0xff] %v2423
  %2680 = vst [vmem:[%s2 + $0x190] sm:$0xff] %v2424
  %2681 = vst [vmem:[%s2 + $0x198] sm:$0xff] %v2425
  %2682 = vst [vmem:[%s2 + $0x1a0] sm:$0xff] %v2426
  %2683 = vst [vmem:[%s2 + $0x1a8] sm:$0xff] %v2427
  %2684 = vst [vmem:[%s2 + $0x1b0] sm:$0xff] %v2428
  %2685 = vst [vmem:[%s2 + $0x1b8] sm:$0xff] %v2429
  %2686 = vst [vmem:[%s2 + $0x1c0] sm:$0xff] %v2430
  %2687 = vst [vmem:[%s2 + $0x1c8] sm:$0xff] %v2431
  %2688 = vst [vmem:[%s2 + $0x1d0] sm:$0xff] %v2432
  %2689 = vst [vmem:[%s2 + $0x1d8] sm:$0xff] %v2433
  %2690 = vst [vmem:[%s2 + $0x1e0] sm:$0xff] %v2434
  %2691 = vst [vmem:[%s2 + $0x1e8] sm:$0xff] %v2435
  %2692 = vst [vmem:[%s2 + $0x1f0] sm:$0xff] %v2436
  %2693 = vst [vmem:[%s2 + $0x1f8] sm:$0xff] %v2437
  %2694 = vst [vmem:[%s2 + $0x200] sm:$0xff] %v2438
  %2695 = vst [vmem:[%s2 + $0x208] sm:$0xff] %v2439
  %2696 = vst [vmem:[%s2 + $0x210] sm:$0xff] %v2440
  %2697 = vst [vmem:[%s2 + $0x218] sm:$0xff] %v2441
  %2698 = vst [vmem:[%s2 + $0x220] sm:$0xff] %v2442
  %2699 = vst [vmem:[%s2 + $0x228] sm:$0xff] %v2443
  %2700 = vst [vmem:[%s2 + $0x230] sm:$0xff] %v2444
  %2701 = vst [vmem:[%s2 + $0x238] sm:$0xff] %v2445
  %2702 = vst [vmem:[%s2 + $0x240] sm:$0xff] %v2446
  %2703 = vst [vmem:[%s2 + $0x248] sm:$0xff] %v2447
  %2704 = vst [vmem:[%s2 + $0x250] sm:$0xff] %v2448
  %2705 = vst [vmem:[%s2 + $0x258] sm:$0xff] %v2449
  %2706 = vst [vmem:[%s2 + $0x260] sm:$0xff] %v2450
  %2707 = vst [vmem:[%s2 + $0x268] sm:$0xff] %v2451
  %2708 = vst [vmem:[%s2 + $0x270] sm:$0xff] %v2452
  %2709 = vst [vmem:[%s2 + $0x278] sm:$0xff] %v2453
  %2710 = vst [vmem:[%s2 + $0x280] sm:$0xff] %v2454
  %2711 = vst [vmem:[%s2 + $0x288] sm:$0xff] %v2455
  %2712 = vst [vmem:[%s2 + $0x290] sm:$0xff] %v2456
  %2713 = vst [vmem:[%s2 + $0x298] sm:$0xff] %v2457
  %2714 = vst [vmem:[%s2 + $0x2a0] sm:$0xff] %v2458
  %2715 = vst [vmem:[%s2 + $0x2a8] sm:$0xff] %v2459
  %2716 = vst [vmem:[%s2 + $0x2b0] sm:$0xff] %v2460
  %2717 = vst [vmem:[%s2 + $0x2b8] sm:$0xff] %v2461
  %2718 = vst [vmem:[%s2 + $0x2c0] sm:$0xff] %v2462
  %2719 = vst [vmem:[%s2 + $0x2c8] sm:$0xff] %v2463
  %2720 = vst [vmem:[%s2 + $0x2d0] sm:$0xff] %v2464
  %2721 = vst [vmem:[%s2 + $0x2d8] sm:$0xff] %v2465
  %2722 = vst [vmem:[%s2 + $0x2e0] sm:$0xff] %v2466
  %2723 = vst [vmem:[%s2 + $0x2e8] sm:$0xff] %v2467
  %2724 = vst [vmem:[%s2 + $0x2f0] sm:$0xff] %v2468
  %2725 = vst [vmem:[%s2 + $0x2f8] sm:$0xff] %v2469
  %2726 = vst [vmem:[%s2 + $0x300] sm:$0xff] %v2470
  %2727 = vst [vmem:[%s2 + $0x308] sm:$0xff] %v2471
  %2728 = vst [vmem:[%s2 + $0x310] sm:$0xff] %v2472
  %2729 = vst [vmem:[%s2 + $0x318] sm:$0xff] %v2473
  %2730 = vst [vmem:[%s2 + $0x320] sm:$0xff] %v2474
  %2731 = vst [vmem:[%s2 + $0x328] sm:$0xff] %v2475
  %2732 = vst [vmem:[%s2 + $0x330] sm:$0xff] %v2476
  %2733 = vst [vmem:[%s2 + $0x338] sm:$0xff] %v2477
  %2734 = vst [vmem:[%s2 + $0x340] sm:$0xff] %v2478
  %2735 = vst [vmem:[%s2 + $0x348] sm:$0xff] %v2479
  %2736 = vst [vmem:[%s2 + $0x350] sm:$0xff] %v2480
  %2737 = vst [vmem:[%s2 + $0x358] sm:$0xff] %v2481
  %2738 = vst [vmem:[%s2 + $0x360] sm:$0xff] %v2482
  %2739 = vst [vmem:[%s2 + $0x368] sm:$0xff] %v2483
  %2740 = vst [vmem:[%s2 + $0x370] sm:$0xff] %v2484
  %2741 = vst [vmem:[%s2 + $0x378] sm:$0xff] %v2485
  %2742 = vst [vmem:[%s2 + $0x380] sm:$0xff] %v2486
  %2743 = vst [vmem:[%s2 + $0x388] sm:$0xff] %v2487
  %2744 = vst [vmem:[%s2 + $0x390] sm:$0xff] %v2488
  %2745 = vst [vmem:[%s2 + $0x398] sm:$0xff] %v2489
  %2746 = vst [vmem:[%s2 + $0x3a0] sm:$0xff] %v2490
  %2747 = vst [vmem:[%s2 + $0x3a8] sm:$0xff] %v2491
  %2748 = vst [vmem:[%s2 + $0x3b0] sm:$0xff] %v2492
  %2749 = vst [vmem:[%s2 + $0x3b8] sm:$0xff] %v2493
  %2750 = vst [vmem:[%s2 + $0x3c0] sm:$0xff] %v2494
  %2751 = vst [vmem:[%s2 + $0x3c8] sm:$0xff] %v2495
  %2752 = vst [vmem:[%s2 + $0x3d0] sm:$0xff] %v2496
  %2753 = vst [vmem:[%s2 + $0x3d8] sm:$0xff] %v2497
  %2754 = vst [vmem:[%s2 + $0x3e0] sm:$0xff] %v2498
  %2755 = vst [vmem:[%s2 + $0x3e8] sm:$0xff] %v2499
  %2756 = vst [vmem:[%s2 + $0x3f0] sm:$0xff] %v2500
  %2757 = vst [vmem:[%s2 + $0x3f8] sm:$0xff] %v2501
  %2758 = vst [vmem:[%s2 + $0x400] sm:$0xff] %v2502
  %2759 = vst [vmem:[%s2 + $0x408] sm:$0xff] %v2503
  %2760 = vst [vmem:[%s2 + $0x410] sm:$0xff] %v2504
  %2761 = vst [vmem:[%s2 + $0x418] sm:$0xff] %v2505
  %2762 = vst [vmem:[%s2 + $0x420] sm:$0xff] %v2506
  %2763 = vst [vmem:[%s2 + $0x428] sm:$0xff] %v2507
  %2764 = vst [vmem:[%s2 + $0x430] sm:$0xff] %v2508
  %2765 = vst [vmem:[%s2 + $0x438] sm:$0xff] %v2509
  %2766 = vst [vmem:[%s2 + $0x440] sm:$0xff] %v2510
  %2767 = vst [vmem:[%s2 + $0x448] sm:$0xff] %v2511
  %2768 = vst [vmem:[%s2 + $0x450] sm:$0xff] %v2512
  %2769 = vst [vmem:[%s2 + $0x458] sm:$0xff] %v2513
  %2770 = vst [vmem:[%s2 + $0x460] sm:$0xff] %v2514
  %2771 = vst [vmem:[%s2 + $0x468] sm:$0xff] %v2515
  %2772 = vst [vmem:[%s2 + $0x470] sm:$0xff] %v2516
  %2773 = vst [vmem:[%s2 + $0x478] sm:$0xff] %v2517
  %2774 = vst [vmem:[%s2 + $0x480] sm:$0xff] %v2518
  %2775 = vst [vmem:[%s2 + $0x488] sm:$0xff] %v2519
  %2776 = vst [vmem:[%s2 + $0x490] sm:$0xff] %v2520
  %2777 = vst [vmem:[%s2 + $0x498] sm:$0xff] %v2521
  %2778 = vst [vmem:[%s2 + $0x4a0] sm:$0xff] %v2522
  %2779 = vst [vmem:[%s2 + $0x4a8] sm:$0xff] %v2523
  %2780 = vst [vmem:[%s2 + $0x4b0] sm:$0xff] %v2524
  %2781 = vst [vmem:[%s2 + $0x4b8] sm:$0xff] %v2525
  %2782 = vst [vmem:[%s2 + $0x4c0] sm:$0xff] %v2526
  %2783 = vst [vmem:[%s2 + $0x4c8] sm:$0xff] %v2527
  %2784 = vst [vmem:[%s2 + $0x4d0] sm:$0xff] %v2528
  %2785 = vst [vmem:[%s2 + $0x4d8] sm:$0xff] %v2529
  %2786 = vst [vmem:[%s2 + $0x4e0] sm:$0xff] %v2530
  %2787 = vst [vmem:[%s2 + $0x4e8] sm:$0xff] %v2531
  %2788 = vst [vmem:[%s2 + $0x4f0] sm:$0xff] %v2532
  %2789 = vst [vmem:[%s2 + $0x4f8] sm:$0xff] %v2533
  %2790 = vst [vmem:[%s2 + $0x500] sm:$0xff] %v2534
  %2791 = vst [vmem:[%s2 + $0x508] sm:$0xff] %v2535
  %2792 = vst [vmem:[%s2 + $0x510] sm:$0xff] %v2536
  %2793 = vst [vmem:[%s2 + $0x518] sm:$0xff] %v2537
  %2794 = vst [vmem:[%s2 + $0x520] sm:$0xff] %v2538
  %2795 = vst [vmem:[%s2 + $0x528] sm:$0xff] %v2539
  %2796 = vst [vmem:[%s2 + $0x530] sm:$0xff] %v2540
  %2797 = vst [vmem:[%s2 + $0x538] sm:$0xff] %v2541
  %2798 = vst [vmem:[%s2 + $0x540] sm:$0xff] %v2542
  %2799 = vst [vmem:[%s2 + $0x548] sm:$0xff] %v2543
  %2800 = vst [vmem:[%s2 + $0x550] sm:$0xff] %v2544
  %2801 = vst [vmem:[%s2 + $0x558] sm:$0xff] %v2545
  %2802 = vst [vmem:[%s2 + $0x560] sm:$0xff] %v2546
  %2803 = vst [vmem:[%s2 + $0x568] sm:$0xff] %v2547
  %2804 = vst [vmem:[%s2 + $0x570] sm:$0xff] %v2548
  %2805 = vst [vmem:[%s2 + $0x578] sm:$0xff] %v2549
  %2806 = vst [vmem:[%s2 + $0x580] sm:$0xff] %v2550
  %2807 = vst [vmem:[%s2 + $0x588] sm:$0xff] %v2551
  %2808 = vst [vmem:[%s2 + $0x590] sm:$0xff] %v2552
  %2809 = vst [vmem:[%s2 + $0x598] sm:$0xff] %v2553
  %2810 = vst [vmem:[%s2 + $0x5a0] sm:$0xff] %v2554
  %2811 = vst [vmem:[%s2 + $0x5a8] sm:$0xff] %v2555
  %2812 = vst [vmem:[%s2 + $0x5b0] sm:$0xff] %v2556
  %2813 = vst [vmem:[%s2 + $0x5b8] sm:$0xff] %v2557
  %2814 = vst [vmem:[%s2 + $0x5c0] sm:$0xff] %v2558
  %2815 = vst [vmem:[%s2 + $0x5c8] sm:$0xff] %v2559
  %2816 = vst [vmem:[%s2 + $0x5d0] sm:$0xff] %v2560
  %2817 = vst [vmem:[%s2 + $0x5d8] sm:$0xff] %v2561
  %2818 = vst [vmem:[%s2 + $0x5e0] sm:$0xff] %v2562
  %2819 = vst [vmem:[%s2 + $0x5e8] sm:$0xff] %v2563
  %2820 = vst [vmem:[%s2 + $0x5f0] sm:$0xff] %v2564
  %2821 = vst [vmem:[%s2 + $0x5f8] sm:$0xff] %v2565
  %2822 = vst [vmem:[%s2 + $0x600] sm:$0xff] %v2566
  %2823 = vst [vmem:[%s2 + $0x608] sm:$0xff] %v2567
  %2824 = vst [vmem:[%s2 + $0x610] sm:$0xff] %v2568
  %2825 = vst [vmem:[%s2 + $0x618] sm:$0xff] %v2569
  %2826 = vst [vmem:[%s2 + $0x620] sm:$0xff] %v2570
  %2827 = vst [vmem:[%s2 + $0x628] sm:$0xff] %v2571
  %2828 = vst [vmem:[%s2 + $0x630] sm:$0xff] %v2572
  %2829 = vst [vmem:[%s2 + $0x638] sm:$0xff] %v2573
  %2830 = vst [vmem:[%s2 + $0x640] sm:$0xff] %v2574
  %2831 = vst [vmem:[%s2 + $0x648] sm:$0xff] %v2575
  %2832 = vst [vmem:[%s2 + $0x650] sm:$0xff] %v2576
  %2833 = vst [vmem:[%s2 + $0x658] sm:$0xff] %v2577
  %2834 = vst [vmem:[%s2 + $0x660] sm:$0xff] %v2578
  %2835 = vst [vmem:[%s2 + $0x668] sm:$0xff] %v2579
  %2836 = vst [vmem:[%s2 + $0x670] sm:$0xff] %v2580
  %2837 = vst [vmem:[%s2 + $0x678] sm:$0xff] %v2581
  %2838 = vst [vmem:[%s2 + $0x680] sm:$0xff] %v2582
  %2839 = vst [vmem:[%s2 + $0x688] sm:$0xff] %v2583
  %2840 = vst [vmem:[%s2 + $0x690] sm:$0xff] %v2584
  %2841 = vst [vmem:[%s2 + $0x698] sm:$0xff] %v2585
  %2842 = vst [vmem:[%s2 + $0x6a0] sm:$0xff] %v2586
  %2843 = vst [vmem:[%s2 + $0x6a8] sm:$0xff] %v2587
  %2844 = vst [vmem:[%s2 + $0x6b0] sm:$0xff] %v2588
  %2845 = vst [vmem:[%s2 + $0x6b8] sm:$0xff] %v2589
  %2846 = vst [vmem:[%s2 + $0x6c0] sm:$0xff] %v2590
  %2847 = vst [vmem:[%s2 + $0x6c8] sm:$0xff] %v2591
  %2848 = vst [vmem:[%s2 + $0x6d0] sm:$0xff] %v2592
  %2849 = vst [vmem:[%s2 + $0x6d8] sm:$0xff] %v2593
  %2850 = vst [vmem:[%s2 + $0x6e0] sm:$0xff] %v2594
  %2851 = vst [vmem:[%s2 + $0x6e8] sm:$0xff] %v2595
  %2852 = vst [vmem:[%s2 + $0x6f0] sm:$0xff] %v2596
  %2853 = vst [vmem:[%s2 + $0x6f8] sm:$0xff] %v2597
  %2854 = vst [vmem:[%s2 + $0x700] sm:$0xff] %v2598
  %2855 = vst [vmem:[%s2 + $0x708] sm:$0xff] %v2599
  %2856 = vst [vmem:[%s2 + $0x710] sm:$0xff] %v2600
  %2857 = vst [vmem:[%s2 + $0x718] sm:$0xff] %v2601
  %2858 = vst [vmem:[%s2 + $0x720] sm:$0xff] %v2602
  %2859 = vst [vmem:[%s2 + $0x728] sm:$0xff] %v2603
  %2860 = vst [vmem:[%s2 + $0x730] sm:$0xff] %v2604
  %2861 = vst [vmem:[%s2 + $0x738] sm:$0xff] %v2605
  %2862 = vst [vmem:[%s2 + $0x740] sm:$0xff] %v2606
  %2863 = vst [vmem:[%s2 + $0x748] sm:$0xff] %v2607
  %2864 = vst [vmem:[%s2 + $0x750] sm:$0xff] %v2608
  %2865 = vst [vmem:[%s2 + $0x758] sm:$0xff] %v2609
  %2866 = vst [vmem:[%s2 + $0x760] sm:$0xff] %v2610
  %2867 = vst [vmem:[%s2 + $0x768] sm:$0xff] %v2611
  %2868 = vst [vmem:[%s2 + $0x770] sm:$0xff] %v2612
  %2869 = vst [vmem:[%s2 + $0x778] sm:$0xff] %v2613
  %2870 = vst [vmem:[%s2 + $0x780] sm:$0xff] %v2614
  %2871 = vst [vmem:[%s2 + $0x788] sm:$0xff] %v2615
  %2872 = vst [vmem:[%s2 + $0x790] sm:$0xff] %v2616
  %2873 = vst [vmem:[%s2 + $0x798] sm:$0xff] %v2617
  %2874 = vst [vmem:[%s2 + $0x7a0] sm:$0xff] %v2618
  %2875 = vst [vmem:[%s2 + $0x7a8] sm:$0xff] %v2619
  %2876 = vst [vmem:[%s2 + $0x7b0] sm:$0xff] %v2620
  %2877 = vst [vmem:[%s2 + $0x7b8] sm:$0xff] %v2621
  %2878 = vst [vmem:[%s2 + $0x7c0] sm:$0xff] %v2622
  %2879 = vst [vmem:[%s2 + $0x7c8] sm:$0xff] %v2623
  %2880 = vst [vmem:[%s2 + $0x7d0] sm:$0xff] %v2624
  %2881 = vst [vmem:[%s2 + $0x7d8] sm:$0xff] %v2625
  %2882 = vst [vmem:[%s2 + $0x7e0] sm:$0xff] %v2626
  %2883 = vst [vmem:[%s2 + $0x7e8] sm:$0xff] %v2627
  %2884 = vst [vmem:[%s2 + $0x7f0] sm:$0xff] %v2628
  %2885 = vst [vmem:[%s2 + $0x7f8] sm:$0xff] %v2629
  // Predicated region
  $region10: #{netg_forward.17} parent=0 // pred_check
    _
  $region11: #{netg_forward.17} parent=0 // pred_check_branch
    %2887 = sbr.rel (0) target = $region13
  $region12: #{netg_forward.17} parent=0 // pred_region
    _
  $region13: #{netg_forward.17} parent=0 // pred_fallthru
    _
  // Predicated region
  $region14: #{netg_forward.17} parent=0 // pred_check
    _
  $region15: #{netg_forward.17} parent=0 // pred_check_branch
    %2889 = sbr.rel (0) target = $region17
  $region16: #{netg_forward.17} parent=0 // pred_region
    _
  $region17: #{netg_forward.17} parent=0 // pred_fallthru
    _

</llo_original>
